<compile_context>
chip_gen: v6e
topology: v6e:2x2x1
jax: 0.10.0
libtpu: 0.0.40
codegen_flags: <defaults>
</compile_context>

<pallas_src>
import math
import numpy as np
import jax
import jax.numpy as jnp
from jax.experimental import pallas as pl
from jax.experimental.pallas import tpu as pltpu

# ----------------------- model hyper-parameters (small) ---------------------
N_CHANS   = 8
N_TIMES   = 200
SFREQ     = 100.0
N_OUTPUTS = 4
F1 = 16                                     # n_filters_spat
F2 = 16                                     # n_filters_spat_filt
BN_EPS  = 1e-5
LOG_EPS = 1e-6                              # braindecode LogActivation epsilon

K_TIME = int(math.floor(SFREQ * 0.1))       # samples_100ms = 10
PAD    = int(np.ceil((K_TIME - 1) / 2))     # 5
T_PAD  = N_TIMES + 2 * PAD                  # 210 (zero-padded conv input length)
T_CONV = T_PAD - K_TIME + 1                 # 201
POOL   = int(SFREQ / 2)                     # 50
W_OUT  = int((T_CONV - POOL) / K_TIME) + 1  # 16
N_FEAT = F2 * W_OUT                         # 256
LOG_POOL = math.log(POOL)

# ----------------------- kernel layout parameters ---------------------------
TSEG   = 256     # lanes per sample segment (time 210 -> 256 = 2 vregs)
GRP    = 8       # samples per block-diagonal pool matmul (GRP*W_OUT = 128 lanes)
MAX_TB = 64      # max samples per grid step (~16 MB VMEM working set)
SLACK  = 128     # one extra zero vreg-column so k-shifted im2col slices stay in-bounds
ROWS   = K_TIME * N_CHANS                   # 80 im2col rows


def _round_up(v, m):
    return (v + m - 1) // m * m


def _pick_tb(batch):
    """Batch-tile size: respects MAX_TB and yields >=2 tiles when batch > GRP
    so the 'parallel' grid axis keeps both v7x TensorCores busy."""
    min_tiles = max(2 if batch > GRP else 1, -(-batch // MAX_TB))
    return min(MAX_TB, _round_up(-(-batch // min_tiles), GRP))


def _pool_matrix():
    """(GRP*TSEG, GRP*W_OUT) block-diagonal 0/1 overlapping-average band
    (the 1/POOL scale is folded into the log activation in the kernel)."""
    t = np.arange(TSEG)[:, None]
    w = np.arange(W_OUT)[None, :]
    band = ((t >= w * K_TIME) & (t < w * K_TIME + POOL)).astype(np.float32)
    pm = np.zeros((GRP * TSEG, GRP * W_OUT), np.float32)
    for j in range(GRP):
        pm[j * TSEG:(j + 1) * TSEG, j * W_OUT:(j + 1) * W_OUT] = band
    return pm


_POOL_MAT = _pool_matrix()


# --------------------------------- kernel -----------------------------------
def _make_kernel(tb):
    lw = tb * TSEG
    n_grp = tb // GRP

    def kernel(x_ref, wc_ref, bias_ref, pmat_ref, vf_ref, seg_ref, bf_ref,
               out_ref, xcol_ref):
        # ---- im2col of the raw input into a persistent VMEM scratch:
        # row k*C+c of xcol holds x[c, t+k]; shifts stay inside each sample's
        # 256-lane segment for every pooled position (t <= 199, k <= 9).
        x = x_ref[0]                                            # (C, LW+SLACK)
        for k in range(K_TIME):
            xcol_ref[k * N_CHANS:(k + 1) * N_CHANS, :] = x[:, k:k + lw]

        # ---- spatial conv + BN1 + temporal conv + BN2 as ONE deep matmul
        # (weights folded in the wrapper) plus the per-segment bias map that
        # accounts for the BN1 bias leaking through the temporal conv's
        # zero-padding edges.
        y = jnp.dot(wc_ref[...], xcol_ref[...],
                    preferred_element_type=jnp.float32) + bias_ref[...]

        # ---- square (power feature); dropout is identity in eval mode.
        # TODO(synk): training-mode dropout (prng + mask) not implemented.
        y2 = y * y                                              # (F2, LW)

        # ---- overlapping AvgPool2d((1,50), stride (1,10)) as block-diagonal
        # 0/1 band matmuls over groups of GRP samples (lane-aligned slices);
        # the 1/POOL scale is folded exactly into the log below.
        pooled = jnp.concatenate(
            [jnp.dot(y2[:, g * GRP * TSEG:(g + 1) * GRP * TSEG], pmat_ref[...],
                     preferred_element_type=jnp.float32)
             for g in range(n_grp)], axis=1)                    # (F2, TB*W_OUT)
        act = jnp.log(pooled + POOL * LOG_EPS) - LOG_POOL

        # ---- final linear: per-class VPU multiply + sublane reduce (only
        # 4 x 16-vreg ops), then one small segment-sum matmul collapsing each
        # sample's W_OUT lanes.
        vf = vf_ref[...]                                        # (O, F2, TB*W_OUT)
        cols = jnp.concatenate(
            [jnp.sum(act * vf[o], axis=0, keepdims=True)
             for o in range(N_OUTPUTS)], axis=0)                # (O, TB*W_OUT)
        out = jnp.dot(cols, seg_ref[...],
                      preferred_element_type=jnp.float32)       # (O, TB)
        out_ref[0] = out + bf_ref[...]

    return kernel


# --------------------------------- wrapper ----------------------------------
@jax.jit
def sccnet_forward(x, params):
    batch = x.shape[0]
    tb = _pick_tb(batch)
    n_tiles = pl.cdiv(batch, tb)
    bp = n_tiles * tb
    lw = tb * TSEG
    lwe = lw + SLACK

    # ---- fold eval-mode BatchNorms into the conv weights --------------------
    a1 = params["g1"] / jnp.sqrt(params["v1"] + BN_EPS)
    w1f = params["w1"] * a1[:, None]                                  # (F1, C)
    b1f = a1 * (params["b1"] - params["m1"]) + params["be1"]          # (F1,)
    a2 = params["g2"] / jnp.sqrt(params["v2"] + BN_EPS)
    w2f = params["w2"] * a2[:, None, None]                            # (F2, F1, K)
    b2f = a2 * (params["b2"] - params["m2"]) + params["be2"]          # (F2,)

    # ---- fold the spatial conv into the temporal conv -----------------------
    # wc[g, k*C+c] = sum_f w2f[g,f,k] * w1f[f,c]  ->  single (F2, 80) weight.
    wc = jnp.einsum("gfk,fc->gkc", w2f, w1f).reshape(F2, K_TIME * N_CHANS)
    # per-segment additive bias: BN1 bias convolved with w2 over the zero-pad
    # mask, plus the folded BN2 bias.
    beta = jnp.einsum("gfk,f->gk", w2f, b1f)                          # (F2, K)
    mask_ext = jnp.zeros((TSEG + K_TIME,), jnp.float32)
    mask_ext = mask_ext.at[PAD:PAD + N_TIMES].set(1.0)
    shifts = jnp.stack([mask_ext[k:k + TSEG] for k in range(K_TIME)], axis=0)
    bias_seg = beta @ shifts + b2f[:, None]                           # (F2, TSEG)
    bias_tiled = jnp.tile(bias_seg, (1, tb))                          # (F2, LW)

    pmat = jnp.asarray(_POOL_MAT)                                     # (2048, 128)

    # final-linear weight replicated per segment + per-sample segment summer.
    wf_r = params["wf"].reshape(N_OUTPUTS, F2, W_OUT)
    vf_rep = jnp.tile(wf_r, (1, 1, tb))                               # (O, F2, TB*W_OUT)
    seg = (jnp.arange(tb * W_OUT)[:, None] // W_OUT
           == jnp.arange(tb)[None, :]).astype(jnp.float32)            # (TB*W_OUT, TB)
    bf = params["bf"][:, None]                                        # (O, 1)

    # ---- lane-concatenated, zero-padded input layout -------------------------
    xp = jnp.pad(x, ((0, bp - batch), (0, 0), (PAD, TSEG - PAD - N_TIMES)))
    x_lane = xp.reshape(n_tiles, tb, N_CHANS, TSEG).transpose(0, 2, 1, 3)
    x_lane = x_lane.reshape(n_tiles, N_CHANS, lw)
    x_lane = jnp.pad(x_lane, ((0, 0), (0, 0), (0, SLACK)))            # (nt, C, LWE)

    def full(a):
        nd = a.ndim
        return pl.BlockSpec(a.shape, lambda i, _nd=nd: (0,) * _nd)

    # NOTE: invariant operands (~2.5 MB) are left default-double-buffered; with
    # the folded weights the per-step working set at TB=64 is ~16 MB, so
    # pl.Buffered(1) / per-generation VMEM sizing is unnecessary here.
    out = pl.pallas_call(
        _make_kernel(tb),
        out_shape=jax.ShapeDtypeStruct((n_tiles, N_OUTPUTS, tb), jnp.float32),
        grid=(n_tiles,),
        in_specs=[
            pl.BlockSpec((1, N_CHANS, lwe), lambda i: (i, 0, 0)),
            full(wc), full(bias_tiled), full(pmat), full(vf_rep), full(seg),
            full(bf),
        ],
        out_specs=pl.BlockSpec((1, N_OUTPUTS, tb), lambda i: (i, 0, 0)),
        scratch_shapes=[pltpu.VMEM((ROWS, lw), jnp.float32)],
        compiler_params=pltpu.CompilerParams(
            dimension_semantics=("parallel",),
            vmem_limit_bytes=32 * 1024 * 1024),
    )(x_lane, wc, bias_tiled, pmat, vf_rep, seg, bf)

    # (n_tiles, O, TB) -> (B, O)
    return out.transpose(0, 2, 1).reshape(bp, N_OUTPUTS)[:batch]


# ------------------------------- parameters ---------------------------------
def init_params(key):
    ks = jax.random.split(key, 14)
    return {
        "w1": 0.1 * jax.random.normal(ks[0], (F1, N_CHANS), jnp.float32),
        "b1": 0.1 * jax.random.normal(ks[1], (F1,), jnp.float32),
        "g1": 1.0 + 0.1 * jax.random.normal(ks[2], (F1,), jnp.float32),
        "be1": 0.1 * jax.random.normal(ks[3], (F1,), jnp.float32),
        "m1": 0.1 * jax.random.normal(ks[4], (F1,), jnp.float32),
        "v1": jnp.abs(jax.random.normal(ks[5], (F1,), jnp.float32)) + 0.5,
        "w2": 0.1 * jax.random.normal(ks[6], (F2, F1, K_TIME), jnp.float32),
        "b2": 0.1 * jax.random.normal(ks[7], (F2,), jnp.float32),
        "g2": 1.0 + 0.1 * jax.random.normal(ks[8], (F2,), jnp.float32),
        "be2": 0.1 * jax.random.normal(ks[9], (F2,), jnp.float32),
        "m2": 0.1 * jax.random.normal(ks[10], (F2,), jnp.float32),
        "v2": jnp.abs(jax.random.normal(ks[11], (F2,), jnp.float32)) + 0.5,
        "wf": 0.05 * jax.random.normal(ks[12], (N_OUTPUTS, N_FEAT), jnp.float32),
        "bf": 0.05 * jax.random.normal(ks[13], (N_OUTPUTS,), jnp.float32),
    }


# ----------------------------- pure-JAX reference ----------------------------
def sccnet_reference(x, p):
    y1 = jnp.einsum("fc,bct->bft", p["w1"], x) + p["b1"][None, :, None]
    a1 = p["g1"] / jnp.sqrt(p["v1"] + BN_EPS)
    z1 = a1[None, :, None] * (y1 - p["m1"][None, :, None]) + p["be1"][None, :, None]
    z1p = jnp.pad(z1, ((0, 0), (0, 0), (PAD, PAD)))
    win = jnp.stack([z1p[..., k:k + T_CONV] for k in range(K_TIME)], axis=-1)
    y2 = jnp.einsum("gfk,bftk->bgt", p["w2"], win) + p["b2"][None, :, None]
    a2 = p["g2"] / jnp.sqrt(p["v2"] + BN_EPS)
    z2 = a2[None, :, None] * (y2 - p["m2"][None, :, None]) + p["be2"][None, :, None]
    sq = z2 ** 2
    pooled = jnp.stack(
        [sq[..., w * K_TIME:w * K_TIME + POOL].mean(-1) for w in range(W_OUT)],
        axis=-1)
    act = jnp.log(pooled + LOG_EPS)
    flat = act.reshape(x.shape[0], -1)
    return flat @ p["wf"].T + p["bf"][None, :]


# ----------------------------------- main ------------------------------------
if __name__ == "__main__":
    key = jax.random.PRNGKey(0)
    pkey, xkey = jax.random.split(key)
    params = init_params(pkey)
    x = jax.random.normal(xkey, (2, N_CHANS, N_TIMES), jnp.float32)

    out = sccnet_forward(x, params)
    jax.block_until_ready(out)

    ref = sccnet_reference(x, params)
    np.testing.assert_allclose(np.asarray(out), np.asarray(ref),
                               rtol=2e-3, atol=2e-3)
    print("KERNEL_OK")
</pallas_src>

<mosaic_0001>
module attributes {stable_mosaic.version = 11 : i64} {
  func.func @kernel(%arg0: i32, %arg1: memref<1x8x2176xf32, #tpu.memory_space<vmem>>, %arg2: memref<16x80xf32, #tpu.memory_space<vmem>>, %arg3: memref<16x2048xf32, #tpu.memory_space<vmem>>, %arg4: memref<2048x128xf32, #tpu.memory_space<vmem>>, %arg5: memref<4x16x128xf32, #tpu.memory_space<vmem>>, %arg6: memref<128x8xf32, #tpu.memory_space<vmem>>, %arg7: memref<4x1xf32, #tpu.memory_space<vmem>>, %arg8: memref<1x4x8xf32, #tpu.memory_space<vmem>>, %arg9: memref<80x2048xf32, #tpu.memory_space<vmem>>) attributes {dimension_semantics = [#tpu.dimension_semantics<parallel>], iteration_bounds = array<i64: 1>, scalar_prefetch = 0 : i64, scratch_operands = 1 : i64, tpu.core_type = #tpu.core_type<tc>, window_params = [{transform_indices = @transform_0, window_bounds = array<i64: 1, 8, 2176>}, {pipeline_mode = #tpu.pipeline_mode<synchronous>, transform_indices = @transform_1, window_bounds = array<i64: 16, 80>}, {pipeline_mode = #tpu.pipeline_mode<synchronous>, transform_indices = @transform_2, window_bounds = array<i64: 16, 2048>}, {pipeline_mode = #tpu.pipeline_mode<synchronous>, transform_indices = @transform_3, window_bounds = array<i64: 2048, 128>}, {pipeline_mode = #tpu.pipeline_mode<synchronous>, transform_indices = @transform_4, window_bounds = array<i64: 4, 16, 128>}, {pipeline_mode = #tpu.pipeline_mode<synchronous>, transform_indices = @transform_5, window_bounds = array<i64: 128, 8>}, {pipeline_mode = #tpu.pipeline_mode<synchronous>, transform_indices = @transform_6, window_bounds = array<i64: 4, 1>}, {transform_indices = @transform_7, window_bounds = array<i64: 1, 4, 8>}]} {
    %c0 = arith.constant 0 : index
    %c0_0 = arith.constant 0 : index
    %c0_1 = arith.constant 0 : index
    %0 = vector.load %arg1[%c0, %c0_0, %c0_1] : memref<1x8x2176xf32, #tpu.memory_space<vmem>>, vector<1x8x2176xf32>
    %1 = vector.shape_cast %0 : vector<1x8x2176xf32> to vector<8x2176xf32>
    %2 = vector.extract_strided_slice %1 {offsets = [0, 0], sizes = [8, 2048], strides = [1, 1]} : vector<8x2176xf32> to vector<8x2048xf32>
    %c0_2 = arith.constant 0 : index
    %c0_3 = arith.constant 0 : index
    %3 = vector.load %arg9[%c0_2, %c0_3] : memref<80x2048xf32, #tpu.memory_space<vmem>>, vector<8x2048xf32>
    tpu.vector_store %arg9[%c0_2, %c0_3], %2 {strides = array<i32>} : memref<80x2048xf32, #tpu.memory_space<vmem>>, vector<8x2048xf32>,
    %4 = vector.extract_strided_slice %1 {offsets = [0, 1], sizes = [8, 2048], strides = [1, 1]} : vector<8x2176xf32> to vector<8x2048xf32>
    %c8 = arith.constant 8 : index
    %c0_4 = arith.constant 0 : index
    %5 = vector.load %arg9[%c8, %c0_4] : memref<80x2048xf32, #tpu.memory_space<vmem>>, vector<8x2048xf32>
    tpu.vector_store %arg9[%c8, %c0_4], %4 {strides = array<i32>} : memref<80x2048xf32, #tpu.memory_space<vmem>>, vector<8x2048xf32>,
    %6 = vector.extract_strided_slice %1 {offsets = [0, 2], sizes = [8, 2048], strides = [1, 1]} : vector<8x2176xf32> to vector<8x2048xf32>
    %c16 = arith.constant 16 : index
    %c0_5 = arith.constant 0 : index
    %7 = vector.load %arg9[%c16, %c0_5] : memref<80x2048xf32, #tpu.memory_space<vmem>>, vector<8x2048xf32>
    tpu.vector_store %arg9[%c16, %c0_5], %6 {strides = array<i32>} : memref<80x2048xf32, #tpu.memory_space<vmem>>, vector<8x2048xf32>,
    %8 = vector.extract_strided_slice %1 {offsets = [0, 3], sizes = [8, 2048], strides = [1, 1]} : vector<8x2176xf32> to vector<8x2048xf32>
    %c24 = arith.constant 24 : index
    %c0_6 = arith.constant 0 : index
    %9 = vector.load %arg9[%c24, %c0_6] : memref<80x2048xf32, #tpu.memory_space<vmem>>, vector<8x2048xf32>
    tpu.vector_store %arg9[%c24, %c0_6], %8 {strides = array<i32>} : memref<80x2048xf32, #tpu.memory_space<vmem>>, vector<8x2048xf32>,
    %10 = vector.extract_strided_slice %1 {offsets = [0, 4], sizes = [8, 2048], strides = [1, 1]} : vector<8x2176xf32> to vector<8x2048xf32>
    %c32 = arith.constant 32 : index
    %c0_7 = arith.constant 0 : index
    %11 = vector.load %arg9[%c32, %c0_7] : memref<80x2048xf32, #tpu.memory_space<vmem>>, vector<8x2048xf32>
    tpu.vector_store %arg9[%c32, %c0_7], %10 {strides = array<i32>} : memref<80x2048xf32, #tpu.memory_space<vmem>>, vector<8x2048xf32>,
    %12 = vector.extract_strided_slice %1 {offsets = [0, 5], sizes = [8, 2048], strides = [1, 1]} : vector<8x2176xf32> to vector<8x2048xf32>
    %c40 = arith.constant 40 : index
    %c0_8 = arith.constant 0 : index
    %13 = vector.load %arg9[%c40, %c0_8] : memref<80x2048xf32, #tpu.memory_space<vmem>>, vector<8x2048xf32>
    tpu.vector_store %arg9[%c40, %c0_8], %12 {strides = array<i32>} : memref<80x2048xf32, #tpu.memory_space<vmem>>, vector<8x2048xf32>,
    %14 = vector.extract_strided_slice %1 {offsets = [0, 6], sizes = [8, 2048], strides = [1, 1]} : vector<8x2176xf32> to vector<8x2048xf32>
    %c48 = arith.constant 48 : index
    %c0_9 = arith.constant 0 : index
    %15 = vector.load %arg9[%c48, %c0_9] : memref<80x2048xf32, #tpu.memory_space<vmem>>, vector<8x2048xf32>
    tpu.vector_store %arg9[%c48, %c0_9], %14 {strides = array<i32>} : memref<80x2048xf32, #tpu.memory_space<vmem>>, vector<8x2048xf32>,
    %16 = vector.extract_strided_slice %1 {offsets = [0, 7], sizes = [8, 2048], strides = [1, 1]} : vector<8x2176xf32> to vector<8x2048xf32>
    %c56 = arith.constant 56 : index
    %c0_10 = arith.constant 0 : index
    %17 = vector.load %arg9[%c56, %c0_10] : memref<80x2048xf32, #tpu.memory_space<vmem>>, vector<8x2048xf32>
    tpu.vector_store %arg9[%c56, %c0_10], %16 {strides = array<i32>} : memref<80x2048xf32, #tpu.memory_space<vmem>>, vector<8x2048xf32>,
    %18 = vector.extract_strided_slice %1 {offsets = [0, 8], sizes = [8, 2048], strides = [1, 1]} : vector<8x2176xf32> to vector<8x2048xf32>
    %c64 = arith.constant 64 : index
    %c0_11 = arith.constant 0 : index
    %19 = vector.load %arg9[%c64, %c0_11] : memref<80x2048xf32, #tpu.memory_space<vmem>>, vector<8x2048xf32>
    tpu.vector_store %arg9[%c64, %c0_11], %18 {strides = array<i32>} : memref<80x2048xf32, #tpu.memory_space<vmem>>, vector<8x2048xf32>,
    %20 = vector.extract_strided_slice %1 {offsets = [0, 9], sizes = [8, 2048], strides = [1, 1]} : vector<8x2176xf32> to vector<8x2048xf32>
    %c72 = arith.constant 72 : index
    %c0_12 = arith.constant 0 : index
    %21 = vector.load %arg9[%c72, %c0_12] : memref<80x2048xf32, #tpu.memory_space<vmem>>, vector<8x2048xf32>
    tpu.vector_store %arg9[%c72, %c0_12], %20 {strides = array<i32>} : memref<80x2048xf32, #tpu.memory_space<vmem>>, vector<8x2048xf32>,
    %c0_13 = arith.constant 0 : index
    %c0_14 = arith.constant 0 : index
    %22 = vector.load %arg2[%c0_13, %c0_14] : memref<16x80xf32, #tpu.memory_space<vmem>>, vector<16x80xf32>
    %c0_15 = arith.constant 0 : index
    %c0_16 = arith.constant 0 : index
    %23 = vector.load %arg9[%c0_15, %c0_16] : memref<80x2048xf32, #tpu.memory_space<vmem>>, vector<80x2048xf32>
    %cst = arith.constant dense<0.000000e+00> : vector<16x2048xf32>
    %24 = tpu.matmul %22, %23, %cst {dimension_numbers = #tpu.dot_dimension_numbers<[1], [0], [0], [1], [0, 0, 1, 1], [], []>} : vector<16x80xf32>, vector<80x2048xf32>, vector<16x2048xf32> -> vector<16x2048xf32>
    %c0_17 = arith.constant 0 : index
    %c0_18 = arith.constant 0 : index
    %25 = vector.load %arg3[%c0_17, %c0_18] : memref<16x2048xf32, #tpu.memory_space<vmem>>, vector<16x2048xf32>
    %26 = arith.addf %24, %25 : vector<16x2048xf32>
    %27 = arith.mulf %26, %26 : vector<16x2048xf32>
    %c0_19 = arith.constant 0 : index
    %c0_20 = arith.constant 0 : index
    %28 = vector.load %arg4[%c0_19, %c0_20] : memref<2048x128xf32, #tpu.memory_space<vmem>>, vector<2048x128xf32>
    %cst_21 = arith.constant dense<0.000000e+00> : vector<16x128xf32>
    %29 = tpu.matmul %27, %28, %cst_21 {dimension_numbers = #tpu.dot_dimension_numbers<[1], [0], [0], [1], [0, 0, 1, 1], [], []>} : vector<16x2048xf32>, vector<2048x128xf32>, vector<16x128xf32> -> vector<16x128xf32>
    %cst_22 = arith.constant 5.000000e-05 : f32
    %30 = vector.broadcast %cst_22 : f32 to vector<16x128xf32>
    %31 = arith.addf %29, %30 : vector<16x128xf32>
    %32 = math.log %31 : vector<16x128xf32>
    %cst_23 = arith.constant 3.91202307 : f32
    %33 = vector.broadcast %cst_23 : f32 to vector<16x128xf32>
    %34 = arith.subf %32, %33 : vector<16x128xf32>
    %c0_24 = arith.constant 0 : index
    %c0_25 = arith.constant 0 : index
    %c0_26 = arith.constant 0 : index
    %35 = vector.load %arg5[%c0_24, %c0_25, %c0_26] : memref<4x16x128xf32, #tpu.memory_space<vmem>>, vector<4x16x128xf32>
    %36 = vector.extract_strided_slice %35 {offsets = [0, 0, 0], sizes = [1, 16, 128], strides = [1, 1, 1]} : vector<4x16x128xf32> to vector<1x16x128xf32>
    %37 = vector.shape_cast %36 : vector<1x16x128xf32> to vector<16x128xf32>
    %38 = arith.mulf %34, %37 : vector<16x128xf32>
    %cst_27 = arith.constant dense<0.000000e+00> : vector<128xf32>
    %39 = vector.multi_reduction <add>, %38, %cst_27 [0] : vector<16x128xf32> to vector<128xf32>
    %40 = vector.shape_cast %39 : vector<128xf32> to vector<1x128xf32>
    %41 = vector.extract_strided_slice %35 {offsets = [1, 0, 0], sizes = [1, 16, 128], strides = [1, 1, 1]} : vector<4x16x128xf32> to vector<1x16x128xf32>
    %42 = vector.shape_cast %41 : vector<1x16x128xf32> to vector<16x128xf32>
    %43 = arith.mulf %34, %42 : vector<16x128xf32>
    %cst_28 = arith.constant dense<0.000000e+00> : vector<128xf32>
    %44 = vector.multi_reduction <add>, %43, %cst_28 [0] : vector<16x128xf32> to vector<128xf32>
    %45 = vector.shape_cast %44 : vector<128xf32> to vector<1x128xf32>
    %46 = vector.extract_strided_slice %35 {offsets = [2, 0, 0], sizes = [1, 16, 128], strides = [1, 1, 1]} : vector<4x16x128xf32> to vector<1x16x128xf32>
    %47 = vector.shape_cast %46 : vector<1x16x128xf32> to vector<16x128xf32>
    %48 = arith.mulf %34, %47 : vector<16x128xf32>
    %cst_29 = arith.constant dense<0.000000e+00> : vector<128xf32>
    %49 = vector.multi_reduction <add>, %48, %cst_29 [0] : vector<16x128xf32> to vector<128xf32>
    %50 = vector.shape_cast %49 : vector<128xf32> to vector<1x128xf32>
    %51 = vector.extract_strided_slice %35 {offsets = [3, 0, 0], sizes = [1, 16, 128], strides = [1, 1, 1]} : vector<4x16x128xf32> to vector<1x16x128xf32>
    %52 = vector.shape_cast %51 : vector<1x16x128xf32> to vector<16x128xf32>
    %53 = arith.mulf %34, %52 : vector<16x128xf32>
    %cst_30 = arith.constant dense<0.000000e+00> : vector<128xf32>
    %54 = vector.multi_reduction <add>, %53, %cst_30 [0] : vector<16x128xf32> to vector<128xf32>
    %55 = vector.shape_cast %54 : vector<128xf32> to vector<1x128xf32>
    %56 = tpu.concatenate %40, %45, %50, %55 in 0 : vector<1x128xf32>, vector<1x128xf32>, vector<1x128xf32>, vector<1x128xf32> -> vector<4x128xf32>
    %c0_31 = arith.constant 0 : index
    %c0_32 = arith.constant 0 : index
    %57 = vector.load %arg6[%c0_31, %c0_32] : memref<128x8xf32, #tpu.memory_space<vmem>>, vector<128x8xf32>
    %cst_33 = arith.constant dense<0.000000e+00> : vector<4x8xf32>
    %58 = tpu.matmul %56, %57, %cst_33 {dimension_numbers = #tpu.dot_dimension_numbers<[1], [0], [0], [1], [0, 0, 1, 1], [], []>} : vector<4x128xf32>, vector<128x8xf32>, vector<4x8xf32> -> vector<4x8xf32>
    %c0_34 = arith.constant 0 : index
    %c0_35 = arith.constant 0 : index
    %59 = vector.load %arg7[%c0_34, %c0_35] : memref<4x1xf32, #tpu.memory_space<vmem>>, vector<4x1xf32>
    %60 = vector.broadcast %59 : vector<4x1xf32> to vector<4x8xf32>
    %61 = arith.addf %58, %60 : vector<4x8xf32>
    %c0_36 = arith.constant 0 : index
    %c0_37 = arith.constant 0 : index
    %c0_38 = arith.constant 0 : index
    %62 = vector.load %arg8[%c0_36, %c0_37, %c0_38] : memref<1x4x8xf32, #tpu.memory_space<vmem>>, vector<1x4x8xf32>
    %63 = vector.shape_cast %62 : vector<1x4x8xf32> to vector<4x8xf32>
    %64 = vector.shape_cast %61 : vector<4x8xf32> to vector<1x4x8xf32>
    tpu.vector_store %arg8[%c0_36, %c0_37, %c0_38], %64 {strides = array<i32>} : memref<1x4x8xf32, #tpu.memory_space<vmem>>, vector<1x4x8xf32>,
    return
  }
  func.func @transform_0(%arg0: i32) -> (i32, i32, i32) {
    %c0_i32 = arith.constant 0 : i32
    %c0_i32_0 = arith.constant 0 : i32
    %c0_i32_1 = arith.constant 0 : i32
    return %arg0, %c0_i32, %c0_i32_0 : i32, i32, i32
  }
  func.func @transform_1(%arg0: i32) -> (i32, i32) {
    %c0_i32 = arith.constant 0 : i32
    %c0_i32_0 = arith.constant 0 : i32
    %c0_i32_1 = arith.constant 0 : i32
    return %c0_i32, %c0_i32_0 : i32, i32
  }
  func.func @transform_2(%arg0: i32) -> (i32, i32) {
    %c0_i32 = arith.constant 0 : i32
    %c0_i32_0 = arith.constant 0 : i32
    %c0_i32_1 = arith.constant 0 : i32
    return %c0_i32, %c0_i32_0 : i32, i32
  }
  func.func @transform_3(%arg0: i32) -> (i32, i32) {
    %c0_i32 = arith.constant 0 : i32
    %c0_i32_0 = arith.constant 0 : i32
    %c0_i32_1 = arith.constant 0 : i32
    return %c0_i32, %c0_i32_0 : i32, i32
  }
  func.func @transform_4(%arg0: i32) -> (i32, i32, i32) {
    %c0_i32 = arith.constant 0 : i32
    %c0_i32_0 = arith.constant 0 : i32
    %c0_i32_1 = arith.constant 0 : i32
    %c0_i32_2 = arith.constant 0 : i32
    return %c0_i32, %c0_i32_0, %c0_i32_1 : i32, i32, i32
  }
  func.func @transform_5(%arg0: i32) -> (i32, i32) {
    %c0_i32 = arith.constant 0 : i32
    %c0_i32_0 = arith.constant 0 : i32
    %c0_i32_1 = arith.constant 0 : i32
    return %c0_i32, %c0_i32_0 : i32, i32
  }
  func.func @transform_6(%arg0: i32) -> (i32, i32) {
    %c0_i32 = arith.constant 0 : i32
    %c0_i32_0 = arith.constant 0 : i32
    %c0_i32_1 = arith.constant 0 : i32
    return %c0_i32, %c0_i32_0 : i32, i32
  }
  func.func @transform_7(%arg0: i32) -> (i32, i32, i32) {
    %c0_i32 = arith.constant 0 : i32
    %c0_i32_0 = arith.constant 0 : i32
    %c0_i32_1 = arith.constant 0 : i32
    return %arg0, %c0_i32, %c0_i32_0 : i32, i32, i32
  }
}

</mosaic_0001>

<llo_original>
// kernel: tile.17
$region0: #{tile.17}
  %s0 = inlined_call_operand.vmem [shape: f32[4,16,8,16], index: 0, kind: input, shape index: {}]
  %s1 = inlined_call_operand.vmem [shape: f32[4,16,128], index: 1, kind: output, shape index: {}]
  %v2 = vld [vmem:[%s0] ss:$8 sm:$0xf]
  %v3 = vld [vmem:[%s0] ss:$8 sm:$0xf0]
  %vm4 = vcmask 1047556
  %v5 = vsel %vm4, %v3, %v2
  %vm6 = vcmask 130048
  %7 = vst.msk [vmem:[%s1] sm:$0xff] %vm6, %v5
  %s8 = scalar_lea.vmem %s0, 64
  %v9 = vld [vmem:[%s8] ss:$8 sm:$0xf]
  %s10 = scalar_lea.vmem %s0, 64
  %v11 = vld [vmem:[%s10] ss:$8 sm:$0xf0]
  %vm12 = vcmask 1047556
  %v13 = vsel %vm12, %v11, %v9
  %vm14 = vcmask 130048
  %s15 = scalar_lea.vmem %s1, 8
  %16 = vst.msk [vmem:[%s15] sm:$0xff] %vm14, %v13
  %s17 = scalar_lea.vmem %s0, 128
  %v18 = vld [vmem:[%s17] ss:$8 sm:$0xf]
  %s19 = scalar_lea.vmem %s0, 128
  %v20 = vld [vmem:[%s19] ss:$8 sm:$0xf0]
  %vm21 = vcmask 1047556
  %v22 = vsel %vm21, %v20, %v18
  %vm23 = vcmask 130048
  %s24 = scalar_lea.vmem %s1, 16
  %25 = vst.msk [vmem:[%s24] sm:$0xff] %vm23, %v22
  %s26 = scalar_lea.vmem %s0, 192
  %v27 = vld [vmem:[%s26] ss:$8 sm:$0xf]
  %s28 = scalar_lea.vmem %s0, 192
  %v29 = vld [vmem:[%s28] ss:$8 sm:$0xf0]
  %vm30 = vcmask 1047556
  %v31 = vsel %vm30, %v29, %v27
  %vm32 = vcmask 130048
  %s33 = scalar_lea.vmem %s1, 24
  %34 = vst.msk [vmem:[%s33] sm:$0xff] %vm32, %v31
  %s35 = scalar_lea.vmem %s0, 256
  %v36 = vld [vmem:[%s35] ss:$8 sm:$0xf]
  %s37 = scalar_lea.vmem %s0, 256
  %v38 = vld [vmem:[%s37] ss:$8 sm:$0xf0]
  %vm39 = vcmask 1047556
  %v40 = vsel %vm39, %v38, %v36
  %vm41 = vcmask 130048
  %s42 = scalar_lea.vmem %s1, 32
  %43 = vst.msk [vmem:[%s42] sm:$0xff] %vm41, %v40
  %s44 = scalar_lea.vmem %s0, 320
  %v45 = vld [vmem:[%s44] ss:$8 sm:$0xf]
  %s46 = scalar_lea.vmem %s0, 320
  %v47 = vld [vmem:[%s46] ss:$8 sm:$0xf0]
  %vm48 = vcmask 1047556
  %v49 = vsel %vm48, %v47, %v45
  %vm50 = vcmask 130048
  %s51 = scalar_lea.vmem %s1, 40
  %52 = vst.msk [vmem:[%s51] sm:$0xff] %vm50, %v49
  %s53 = scalar_lea.vmem %s0, 384
  %v54 = vld [vmem:[%s53] ss:$8 sm:$0xf]
  %s55 = scalar_lea.vmem %s0, 384
  %v56 = vld [vmem:[%s55] ss:$8 sm:$0xf0]
  %vm57 = vcmask 1047556
  %v58 = vsel %vm57, %v56, %v54
  %vm59 = vcmask 130048
  %s60 = scalar_lea.vmem %s1, 48
  %61 = vst.msk [vmem:[%s60] sm:$0xff] %vm59, %v58
  %s62 = scalar_lea.vmem %s0, 448
  %v63 = vld [vmem:[%s62] ss:$8 sm:$0xf]
  %s64 = scalar_lea.vmem %s0, 448
  %v65 = vld [vmem:[%s64] ss:$8 sm:$0xf0]
  %vm66 = vcmask 1047556
  %v67 = vsel %vm66, %v65, %v63
  %vm68 = vcmask 130048
  %s69 = scalar_lea.vmem %s1, 56
  %70 = vst.msk [vmem:[%s69] sm:$0xff] %vm68, %v67
  %s71 = scalar_lea.vmem %s0, 7
  %v72 = vld [vmem:[%s71] ss:$8 sm:$0xf]
  %s73 = scalar_lea.vmem %s0, 7
  %v74 = vld [vmem:[%s73] ss:$8 sm:$0xf0]
  %vm75 = vcmask 1047556
  %v76 = vsel %vm75, %v74, %v72
  %77 = vrot.lane.b32.xlu0 %v76, 112
  %v78 = vpop.permute.xlu0 %77
  %vm79 = vcmask 1048448
  %80 = vst.msk [vmem:[%s1] sm:$0xff] %vm79, %v78
  %s81 = scalar_lea.vmem %s0, 263
  %v82 = vld [vmem:[%s81] ss:$8 sm:$0xf]
  %s83 = scalar_lea.vmem %s0, 263
  %v84 = vld [vmem:[%s83] ss:$8 sm:$0xf0]
  %vm85 = vcmask 1047556
  %v86 = vsel %vm85, %v84, %v82
  %87 = vrot.lane.b32.xlu0 %v86, 112
  %v88 = vpop.permute.xlu0 %87
  %vm89 = vcmask 1048448
  %s90 = scalar_lea.vmem %s1, 32
  %91 = vst.msk [vmem:[%s90] sm:$0xff] %vm89, %v88
  %s92 = scalar_lea.vmem %s0, 71
  %v93 = vld [vmem:[%s92] ss:$8 sm:$0xf]
  %s94 = scalar_lea.vmem %s0, 71
  %v95 = vld [vmem:[%s94] ss:$8 sm:$0xf0]
  %vm96 = vcmask 1047556
  %v97 = vsel %vm96, %v95, %v93
  %98 = vrot.lane.b32.xlu0 %v97, 112
  %v99 = vpop.permute.xlu0 %98
  %vm100 = vcmask 1048448
  %s101 = scalar_lea.vmem %s1, 8
  %102 = vst.msk [vmem:[%s101] sm:$0xff] %vm100, %v99
  %s103 = scalar_lea.vmem %s0, 327
  %v104 = vld [vmem:[%s103] ss:$8 sm:$0xf]
  %s105 = scalar_lea.vmem %s0, 327
  %v106 = vld [vmem:[%s105] ss:$8 sm:$0xf0]
  %vm107 = vcmask 1047556
  %v108 = vsel %vm107, %v106, %v104
  %109 = vrot.lane.b32.xlu0 %v108, 112
  %v110 = vpop.permute.xlu0 %109
  %vm111 = vcmask 1048448
  %s112 = scalar_lea.vmem %s1, 40
  %113 = vst.msk [vmem:[%s112] sm:$0xff] %vm111, %v110
  %s114 = scalar_lea.vmem %s0, 135
  %v115 = vld [vmem:[%s114] ss:$8 sm:$0xf]
  %s116 = scalar_lea.vmem %s0, 135
  %v117 = vld [vmem:[%s116] ss:$8 sm:$0xf0]
  %vm118 = vcmask 1047556
  %v119 = vsel %vm118, %v117, %v115
  %120 = vrot.lane.b32.xlu0 %v119, 112
  %v121 = vpop.permute.xlu0 %120
  %vm122 = vcmask 1048448
  %s123 = scalar_lea.vmem %s1, 16
  %124 = vst.msk [vmem:[%s123] sm:$0xff] %vm122, %v121
  %s125 = scalar_lea.vmem %s0, 391
  %v126 = vld [vmem:[%s125] ss:$8 sm:$0xf]
  %s127 = scalar_lea.vmem %s0, 391
  %v128 = vld [vmem:[%s127] ss:$8 sm:$0xf0]
  %vm129 = vcmask 1047556
  %v130 = vsel %vm129, %v128, %v126
  %131 = vrot.lane.b32.xlu0 %v130, 112
  %v132 = vpop.permute.xlu0 %131
  %vm133 = vcmask 1048448
  %s134 = scalar_lea.vmem %s1, 48
  %135 = vst.msk [vmem:[%s134] sm:$0xff] %vm133, %v132
  %s136 = scalar_lea.vmem %s0, 199
  %v137 = vld [vmem:[%s136] ss:$8 sm:$0xf]
  %s138 = scalar_lea.vmem %s0, 199
  %v139 = vld [vmem:[%s138] ss:$8 sm:$0xf0]
  %vm140 = vcmask 1047556
  %v141 = vsel %vm140, %v139, %v137
  %142 = vrot.lane.b32.xlu0 %v141, 112
  %v143 = vpop.permute.xlu0 %142
  %vm144 = vcmask 1048448
  %s145 = scalar_lea.vmem %s1, 24
  %146 = vst.msk [vmem:[%s145] sm:$0xff] %vm144, %v143
  %s147 = scalar_lea.vmem %s0, 455
  %v148 = vld [vmem:[%s147] ss:$8 sm:$0xf]
  %s149 = scalar_lea.vmem %s0, 455
  %v150 = vld [vmem:[%s149] ss:$8 sm:$0xf0]
  %vm151 = vcmask 1047556
  %v152 = vsel %vm151, %v150, %v148
  %153 = vrot.lane.b32.xlu0 %v152, 112
  %v154 = vpop.permute.xlu0 %153
  %vm155 = vcmask 1048448
  %s156 = scalar_lea.vmem %s1, 56
  %157 = vst.msk [vmem:[%s156] sm:$0xff] %vm155, %v154
  %s158 = scalar_lea.vmem %s0, 6
  %v159 = vld [vmem:[%s158] ss:$8 sm:$0xf]
  %s160 = scalar_lea.vmem %s0, 6
  %v161 = vld [vmem:[%s160] ss:$8 sm:$0xf0]
  %vm162 = vcmask 1047556
  %v163 = vsel %vm162, %v161, %v159
  %164 = vrot.lane.b32.xlu0 %v163, 96
  %v165 = vpop.permute.xlu0 %164
  %vm166 = vcmask 917248
  %167 = vst.msk [vmem:[%s1] sm:$0xff] %vm166, %v165
  %s168 = scalar_lea.vmem %s0, 262
  %v169 = vld [vmem:[%s168] ss:$8 sm:$0xf]
  %s170 = scalar_lea.vmem %s0, 262
  %v171 = vld [vmem:[%s170] ss:$8 sm:$0xf0]
  %vm172 = vcmask 1047556
  %v173 = vsel %vm172, %v171, %v169
  %174 = vrot.lane.b32.xlu0 %v173, 96
  %v175 = vpop.permute.xlu0 %174
  %vm176 = vcmask 917248
  %s177 = scalar_lea.vmem %s1, 32
  %178 = vst.msk [vmem:[%s177] sm:$0xff] %vm176, %v175
  %s179 = scalar_lea.vmem %s0, 70
  %v180 = vld [vmem:[%s179] ss:$8 sm:$0xf]
  %s181 = scalar_lea.vmem %s0, 70
  %v182 = vld [vmem:[%s181] ss:$8 sm:$0xf0]
  %vm183 = vcmask 1047556
  %v184 = vsel %vm183, %v182, %v180
  %185 = vrot.lane.b32.xlu0 %v184, 96
  %v186 = vpop.permute.xlu0 %185
  %vm187 = vcmask 917248
  %s188 = scalar_lea.vmem %s1, 8
  %189 = vst.msk [vmem:[%s188] sm:$0xff] %vm187, %v186
  %s190 = scalar_lea.vmem %s0, 326
  %v191 = vld [vmem:[%s190] ss:$8 sm:$0xf]
  %s192 = scalar_lea.vmem %s0, 326
  %v193 = vld [vmem:[%s192] ss:$8 sm:$0xf0]
  %vm194 = vcmask 1047556
  %v195 = vsel %vm194, %v193, %v191
  %196 = vrot.lane.b32.xlu0 %v195, 96
  %v197 = vpop.permute.xlu0 %196
  %vm198 = vcmask 917248
  %s199 = scalar_lea.vmem %s1, 40
  %200 = vst.msk [vmem:[%s199] sm:$0xff] %vm198, %v197
  %s201 = scalar_lea.vmem %s0, 134
  %v202 = vld [vmem:[%s201] ss:$8 sm:$0xf]
  %s203 = scalar_lea.vmem %s0, 134
  %v204 = vld [vmem:[%s203] ss:$8 sm:$0xf0]
  %vm205 = vcmask 1047556
  %v206 = vsel %vm205, %v204, %v202
  %207 = vrot.lane.b32.xlu0 %v206, 96
  %v208 = vpop.permute.xlu0 %207
  %vm209 = vcmask 917248
  %s210 = scalar_lea.vmem %s1, 16
  %211 = vst.msk [vmem:[%s210] sm:$0xff] %vm209, %v208
  %s212 = scalar_lea.vmem %s0, 390
  %v213 = vld [vmem:[%s212] ss:$8 sm:$0xf]
  %s214 = scalar_lea.vmem %s0, 390
  %v215 = vld [vmem:[%s214] ss:$8 sm:$0xf0]
  %vm216 = vcmask 1047556
  %v217 = vsel %vm216, %v215, %v213
  %218 = vrot.lane.b32.xlu0 %v217, 96
  %v219 = vpop.permute.xlu0 %218
  %vm220 = vcmask 917248
  %s221 = scalar_lea.vmem %s1, 48
  %222 = vst.msk [vmem:[%s221] sm:$0xff] %vm220, %v219
  %s223 = scalar_lea.vmem %s0, 198
  %v224 = vld [vmem:[%s223] ss:$8 sm:$0xf]
  %s225 = scalar_lea.vmem %s0, 198
  %v226 = vld [vmem:[%s225] ss:$8 sm:$0xf0]
  %vm227 = vcmask 1047556
  %v228 = vsel %vm227, %v226, %v224
  %229 = vrot.lane.b32.xlu0 %v228, 96
  %v230 = vpop.permute.xlu0 %229
  %vm231 = vcmask 917248
  %s232 = scalar_lea.vmem %s1, 24
  %233 = vst.msk [vmem:[%s232] sm:$0xff] %vm231, %v230
  %s234 = scalar_lea.vmem %s0, 454
  %v235 = vld [vmem:[%s234] ss:$8 sm:$0xf]
  %s236 = scalar_lea.vmem %s0, 454
  %v237 = vld [vmem:[%s236] ss:$8 sm:$0xf0]
  %vm238 = vcmask 1047556
  %v239 = vsel %vm238, %v237, %v235
  %240 = vrot.lane.b32.xlu0 %v239, 96
  %v241 = vpop.permute.xlu0 %240
  %vm242 = vcmask 917248
  %s243 = scalar_lea.vmem %s1, 56
  %244 = vst.msk [vmem:[%s243] sm:$0xff] %vm242, %v241
  %s245 = scalar_lea.vmem %s0, 5
  %v246 = vld [vmem:[%s245] ss:$8 sm:$0xf]
  %s247 = scalar_lea.vmem %s0, 5
  %v248 = vld [vmem:[%s247] ss:$8 sm:$0xf0]
  %vm249 = vcmask 1047556
  %v250 = vsel %vm249, %v248, %v246
  %251 = vrot.lane.b32.xlu0 %v250, 80
  %v252 = vpop.permute.xlu0 %251
  %vm253 = vcmask 786048
  %254 = vst.msk [vmem:[%s1] sm:$0xff] %vm253, %v252
  %s255 = scalar_lea.vmem %s0, 261
  %v256 = vld [vmem:[%s255] ss:$8 sm:$0xf]
  %s257 = scalar_lea.vmem %s0, 261
  %v258 = vld [vmem:[%s257] ss:$8 sm:$0xf0]
  %vm259 = vcmask 1047556
  %v260 = vsel %vm259, %v258, %v256
  %261 = vrot.lane.b32.xlu0 %v260, 80
  %v262 = vpop.permute.xlu0 %261
  %vm263 = vcmask 786048
  %s264 = scalar_lea.vmem %s1, 32
  %265 = vst.msk [vmem:[%s264] sm:$0xff] %vm263, %v262
  %s266 = scalar_lea.vmem %s0, 69
  %v267 = vld [vmem:[%s266] ss:$8 sm:$0xf]
  %s268 = scalar_lea.vmem %s0, 69
  %v269 = vld [vmem:[%s268] ss:$8 sm:$0xf0]
  %vm270 = vcmask 1047556
  %v271 = vsel %vm270, %v269, %v267
  %272 = vrot.lane.b32.xlu0 %v271, 80
  %v273 = vpop.permute.xlu0 %272
  %vm274 = vcmask 786048
  %s275 = scalar_lea.vmem %s1, 8
  %276 = vst.msk [vmem:[%s275] sm:$0xff] %vm274, %v273
  %s277 = scalar_lea.vmem %s0, 325
  %v278 = vld [vmem:[%s277] ss:$8 sm:$0xf]
  %s279 = scalar_lea.vmem %s0, 325
  %v280 = vld [vmem:[%s279] ss:$8 sm:$0xf0]
  %vm281 = vcmask 1047556
  %v282 = vsel %vm281, %v280, %v278
  %283 = vrot.lane.b32.xlu0 %v282, 80
  %v284 = vpop.permute.xlu0 %283
  %vm285 = vcmask 786048
  %s286 = scalar_lea.vmem %s1, 40
  %287 = vst.msk [vmem:[%s286] sm:$0xff] %vm285, %v284
  %s288 = scalar_lea.vmem %s0, 133
  %v289 = vld [vmem:[%s288] ss:$8 sm:$0xf]
  %s290 = scalar_lea.vmem %s0, 133
  %v291 = vld [vmem:[%s290] ss:$8 sm:$0xf0]
  %vm292 = vcmask 1047556
  %v293 = vsel %vm292, %v291, %v289
  %294 = vrot.lane.b32.xlu0 %v293, 80
  %v295 = vpop.permute.xlu0 %294
  %vm296 = vcmask 786048
  %s297 = scalar_lea.vmem %s1, 16
  %298 = vst.msk [vmem:[%s297] sm:$0xff] %vm296, %v295
  %s299 = scalar_lea.vmem %s0, 389
  %v300 = vld [vmem:[%s299] ss:$8 sm:$0xf]
  %s301 = scalar_lea.vmem %s0, 389
  %v302 = vld [vmem:[%s301] ss:$8 sm:$0xf0]
  %vm303 = vcmask 1047556
  %v304 = vsel %vm303, %v302, %v300
  %305 = vrot.lane.b32.xlu0 %v304, 80
  %v306 = vpop.permute.xlu0 %305
  %vm307 = vcmask 786048
  %s308 = scalar_lea.vmem %s1, 48
  %309 = vst.msk [vmem:[%s308] sm:$0xff] %vm307, %v306
  %s310 = scalar_lea.vmem %s0, 197
  %v311 = vld [vmem:[%s310] ss:$8 sm:$0xf]
  %s312 = scalar_lea.vmem %s0, 197
  %v313 = vld [vmem:[%s312] ss:$8 sm:$0xf0]
  %vm314 = vcmask 1047556
  %v315 = vsel %vm314, %v313, %v311
  %316 = vrot.lane.b32.xlu0 %v315, 80
  %v317 = vpop.permute.xlu0 %316
  %vm318 = vcmask 786048
  %s319 = scalar_lea.vmem %s1, 24
  %320 = vst.msk [vmem:[%s319] sm:$0xff] %vm318, %v317
  %s321 = scalar_lea.vmem %s0, 453
  %v322 = vld [vmem:[%s321] ss:$8 sm:$0xf]
  %s323 = scalar_lea.vmem %s0, 453
  %v324 = vld [vmem:[%s323] ss:$8 sm:$0xf0]
  %vm325 = vcmask 1047556
  %v326 = vsel %vm325, %v324, %v322
  %327 = vrot.lane.b32.xlu0 %v326, 80
  %v328 = vpop.permute.xlu0 %327
  %vm329 = vcmask 786048
  %s330 = scalar_lea.vmem %s1, 56
  %331 = vst.msk [vmem:[%s330] sm:$0xff] %vm329, %v328
  %s332 = scalar_lea.vmem %s0, 4
  %v333 = vld [vmem:[%s332] ss:$8 sm:$0xf]
  %s334 = scalar_lea.vmem %s0, 4
  %v335 = vld [vmem:[%s334] ss:$8 sm:$0xf0]
  %vm336 = vcmask 1047556
  %v337 = vsel %vm336, %v335, %v333
  %338 = vrot.lane.b32.xlu0 %v337, 64
  %v339 = vpop.permute.xlu0 %338
  %vm340 = vcmask 654848
  %341 = vst.msk [vmem:[%s1] sm:$0xff] %vm340, %v339
  %s342 = scalar_lea.vmem %s0, 260
  %v343 = vld [vmem:[%s342] ss:$8 sm:$0xf]
  %s344 = scalar_lea.vmem %s0, 260
  %v345 = vld [vmem:[%s344] ss:$8 sm:$0xf0]
  %vm346 = vcmask 1047556
  %v347 = vsel %vm346, %v345, %v343
  %348 = vrot.lane.b32.xlu0 %v347, 64
  %v349 = vpop.permute.xlu0 %348
  %vm350 = vcmask 654848
  %s351 = scalar_lea.vmem %s1, 32
  %352 = vst.msk [vmem:[%s351] sm:$0xff] %vm350, %v349
  %s353 = scalar_lea.vmem %s0, 68
  %v354 = vld [vmem:[%s353] ss:$8 sm:$0xf]
  %s355 = scalar_lea.vmem %s0, 68
  %v356 = vld [vmem:[%s355] ss:$8 sm:$0xf0]
  %vm357 = vcmask 1047556
  %v358 = vsel %vm357, %v356, %v354
  %359 = vrot.lane.b32.xlu0 %v358, 64
  %v360 = vpop.permute.xlu0 %359
  %vm361 = vcmask 654848
  %s362 = scalar_lea.vmem %s1, 8
  %363 = vst.msk [vmem:[%s362] sm:$0xff] %vm361, %v360
  %s364 = scalar_lea.vmem %s0, 324
  %v365 = vld [vmem:[%s364] ss:$8 sm:$0xf]
  %s366 = scalar_lea.vmem %s0, 324
  %v367 = vld [vmem:[%s366] ss:$8 sm:$0xf0]
  %vm368 = vcmask 1047556
  %v369 = vsel %vm368, %v367, %v365
  %370 = vrot.lane.b32.xlu0 %v369, 64
  %v371 = vpop.permute.xlu0 %370
  %vm372 = vcmask 654848
  %s373 = scalar_lea.vmem %s1, 40
  %374 = vst.msk [vmem:[%s373] sm:$0xff] %vm372, %v371
  %s375 = scalar_lea.vmem %s0, 132
  %v376 = vld [vmem:[%s375] ss:$8 sm:$0xf]
  %s377 = scalar_lea.vmem %s0, 132
  %v378 = vld [vmem:[%s377] ss:$8 sm:$0xf0]
  %vm379 = vcmask 1047556
  %v380 = vsel %vm379, %v378, %v376
  %381 = vrot.lane.b32.xlu0 %v380, 64
  %v382 = vpop.permute.xlu0 %381
  %vm383 = vcmask 654848
  %s384 = scalar_lea.vmem %s1, 16
  %385 = vst.msk [vmem:[%s384] sm:$0xff] %vm383, %v382
  %s386 = scalar_lea.vmem %s0, 388
  %v387 = vld [vmem:[%s386] ss:$8 sm:$0xf]
  %s388 = scalar_lea.vmem %s0, 388
  %v389 = vld [vmem:[%s388] ss:$8 sm:$0xf0]
  %vm390 = vcmask 1047556
  %v391 = vsel %vm390, %v389, %v387
  %392 = vrot.lane.b32.xlu0 %v391, 64
  %v393 = vpop.permute.xlu0 %392
  %vm394 = vcmask 654848
  %s395 = scalar_lea.vmem %s1, 48
  %396 = vst.msk [vmem:[%s395] sm:$0xff] %vm394, %v393
  %s397 = scalar_lea.vmem %s0, 196
  %v398 = vld [vmem:[%s397] ss:$8 sm:$0xf]
  %s399 = scalar_lea.vmem %s0, 196
  %v400 = vld [vmem:[%s399] ss:$8 sm:$0xf0]
  %vm401 = vcmask 1047556
  %v402 = vsel %vm401, %v400, %v398
  %403 = vrot.lane.b32.xlu0 %v402, 64
  %v404 = vpop.permute.xlu0 %403
  %vm405 = vcmask 654848
  %s406 = scalar_lea.vmem %s1, 24
  %407 = vst.msk [vmem:[%s406] sm:$0xff] %vm405, %v404
  %s408 = scalar_lea.vmem %s0, 452
  %v409 = vld [vmem:[%s408] ss:$8 sm:$0xf]
  %s410 = scalar_lea.vmem %s0, 452
  %v411 = vld [vmem:[%s410] ss:$8 sm:$0xf0]
  %vm412 = vcmask 1047556
  %v413 = vsel %vm412, %v411, %v409
  %414 = vrot.lane.b32.xlu0 %v413, 64
  %v415 = vpop.permute.xlu0 %414
  %vm416 = vcmask 654848
  %s417 = scalar_lea.vmem %s1, 56
  %418 = vst.msk [vmem:[%s417] sm:$0xff] %vm416, %v415
  %s419 = scalar_lea.vmem %s0, 3
  %v420 = vld [vmem:[%s419] ss:$8 sm:$0xf]
  %s421 = scalar_lea.vmem %s0, 3
  %v422 = vld [vmem:[%s421] ss:$8 sm:$0xf0]
  %vm423 = vcmask 1047556
  %v424 = vsel %vm423, %v422, %v420
  %425 = vrot.lane.b32.xlu0 %v424, 48
  %v426 = vpop.permute.xlu0 %425
  %vm427 = vcmask 523648
  %428 = vst.msk [vmem:[%s1] sm:$0xff] %vm427, %v426
  %s429 = scalar_lea.vmem %s0, 259
  %v430 = vld [vmem:[%s429] ss:$8 sm:$0xf]
  %s431 = scalar_lea.vmem %s0, 259
  %v432 = vld [vmem:[%s431] ss:$8 sm:$0xf0]
  %vm433 = vcmask 1047556
  %v434 = vsel %vm433, %v432, %v430
  %435 = vrot.lane.b32.xlu0 %v434, 48
  %v436 = vpop.permute.xlu0 %435
  %vm437 = vcmask 523648
  %s438 = scalar_lea.vmem %s1, 32
  %439 = vst.msk [vmem:[%s438] sm:$0xff] %vm437, %v436
  %s440 = scalar_lea.vmem %s0, 67
  %v441 = vld [vmem:[%s440] ss:$8 sm:$0xf]
  %s442 = scalar_lea.vmem %s0, 67
  %v443 = vld [vmem:[%s442] ss:$8 sm:$0xf0]
  %vm444 = vcmask 1047556
  %v445 = vsel %vm444, %v443, %v441
  %446 = vrot.lane.b32.xlu0 %v445, 48
  %v447 = vpop.permute.xlu0 %446
  %vm448 = vcmask 523648
  %s449 = scalar_lea.vmem %s1, 8
  %450 = vst.msk [vmem:[%s449] sm:$0xff] %vm448, %v447
  %s451 = scalar_lea.vmem %s0, 323
  %v452 = vld [vmem:[%s451] ss:$8 sm:$0xf]
  %s453 = scalar_lea.vmem %s0, 323
  %v454 = vld [vmem:[%s453] ss:$8 sm:$0xf0]
  %vm455 = vcmask 1047556
  %v456 = vsel %vm455, %v454, %v452
  %457 = vrot.lane.b32.xlu0 %v456, 48
  %v458 = vpop.permute.xlu0 %457
  %vm459 = vcmask 523648
  %s460 = scalar_lea.vmem %s1, 40
  %461 = vst.msk [vmem:[%s460] sm:$0xff] %vm459, %v458
  %s462 = scalar_lea.vmem %s0, 131
  %v463 = vld [vmem:[%s462] ss:$8 sm:$0xf]
  %s464 = scalar_lea.vmem %s0, 131
  %v465 = vld [vmem:[%s464] ss:$8 sm:$0xf0]
  %vm466 = vcmask 1047556
  %v467 = vsel %vm466, %v465, %v463
  %468 = vrot.lane.b32.xlu0 %v467, 48
  %v469 = vpop.permute.xlu0 %468
  %vm470 = vcmask 523648
  %s471 = scalar_lea.vmem %s1, 16
  %472 = vst.msk [vmem:[%s471] sm:$0xff] %vm470, %v469
  %s473 = scalar_lea.vmem %s0, 387
  %v474 = vld [vmem:[%s473] ss:$8 sm:$0xf]
  %s475 = scalar_lea.vmem %s0, 387
  %v476 = vld [vmem:[%s475] ss:$8 sm:$0xf0]
  %vm477 = vcmask 1047556
  %v478 = vsel %vm477, %v476, %v474
  %479 = vrot.lane.b32.xlu0 %v478, 48
  %v480 = vpop.permute.xlu0 %479
  %vm481 = vcmask 523648
  %s482 = scalar_lea.vmem %s1, 48
  %483 = vst.msk [vmem:[%s482] sm:$0xff] %vm481, %v480
  %s484 = scalar_lea.vmem %s0, 195
  %v485 = vld [vmem:[%s484] ss:$8 sm:$0xf]
  %s486 = scalar_lea.vmem %s0, 195
  %v487 = vld [vmem:[%s486] ss:$8 sm:$0xf0]
  %vm488 = vcmask 1047556
  %v489 = vsel %vm488, %v487, %v485
  %490 = vrot.lane.b32.xlu0 %v489, 48
  %v491 = vpop.permute.xlu0 %490
  %vm492 = vcmask 523648
  %s493 = scalar_lea.vmem %s1, 24
  %494 = vst.msk [vmem:[%s493] sm:$0xff] %vm492, %v491
  %s495 = scalar_lea.vmem %s0, 451
  %v496 = vld [vmem:[%s495] ss:$8 sm:$0xf]
  %s497 = scalar_lea.vmem %s0, 451
  %v498 = vld [vmem:[%s497] ss:$8 sm:$0xf0]
  %vm499 = vcmask 1047556
  %v500 = vsel %vm499, %v498, %v496
  %501 = vrot.lane.b32.xlu0 %v500, 48
  %v502 = vpop.permute.xlu0 %501
  %vm503 = vcmask 523648
  %s504 = scalar_lea.vmem %s1, 56
  %505 = vst.msk [vmem:[%s504] sm:$0xff] %vm503, %v502
  %s506 = scalar_lea.vmem %s0, 2
  %v507 = vld [vmem:[%s506] ss:$8 sm:$0xf]
  %s508 = scalar_lea.vmem %s0, 2
  %v509 = vld [vmem:[%s508] ss:$8 sm:$0xf0]
  %vm510 = vcmask 1047556
  %v511 = vsel %vm510, %v509, %v507
  %512 = vrot.lane.b32.xlu0 %v511, 32
  %v513 = vpop.permute.xlu0 %512
  %vm514 = vcmask 392448
  %515 = vst.msk [vmem:[%s1] sm:$0xff] %vm514, %v513
  %s516 = scalar_lea.vmem %s0, 258
  %v517 = vld [vmem:[%s516] ss:$8 sm:$0xf]
  %s518 = scalar_lea.vmem %s0, 258
  %v519 = vld [vmem:[%s518] ss:$8 sm:$0xf0]
  %vm520 = vcmask 1047556
  %v521 = vsel %vm520, %v519, %v517
  %522 = vrot.lane.b32.xlu0 %v521, 32
  %v523 = vpop.permute.xlu0 %522
  %vm524 = vcmask 392448
  %s525 = scalar_lea.vmem %s1, 32
  %526 = vst.msk [vmem:[%s525] sm:$0xff] %vm524, %v523
  %s527 = scalar_lea.vmem %s0, 66
  %v528 = vld [vmem:[%s527] ss:$8 sm:$0xf]
  %s529 = scalar_lea.vmem %s0, 66
  %v530 = vld [vmem:[%s529] ss:$8 sm:$0xf0]
  %vm531 = vcmask 1047556
  %v532 = vsel %vm531, %v530, %v528
  %533 = vrot.lane.b32.xlu0 %v532, 32
  %v534 = vpop.permute.xlu0 %533
  %vm535 = vcmask 392448
  %s536 = scalar_lea.vmem %s1, 8
  %537 = vst.msk [vmem:[%s536] sm:$0xff] %vm535, %v534
  %s538 = scalar_lea.vmem %s0, 322
  %v539 = vld [vmem:[%s538] ss:$8 sm:$0xf]
  %s540 = scalar_lea.vmem %s0, 322
  %v541 = vld [vmem:[%s540] ss:$8 sm:$0xf0]
  %vm542 = vcmask 1047556
  %v543 = vsel %vm542, %v541, %v539
  %544 = vrot.lane.b32.xlu0 %v543, 32
  %v545 = vpop.permute.xlu0 %544
  %vm546 = vcmask 392448
  %s547 = scalar_lea.vmem %s1, 40
  %548 = vst.msk [vmem:[%s547] sm:$0xff] %vm546, %v545
  %s549 = scalar_lea.vmem %s0, 130
  %v550 = vld [vmem:[%s549] ss:$8 sm:$0xf]
  %s551 = scalar_lea.vmem %s0, 130
  %v552 = vld [vmem:[%s551] ss:$8 sm:$0xf0]
  %vm553 = vcmask 1047556
  %v554 = vsel %vm553, %v552, %v550
  %555 = vrot.lane.b32.xlu0 %v554, 32
  %v556 = vpop.permute.xlu0 %555
  %vm557 = vcmask 392448
  %s558 = scalar_lea.vmem %s1, 16
  %559 = vst.msk [vmem:[%s558] sm:$0xff] %vm557, %v556
  %s560 = scalar_lea.vmem %s0, 386
  %v561 = vld [vmem:[%s560] ss:$8 sm:$0xf]
  %s562 = scalar_lea.vmem %s0, 386
  %v563 = vld [vmem:[%s562] ss:$8 sm:$0xf0]
  %vm564 = vcmask 1047556
  %v565 = vsel %vm564, %v563, %v561
  %566 = vrot.lane.b32.xlu0 %v565, 32
  %v567 = vpop.permute.xlu0 %566
  %vm568 = vcmask 392448
  %s569 = scalar_lea.vmem %s1, 48
  %570 = vst.msk [vmem:[%s569] sm:$0xff] %vm568, %v567
  %s571 = scalar_lea.vmem %s0, 194
  %v572 = vld [vmem:[%s571] ss:$8 sm:$0xf]
  %s573 = scalar_lea.vmem %s0, 194
  %v574 = vld [vmem:[%s573] ss:$8 sm:$0xf0]
  %vm575 = vcmask 1047556
  %v576 = vsel %vm575, %v574, %v572
  %577 = vrot.lane.b32.xlu0 %v576, 32
  %v578 = vpop.permute.xlu0 %577
  %vm579 = vcmask 392448
  %s580 = scalar_lea.vmem %s1, 24
  %581 = vst.msk [vmem:[%s580] sm:$0xff] %vm579, %v578
  %s582 = scalar_lea.vmem %s0, 450
  %v583 = vld [vmem:[%s582] ss:$8 sm:$0xf]
  %s584 = scalar_lea.vmem %s0, 450
  %v585 = vld [vmem:[%s584] ss:$8 sm:$0xf0]
  %vm586 = vcmask 1047556
  %v587 = vsel %vm586, %v585, %v583
  %588 = vrot.lane.b32.xlu0 %v587, 32
  %v589 = vpop.permute.xlu0 %588
  %vm590 = vcmask 392448
  %s591 = scalar_lea.vmem %s1, 56
  %592 = vst.msk [vmem:[%s591] sm:$0xff] %vm590, %v589
  %s593 = scalar_lea.vmem %s0, 1
  %v594 = vld [vmem:[%s593] ss:$8 sm:$0xf]
  %s595 = scalar_lea.vmem %s0, 1
  %v596 = vld [vmem:[%s595] ss:$8 sm:$0xf0]
  %vm597 = vcmask 1047556
  %v598 = vsel %vm597, %v596, %v594
  %599 = vrot.lane.b32.xlu0 %v598, 16
  %v600 = vpop.permute.xlu0 %599
  %vm601 = vcmask 261248
  %602 = vst.msk [vmem:[%s1] sm:$0xff] %vm601, %v600
  %s603 = scalar_lea.vmem %s0, 257
  %v604 = vld [vmem:[%s603] ss:$8 sm:$0xf]
  %s605 = scalar_lea.vmem %s0, 257
  %v606 = vld [vmem:[%s605] ss:$8 sm:$0xf0]
  %vm607 = vcmask 1047556
  %v608 = vsel %vm607, %v606, %v604
  %609 = vrot.lane.b32.xlu0 %v608, 16
  %v610 = vpop.permute.xlu0 %609
  %vm611 = vcmask 261248
  %s612 = scalar_lea.vmem %s1, 32
  %613 = vst.msk [vmem:[%s612] sm:$0xff] %vm611, %v610
  %s614 = scalar_lea.vmem %s0, 65
  %v615 = vld [vmem:[%s614] ss:$8 sm:$0xf]
  %s616 = scalar_lea.vmem %s0, 65
  %v617 = vld [vmem:[%s616] ss:$8 sm:$0xf0]
  %vm618 = vcmask 1047556
  %v619 = vsel %vm618, %v617, %v615
  %620 = vrot.lane.b32.xlu0 %v619, 16
  %v621 = vpop.permute.xlu0 %620
  %vm622 = vcmask 261248
  %s623 = scalar_lea.vmem %s1, 8
  %624 = vst.msk [vmem:[%s623] sm:$0xff] %vm622, %v621
  %s625 = scalar_lea.vmem %s0, 321
  %v626 = vld [vmem:[%s625] ss:$8 sm:$0xf]
  %s627 = scalar_lea.vmem %s0, 321
  %v628 = vld [vmem:[%s627] ss:$8 sm:$0xf0]
  %vm629 = vcmask 1047556
  %v630 = vsel %vm629, %v628, %v626
  %631 = vrot.lane.b32.xlu0 %v630, 16
  %v632 = vpop.permute.xlu0 %631
  %vm633 = vcmask 261248
  %s634 = scalar_lea.vmem %s1, 40
  %635 = vst.msk [vmem:[%s634] sm:$0xff] %vm633, %v632
  %s636 = scalar_lea.vmem %s0, 129
  %v637 = vld [vmem:[%s636] ss:$8 sm:$0xf]
  %s638 = scalar_lea.vmem %s0, 129
  %v639 = vld [vmem:[%s638] ss:$8 sm:$0xf0]
  %vm640 = vcmask 1047556
  %v641 = vsel %vm640, %v639, %v637
  %642 = vrot.lane.b32.xlu0 %v641, 16
  %v643 = vpop.permute.xlu0 %642
  %vm644 = vcmask 261248
  %s645 = scalar_lea.vmem %s1, 16
  %646 = vst.msk [vmem:[%s645] sm:$0xff] %vm644, %v643
  %s647 = scalar_lea.vmem %s0, 385
  %v648 = vld [vmem:[%s647] ss:$8 sm:$0xf]
  %s649 = scalar_lea.vmem %s0, 385
  %v650 = vld [vmem:[%s649] ss:$8 sm:$0xf0]
  %vm651 = vcmask 1047556
  %v652 = vsel %vm651, %v650, %v648
  %653 = vrot.lane.b32.xlu0 %v652, 16
  %v654 = vpop.permute.xlu0 %653
  %vm655 = vcmask 261248
  %s656 = scalar_lea.vmem %s1, 48
  %657 = vst.msk [vmem:[%s656] sm:$0xff] %vm655, %v654
  %s658 = scalar_lea.vmem %s0, 193
  %v659 = vld [vmem:[%s658] ss:$8 sm:$0xf]
  %s660 = scalar_lea.vmem %s0, 193
  %v661 = vld [vmem:[%s660] ss:$8 sm:$0xf0]
  %vm662 = vcmask 1047556
  %v663 = vsel %vm662, %v661, %v659
  %664 = vrot.lane.b32.xlu0 %v663, 16
  %v665 = vpop.permute.xlu0 %664
  %vm666 = vcmask 261248
  %s667 = scalar_lea.vmem %s1, 24
  %668 = vst.msk [vmem:[%s667] sm:$0xff] %vm666, %v665
  %s669 = scalar_lea.vmem %s0, 449
  %v670 = vld [vmem:[%s669] ss:$8 sm:$0xf]
  %s671 = scalar_lea.vmem %s0, 449
  %v672 = vld [vmem:[%s671] ss:$8 sm:$0xf0]
  %vm673 = vcmask 1047556
  %v674 = vsel %vm673, %v672, %v670
  %675 = vrot.lane.b32.xlu0 %v674, 16
  %v676 = vpop.permute.xlu0 %675
  %vm677 = vcmask 261248
  %s678 = scalar_lea.vmem %s1, 56
  %679 = vst.msk [vmem:[%s678] sm:$0xff] %vm677, %v676

// kernel: sccnet_forward.1
$region0: #{sccnet_forward.1}
  #allocation0 [shape = 'u32[]', space=smem, size = 0x4, offset = 0x4, fixed_abs, tag = 'smem constant byte address 0x4 - core index']
  #allocation1 [shape = 'u32[144,128]{1,0:T(1,128)}', space=vmem, size = 0x12000, scoped, tag = 'internal scratch']
  #allocation2 [shape = 'f32[80,2048]{1,0:T(8,128)}', space=vmem, size = 0xa0000, scoped, tag = 'scratch operand']
  %s0 = inlined_call_operand.vmem [shape: f32[1,8,2176], index: 0, kind: input, shape index: {}]
  %s1 = inlined_call_operand.vmem [shape: f32[16,80], index: 1, kind: input, shape index: {}]
  %s2 = inlined_call_operand.vmem [shape: f32[16,2048], index: 2, kind: input, shape index: {}]
  %s3 = inlined_call_operand.vmem [shape: f32[2048,128], index: 3, kind: input, shape index: {}]
  %s4 = inlined_call_operand.vmem [shape: f32[4,16,128], index: 4, kind: input, shape index: {}]
  %s5 = inlined_call_operand.vmem [shape: f32[128,8], index: 5, kind: input, shape index: {}]
  %s6 = inlined_call_operand.vmem [shape: f32[4,1], index: 6, kind: input, shape index: {}]
  %s7 = inlined_call_operand.vmem [shape: f32[1,4,8], index: 7, kind: output, shape index: {}]
  %s8 = sld [smem:[#allocation0]]
  $region38: #{sccnet_forward.1} parent=0
    _
  %s10 = ssub.s32 1, %s8
  %s11 = scalar_select 0, %s10, %s8
  // Predicated region
  $region2: #{sccnet_forward.1} parent=0 // pred_check
    _
  $region3: #{sccnet_forward.1} parent=0 // pred_check_branch
    %13 = sbr.rel (0) target = $region5
  $region4: #{sccnet_forward.1} parent=0 // pred_region
    _
  $region5: #{sccnet_forward.1} parent=0 // pred_fallthru
    _
  // Predicated region
  $region6: #{sccnet_forward.1} parent=0 // pred_check
    _
  $region7: #{sccnet_forward.1} parent=0 // pred_check_branch
    %15 = sbr.rel (0) target = $region9
  $region8: #{sccnet_forward.1} parent=0 // pred_region
    _
  $region9: #{sccnet_forward.1} parent=0 // pred_fallthru
    _
  // Predicated region
  $region10: #{sccnet_forward.1} parent=0 // pred_check
    _
  $region11: #{sccnet_forward.1} parent=0 // pred_check_branch
    %17 = sbr.rel (0) target = $region13
  $region12: #{sccnet_forward.1} parent=0 // pred_region
    _
  $region13: #{sccnet_forward.1} parent=0 // pred_fallthru
    _
  // Predicated region
  $region14: #{sccnet_forward.1} parent=0 // pred_check
    _
  $region15: #{sccnet_forward.1} parent=0 // pred_check_branch
    %19 = sbr.rel (0) target = $region17
  $region16: #{sccnet_forward.1} parent=0 // pred_region
    _
  $region17: #{sccnet_forward.1} parent=0 // pred_fallthru
    _
  // Predicated region
  $region18: #{sccnet_forward.1} parent=0 // pred_check
    _
  $region19: #{sccnet_forward.1} parent=0 // pred_check_branch
    %21 = sbr.rel (0) target = $region21
  $region20: #{sccnet_forward.1} parent=0 // pred_region
    _
  $region21: #{sccnet_forward.1} parent=0 // pred_fallthru
    _
  // Predicated region
  $region22: #{sccnet_forward.1} parent=0 // pred_check
    _
  $region23: #{sccnet_forward.1} parent=0 // pred_check_branch
    %23 = sbr.rel (0) target = $region25
  $region24: #{sccnet_forward.1} parent=0 // pred_region
    _
  $region25: #{sccnet_forward.1} parent=0 // pred_fallthru
    _
  // Predicated region
  $region26: #{sccnet_forward.1} parent=0 // pred_check
    _
  $region27: #{sccnet_forward.1} parent=0 // pred_check_branch
    %25 = sbr.rel (0) target = $region29
  $region28: #{sccnet_forward.1} parent=0 // pred_region
    _
  $region29: #{sccnet_forward.1} parent=0 // pred_fallthru
    _
  %v26 = vld [vmem:[%s0] sm:$0xff]
  %v27 = vld [vmem:[%s0 + $0x8] sm:$0xff]
  %v28 = vld [vmem:[%s0 + $0x10] sm:$0xff]
  %v29 = vld [vmem:[%s0 + $0x18] sm:$0xff]
  %v30 = vld [vmem:[%s0 + $0x20] sm:$0xff]
  %v31 = vld [vmem:[%s0 + $0x28] sm:$0xff]
  %v32 = vld [vmem:[%s0 + $0x30] sm:$0xff]
  %v33 = vld [vmem:[%s0 + $0x38] sm:$0xff]
  %v34 = vld [vmem:[%s0 + $0x40] sm:$0xff]
  %v35 = vld [vmem:[%s0 + $0x48] sm:$0xff]
  %v36 = vld [vmem:[%s0 + $0x50] sm:$0xff]
  %v37 = vld [vmem:[%s0 + $0x58] sm:$0xff]
  %v38 = vld [vmem:[%s0 + $0x60] sm:$0xff]
  %v39 = vld [vmem:[%s0 + $0x68] sm:$0xff]
  %v40 = vld [vmem:[%s0 + $0x70] sm:$0xff]
  %v41 = vld [vmem:[%s0 + $0x78] sm:$0xff]
  %v42 = vld [vmem:[%s0 + $0x80] sm:$0xff]
  %43 = vst [vmem:[#allocation2] sm:$0xff] %v26
  %44 = vst [vmem:[#allocation2 + $0x8] sm:$0xff] %v27
  %45 = vst [vmem:[#allocation2 + $0x10] sm:$0xff] %v28
  %46 = vst [vmem:[#allocation2 + $0x18] sm:$0xff] %v29
  %47 = vst [vmem:[#allocation2 + $0x20] sm:$0xff] %v30
  %48 = vst [vmem:[#allocation2 + $0x28] sm:$0xff] %v31
  %49 = vst [vmem:[#allocation2 + $0x30] sm:$0xff] %v32
  %50 = vst [vmem:[#allocation2 + $0x38] sm:$0xff] %v33
  %51 = vst [vmem:[#allocation2 + $0x40] sm:$0xff] %v34
  %52 = vst [vmem:[#allocation2 + $0x48] sm:$0xff] %v35
  %53 = vst [vmem:[#allocation2 + $0x50] sm:$0xff] %v36
  %54 = vst [vmem:[#allocation2 + $0x58] sm:$0xff] %v37
  %55 = vst [vmem:[#allocation2 + $0x60] sm:$0xff] %v38
  %56 = vst [vmem:[#allocation2 + $0x68] sm:$0xff] %v39
  %57 = vst [vmem:[#allocation2 + $0x70] sm:$0xff] %v40
  %58 = vst [vmem:[#allocation2 + $0x78] sm:$0xff] %v41
  %76 = vrot.lane.b32.xlu0 %v26, 127
  %v77 = vpop.permute.xlu0 %76
  %78 = vrot.lane.b32.xlu0 %v27, 127
  %v79 = vpop.permute.xlu0 %78
  %80 = vrot.lane.b32.xlu0 %v28, 127
  %v81 = vpop.permute.xlu0 %80
  %82 = vrot.lane.b32.xlu0 %v29, 127
  %v83 = vpop.permute.xlu0 %82
  %84 = vrot.lane.b32.xlu0 %v30, 127
  %v85 = vpop.permute.xlu0 %84
  %86 = vrot.lane.b32.xlu0 %v31, 127
  %v87 = vpop.permute.xlu0 %86
  %88 = vrot.lane.b32.xlu0 %v32, 127
  %v89 = vpop.permute.xlu0 %88
  %90 = vrot.lane.b32.xlu0 %v33, 127
  %v91 = vpop.permute.xlu0 %90
  %92 = vrot.lane.b32.xlu0 %v34, 127
  %v93 = vpop.permute.xlu0 %92
  %94 = vrot.lane.b32.xlu0 %v35, 127
  %v95 = vpop.permute.xlu0 %94
  %96 = vrot.lane.b32.xlu0 %v36, 127
  %v97 = vpop.permute.xlu0 %96
  %98 = vrot.lane.b32.xlu0 %v37, 127
  %v99 = vpop.permute.xlu0 %98
  %100 = vrot.lane.b32.xlu0 %v38, 127
  %v101 = vpop.permute.xlu0 %100
  %102 = vrot.lane.b32.xlu0 %v39, 127
  %v103 = vpop.permute.xlu0 %102
  %104 = vrot.lane.b32.xlu0 %v40, 127
  %v105 = vpop.permute.xlu0 %104
  %106 = vrot.lane.b32.xlu0 %v41, 127
  %v107 = vpop.permute.xlu0 %106
  %108 = vrot.lane.b32.xlu0 %v42, 127
  %v109 = vpop.permute.xlu0 %108
  %vm110 = vcmask 1039360
  %v111 = vsel %vm110, %v77, %v79
  %v112 = vsel %vm110, %v79, %v81
  %v113 = vsel %vm110, %v81, %v83
  %v114 = vsel %vm110, %v83, %v85
  %v115 = vsel %vm110, %v85, %v87
  %v116 = vsel %vm110, %v87, %v89
  %v117 = vsel %vm110, %v89, %v91
  %v118 = vsel %vm110, %v91, %v93
  %v119 = vsel %vm110, %v93, %v95
  %v120 = vsel %vm110, %v95, %v97
  %v121 = vsel %vm110, %v97, %v99
  %v122 = vsel %vm110, %v99, %v101
  %v123 = vsel %vm110, %v101, %v103
  %v124 = vsel %vm110, %v103, %v105
  %v125 = vsel %vm110, %v105, %v107
  %v126 = vsel %vm110, %v107, %v109
  %143 = vst [vmem:[#allocation2 + $0x80] sm:$0xff] %v111
  %144 = vst [vmem:[#allocation2 + $0x88] sm:$0xff] %v112
  %145 = vst [vmem:[#allocation2 + $0x90] sm:$0xff] %v113
  %146 = vst [vmem:[#allocation2 + $0x98] sm:$0xff] %v114
  %147 = vst [vmem:[#allocation2 + $0xa0] sm:$0xff] %v115
  %148 = vst [vmem:[#allocation2 + $0xa8] sm:$0xff] %v116
  %149 = vst [vmem:[#allocation2 + $0xb0] sm:$0xff] %v117
  %150 = vst [vmem:[#allocation2 + $0xb8] sm:$0xff] %v118
  %151 = vst [vmem:[#allocation2 + $0xc0] sm:$0xff] %v119
  %152 = vst [vmem:[#allocation2 + $0xc8] sm:$0xff] %v120
  %153 = vst [vmem:[#allocation2 + $0xd0] sm:$0xff] %v121
  %154 = vst [vmem:[#allocation2 + $0xd8] sm:$0xff] %v122
  %155 = vst [vmem:[#allocation2 + $0xe0] sm:$0xff] %v123
  %156 = vst [vmem:[#allocation2 + $0xe8] sm:$0xff] %v124
  %157 = vst [vmem:[#allocation2 + $0xf0] sm:$0xff] %v125
  %158 = vst [vmem:[#allocation2 + $0xf8] sm:$0xff] %v126
  %159 = vrot.lane.b32.xlu0 %v26, 126
  %v160 = vpop.permute.xlu0 %159
  %161 = vrot.lane.b32.xlu0 %v27, 126
  %v162 = vpop.permute.xlu0 %161
  %163 = vrot.lane.b32.xlu0 %v28, 126
  %v164 = vpop.permute.xlu0 %163
  %165 = vrot.lane.b32.xlu0 %v29, 126
  %v166 = vpop.permute.xlu0 %165
  %167 = vrot.lane.b32.xlu0 %v30, 126
  %v168 = vpop.permute.xlu0 %167
  %169 = vrot.lane.b32.xlu0 %v31, 126
  %v170 = vpop.permute.xlu0 %169
  %171 = vrot.lane.b32.xlu0 %v32, 126
  %v172 = vpop.permute.xlu0 %171
  %173 = vrot.lane.b32.xlu0 %v33, 126
  %v174 = vpop.permute.xlu0 %173
  %175 = vrot.lane.b32.xlu0 %v34, 126
  %v176 = vpop.permute.xlu0 %175
  %177 = vrot.lane.b32.xlu0 %v35, 126
  %v178 = vpop.permute.xlu0 %177
  %179 = vrot.lane.b32.xlu0 %v36, 126
  %v180 = vpop.permute.xlu0 %179
  %181 = vrot.lane.b32.xlu0 %v37, 126
  %v182 = vpop.permute.xlu0 %181
  %183 = vrot.lane.b32.xlu0 %v38, 126
  %v184 = vpop.permute.xlu0 %183
  %185 = vrot.lane.b32.xlu0 %v39, 126
  %v186 = vpop.permute.xlu0 %185
  %187 = vrot.lane.b32.xlu0 %v40, 126
  %v188 = vpop.permute.xlu0 %187
  %189 = vrot.lane.b32.xlu0 %v41, 126
  %v190 = vpop.permute.xlu0 %189
  %191 = vrot.lane.b32.xlu0 %v42, 126
  %v192 = vpop.permute.xlu0 %191
  %vm193 = vcmask 1031168
  %v194 = vsel %vm193, %v160, %v162
  %v195 = vsel %vm193, %v162, %v164
  %v196 = vsel %vm193, %v164, %v166
  %v197 = vsel %vm193, %v166, %v168
  %v198 = vsel %vm193, %v168, %v170
  %v199 = vsel %vm193, %v170, %v172
  %v200 = vsel %vm193, %v172, %v174
  %v201 = vsel %vm193, %v174, %v176
  %v202 = vsel %vm193, %v176, %v178
  %v203 = vsel %vm193, %v178, %v180
  %v204 = vsel %vm193, %v180, %v182
  %v205 = vsel %vm193, %v182, %v184
  %v206 = vsel %vm193, %v184, %v186
  %v207 = vsel %vm193, %v186, %v188
  %v208 = vsel %vm193, %v188, %v190
  %v209 = vsel %vm193, %v190, %v192
  %226 = vst [vmem:[#allocation2 + $0x100] sm:$0xff] %v194
  %227 = vst [vmem:[#allocation2 + $0x108] sm:$0xff] %v195
  %228 = vst [vmem:[#allocation2 + $0x110] sm:$0xff] %v196
  %229 = vst [vmem:[#allocation2 + $0x118] sm:$0xff] %v197
  %230 = vst [vmem:[#allocation2 + $0x120] sm:$0xff] %v198
  %231 = vst [vmem:[#allocation2 + $0x128] sm:$0xff] %v199
  %232 = vst [vmem:[#allocation2 + $0x130] sm:$0xff] %v200
  %233 = vst [vmem:[#allocation2 + $0x138] sm:$0xff] %v201
  %234 = vst [vmem:[#allocation2 + $0x140] sm:$0xff] %v202
  %235 = vst [vmem:[#allocation2 + $0x148] sm:$0xff] %v203
  %236 = vst [vmem:[#allocation2 + $0x150] sm:$0xff] %v204
  %237 = vst [vmem:[#allocation2 + $0x158] sm:$0xff] %v205
  %238 = vst [vmem:[#allocation2 + $0x160] sm:$0xff] %v206
  %239 = vst [vmem:[#allocation2 + $0x168] sm:$0xff] %v207
  %240 = vst [vmem:[#allocation2 + $0x170] sm:$0xff] %v208
  %241 = vst [vmem:[#allocation2 + $0x178] sm:$0xff] %v209
  %242 = vrot.lane.b32.xlu0 %v26, 125
  %v243 = vpop.permute.xlu0 %242
  %244 = vrot.lane.b32.xlu0 %v27, 125
  %v245 = vpop.permute.xlu0 %244
  %246 = vrot.lane.b32.xlu0 %v28, 125
  %v247 = vpop.permute.xlu0 %246
  %248 = vrot.lane.b32.xlu0 %v29, 125
  %v249 = vpop.permute.xlu0 %248
  %250 = vrot.lane.b32.xlu0 %v30, 125
  %v251 = vpop.permute.xlu0 %250
  %252 = vrot.lane.b32.xlu0 %v31, 125
  %v253 = vpop.permute.xlu0 %252
  %254 = vrot.lane.b32.xlu0 %v32, 125
  %v255 = vpop.permute.xlu0 %254
  %256 = vrot.lane.b32.xlu0 %v33, 125
  %v257 = vpop.permute.xlu0 %256
  %258 = vrot.lane.b32.xlu0 %v34, 125
  %v259 = vpop.permute.xlu0 %258
  %260 = vrot.lane.b32.xlu0 %v35, 125
  %v261 = vpop.permute.xlu0 %260
  %262 = vrot.lane.b32.xlu0 %v36, 125
  %v263 = vpop.permute.xlu0 %262
  %264 = vrot.lane.b32.xlu0 %v37, 125
  %v265 = vpop.permute.xlu0 %264
  %266 = vrot.lane.b32.xlu0 %v38, 125
  %v267 = vpop.permute.xlu0 %266
  %268 = vrot.lane.b32.xlu0 %v39, 125
  %v269 = vpop.permute.xlu0 %268
  %270 = vrot.lane.b32.xlu0 %v40, 125
  %v271 = vpop.permute.xlu0 %270
  %272 = vrot.lane.b32.xlu0 %v41, 125
  %v273 = vpop.permute.xlu0 %272
  %274 = vrot.lane.b32.xlu0 %v42, 125
  %v275 = vpop.permute.xlu0 %274
  %vm276 = vcmask 1022976
  %v277 = vsel %vm276, %v243, %v245
  %v278 = vsel %vm276, %v245, %v247
  %v279 = vsel %vm276, %v247, %v249
  %v280 = vsel %vm276, %v249, %v251
  %v281 = vsel %vm276, %v251, %v253
  %v282 = vsel %vm276, %v253, %v255
  %v283 = vsel %vm276, %v255, %v257
  %v284 = vsel %vm276, %v257, %v259
  %v285 = vsel %vm276, %v259, %v261
  %v286 = vsel %vm276, %v261, %v263
  %v287 = vsel %vm276, %v263, %v265
  %v288 = vsel %vm276, %v265, %v267
  %v289 = vsel %vm276, %v267, %v269
  %v290 = vsel %vm276, %v269, %v271
  %v291 = vsel %vm276, %v271, %v273
  %v292 = vsel %vm276, %v273, %v275
  %309 = vst [vmem:[#allocation2 + $0x180] sm:$0xff] %v277
  %310 = vst [vmem:[#allocation2 + $0x188] sm:$0xff] %v278
  %311 = vst [vmem:[#allocation2 + $0x190] sm:$0xff] %v279
  %312 = vst [vmem:[#allocation2 + $0x198] sm:$0xff] %v280
  %313 = vst [vmem:[#allocation2 + $0x1a0] sm:$0xff] %v281
  %314 = vst [vmem:[#allocation2 + $0x1a8] sm:$0xff] %v282
  %315 = vst [vmem:[#allocation2 + $0x1b0] sm:$0xff] %v283
  %316 = vst [vmem:[#allocation2 + $0x1b8] sm:$0xff] %v284
  %317 = vst [vmem:[#allocation2 + $0x1c0] sm:$0xff] %v285
  %318 = vst [vmem:[#allocation2 + $0x1c8] sm:$0xff] %v286
  %319 = vst [vmem:[#allocation2 + $0x1d0] sm:$0xff] %v287
  %320 = vst [vmem:[#allocation2 + $0x1d8] sm:$0xff] %v288
  %321 = vst [vmem:[#allocation2 + $0x1e0] sm:$0xff] %v289
  %322 = vst [vmem:[#allocation2 + $0x1e8] sm:$0xff] %v290
  %323 = vst [vmem:[#allocation2 + $0x1f0] sm:$0xff] %v291
  %324 = vst [vmem:[#allocation2 + $0x1f8] sm:$0xff] %v292
  %325 = vrot.lane.b32.xlu0 %v26, 124
  %v326 = vpop.permute.xlu0 %325
  %327 = vrot.lane.b32.xlu0 %v27, 124
  %v328 = vpop.permute.xlu0 %327
  %329 = vrot.lane.b32.xlu0 %v28, 124
  %v330 = vpop.permute.xlu0 %329
  %331 = vrot.lane.b32.xlu0 %v29, 124
  %v332 = vpop.permute.xlu0 %331
  %333 = vrot.lane.b32.xlu0 %v30, 124
  %v334 = vpop.permute.xlu0 %333
  %335 = vrot.lane.b32.xlu0 %v31, 124
  %v336 = vpop.permute.xlu0 %335
  %337 = vrot.lane.b32.xlu0 %v32, 124
  %v338 = vpop.permute.xlu0 %337
  %339 = vrot.lane.b32.xlu0 %v33, 124
  %v340 = vpop.permute.xlu0 %339
  %341 = vrot.lane.b32.xlu0 %v34, 124
  %v342 = vpop.permute.xlu0 %341
  %343 = vrot.lane.b32.xlu0 %v35, 124
  %v344 = vpop.permute.xlu0 %343
  %345 = vrot.lane.b32.xlu0 %v36, 124
  %v346 = vpop.permute.xlu0 %345
  %347 = vrot.lane.b32.xlu0 %v37, 124
  %v348 = vpop.permute.xlu0 %347
  %349 = vrot.lane.b32.xlu0 %v38, 124
  %v350 = vpop.permute.xlu0 %349
  %351 = vrot.lane.b32.xlu0 %v39, 124
  %v352 = vpop.permute.xlu0 %351
  %353 = vrot.lane.b32.xlu0 %v40, 124
  %v354 = vpop.permute.xlu0 %353
  %355 = vrot.lane.b32.xlu0 %v41, 124
  %v356 = vpop.permute.xlu0 %355
  %357 = vrot.lane.b32.xlu0 %v42, 124
  %v358 = vpop.permute.xlu0 %357
  %vm359 = vcmask 1014784
  %v360 = vsel %vm359, %v326, %v328
  %v361 = vsel %vm359, %v328, %v330
  %v362 = vsel %vm359, %v330, %v332
  %v363 = vsel %vm359, %v332, %v334
  %v364 = vsel %vm359, %v334, %v336
  %v365 = vsel %vm359, %v336, %v338
  %v366 = vsel %vm359, %v338, %v340
  %v367 = vsel %vm359, %v340, %v342
  %v368 = vsel %vm359, %v342, %v344
  %v369 = vsel %vm359, %v344, %v346
  %v370 = vsel %vm359, %v346, %v348
  %v371 = vsel %vm359, %v348, %v350
  %v372 = vsel %vm359, %v350, %v352
  %v373 = vsel %vm359, %v352, %v354
  %v374 = vsel %vm359, %v354, %v356
  %v375 = vsel %vm359, %v356, %v358
  %392 = vst [vmem:[#allocation2 + $0x200] sm:$0xff] %v360
  %393 = vst [vmem:[#allocation2 + $0x208] sm:$0xff] %v361
  %394 = vst [vmem:[#allocation2 + $0x210] sm:$0xff] %v362
  %395 = vst [vmem:[#allocation2 + $0x218] sm:$0xff] %v363
  %396 = vst [vmem:[#allocation2 + $0x220] sm:$0xff] %v364
  %397 = vst [vmem:[#allocation2 + $0x228] sm:$0xff] %v365
  %398 = vst [vmem:[#allocation2 + $0x230] sm:$0xff] %v366
  %399 = vst [vmem:[#allocation2 + $0x238] sm:$0xff] %v367
  %400 = vst [vmem:[#allocation2 + $0x240] sm:$0xff] %v368
  %401 = vst [vmem:[#allocation2 + $0x248] sm:$0xff] %v369
  %402 = vst [vmem:[#allocation2 + $0x250] sm:$0xff] %v370
  %403 = vst [vmem:[#allocation2 + $0x258] sm:$0xff] %v371
  %404 = vst [vmem:[#allocation2 + $0x260] sm:$0xff] %v372
  %405 = vst [vmem:[#allocation2 + $0x268] sm:$0xff] %v373
  %406 = vst [vmem:[#allocation2 + $0x270] sm:$0xff] %v374
  %407 = vst [vmem:[#allocation2 + $0x278] sm:$0xff] %v375
  %408 = vrot.lane.b32.xlu0 %v26, 123
  %v409 = vpop.permute.xlu0 %408
  %410 = vrot.lane.b32.xlu0 %v27, 123
  %v411 = vpop.permute.xlu0 %410
  %412 = vrot.lane.b32.xlu0 %v28, 123
  %v413 = vpop.permute.xlu0 %412
  %414 = vrot.lane.b32.xlu0 %v29, 123
  %v415 = vpop.permute.xlu0 %414
  %416 = vrot.lane.b32.xlu0 %v30, 123
  %v417 = vpop.permute.xlu0 %416
  %418 = vrot.lane.b32.xlu0 %v31, 123
  %v419 = vpop.permute.xlu0 %418
  %420 = vrot.lane.b32.xlu0 %v32, 123
  %v421 = vpop.permute.xlu0 %420
  %422 = vrot.lane.b32.xlu0 %v33, 123
  %v423 = vpop.permute.xlu0 %422
  %424 = vrot.lane.b32.xlu0 %v34, 123
  %v425 = vpop.permute.xlu0 %424
  %426 = vrot.lane.b32.xlu0 %v35, 123
  %v427 = vpop.permute.xlu0 %426
  %428 = vrot.lane.b32.xlu0 %v36, 123
  %v429 = vpop.permute.xlu0 %428
  %430 = vrot.lane.b32.xlu0 %v37, 123
  %v431 = vpop.permute.xlu0 %430
  %432 = vrot.lane.b32.xlu0 %v38, 123
  %v433 = vpop.permute.xlu0 %432
  %434 = vrot.lane.b32.xlu0 %v39, 123
  %v435 = vpop.permute.xlu0 %434
  %436 = vrot.lane.b32.xlu0 %v40, 123
  %v437 = vpop.permute.xlu0 %436
  %438 = vrot.lane.b32.xlu0 %v41, 123
  %v439 = vpop.permute.xlu0 %438
  %440 = vrot.lane.b32.xlu0 %v42, 123
  %v441 = vpop.permute.xlu0 %440
  %vm442 = vcmask 1006592
  %v443 = vsel %vm442, %v409, %v411
  %v444 = vsel %vm442, %v411, %v413
  %v445 = vsel %vm442, %v413, %v415
  %v446 = vsel %vm442, %v415, %v417
  %v447 = vsel %vm442, %v417, %v419
  %v448 = vsel %vm442, %v419, %v421
  %v449 = vsel %vm442, %v421, %v423
  %v450 = vsel %vm442, %v423, %v425
  %v451 = vsel %vm442, %v425, %v427
  %v452 = vsel %vm442, %v427, %v429
  %v453 = vsel %vm442, %v429, %v431
  %v454 = vsel %vm442, %v431, %v433
  %v455 = vsel %vm442, %v433, %v435
  %v456 = vsel %vm442, %v435, %v437
  %v457 = vsel %vm442, %v437, %v439
  %v458 = vsel %vm442, %v439, %v441
  %475 = vst [vmem:[#allocation2 + $0x280] sm:$0xff] %v443
  %476 = vst [vmem:[#allocation2 + $0x288] sm:$0xff] %v444
  %477 = vst [vmem:[#allocation2 + $0x290] sm:$0xff] %v445
  %478 = vst [vmem:[#allocation2 + $0x298] sm:$0xff] %v446
  %479 = vst [vmem:[#allocation2 + $0x2a0] sm:$0xff] %v447
  %480 = vst [vmem:[#allocation2 + $0x2a8] sm:$0xff] %v448
  %481 = vst [vmem:[#allocation2 + $0x2b0] sm:$0xff] %v449
  %482 = vst [vmem:[#allocation2 + $0x2b8] sm:$0xff] %v450
  %483 = vst [vmem:[#allocation2 + $0x2c0] sm:$0xff] %v451
  %484 = vst [vmem:[#allocation2 + $0x2c8] sm:$0xff] %v452
  %485 = vst [vmem:[#allocation2 + $0x2d0] sm:$0xff] %v453
  %486 = vst [vmem:[#allocation2 + $0x2d8] sm:$0xff] %v454
  %487 = vst [vmem:[#allocation2 + $0x2e0] sm:$0xff] %v455
  %488 = vst [vmem:[#allocation2 + $0x2e8] sm:$0xff] %v456
  %489 = vst [vmem:[#allocation2 + $0x2f0] sm:$0xff] %v457
  %490 = vst [vmem:[#allocation2 + $0x2f8] sm:$0xff] %v458
  %491 = vrot.lane.b32.xlu0 %v26, 122
  %v492 = vpop.permute.xlu0 %491
  %493 = vrot.lane.b32.xlu0 %v27, 122
  %v494 = vpop.permute.xlu0 %493
  %495 = vrot.lane.b32.xlu0 %v28, 122
  %v496 = vpop.permute.xlu0 %495
  %497 = vrot.lane.b32.xlu0 %v29, 122
  %v498 = vpop.permute.xlu0 %497
  %499 = vrot.lane.b32.xlu0 %v30, 122
  %v500 = vpop.permute.xlu0 %499
  %501 = vrot.lane.b32.xlu0 %v31, 122
  %v502 = vpop.permute.xlu0 %501
  %503 = vrot.lane.b32.xlu0 %v32, 122
  %v504 = vpop.permute.xlu0 %503
  %505 = vrot.lane.b32.xlu0 %v33, 122
  %v506 = vpop.permute.xlu0 %505
  %507 = vrot.lane.b32.xlu0 %v34, 122
  %v508 = vpop.permute.xlu0 %507
  %509 = vrot.lane.b32.xlu0 %v35, 122
  %v510 = vpop.permute.xlu0 %509
  %511 = vrot.lane.b32.xlu0 %v36, 122
  %v512 = vpop.permute.xlu0 %511
  %513 = vrot.lane.b32.xlu0 %v37, 122
  %v514 = vpop.permute.xlu0 %513
  %515 = vrot.lane.b32.xlu0 %v38, 122
  %v516 = vpop.permute.xlu0 %515
  %517 = vrot.lane.b32.xlu0 %v39, 122
  %v518 = vpop.permute.xlu0 %517
  %519 = vrot.lane.b32.xlu0 %v40, 122
  %v520 = vpop.permute.xlu0 %519
  %521 = vrot.lane.b32.xlu0 %v41, 122
  %v522 = vpop.permute.xlu0 %521
  %523 = vrot.lane.b32.xlu0 %v42, 122
  %v524 = vpop.permute.xlu0 %523
  %vm525 = vcmask 998400
  %v526 = vsel %vm525, %v492, %v494
  %v527 = vsel %vm525, %v494, %v496
  %v528 = vsel %vm525, %v496, %v498
  %v529 = vsel %vm525, %v498, %v500
  %v530 = vsel %vm525, %v500, %v502
  %v531 = vsel %vm525, %v502, %v504
  %v532 = vsel %vm525, %v504, %v506
  %v533 = vsel %vm525, %v506, %v508
  %v534 = vsel %vm525, %v508, %v510
  %v535 = vsel %vm525, %v510, %v512
  %v536 = vsel %vm525, %v512, %v514
  %v537 = vsel %vm525, %v514, %v516
  %v538 = vsel %vm525, %v516, %v518
  %v539 = vsel %vm525, %v518, %v520
  %v540 = vsel %vm525, %v520, %v522
  %v541 = vsel %vm525, %v522, %v524
  %558 = vst [vmem:[#allocation2 + $0x300] sm:$0xff] %v526
  %559 = vst [vmem:[#allocation2 + $0x308] sm:$0xff] %v527
  %560 = vst [vmem:[#allocation2 + $0x310] sm:$0xff] %v528
  %561 = vst [vmem:[#allocation2 + $0x318] sm:$0xff] %v529
  %562 = vst [vmem:[#allocation2 + $0x320] sm:$0xff] %v530
  %563 = vst [vmem:[#allocation2 + $0x328] sm:$0xff] %v531
  %564 = vst [vmem:[#allocation2 + $0x330] sm:$0xff] %v532
  %565 = vst [vmem:[#allocation2 + $0x338] sm:$0xff] %v533
  %566 = vst [vmem:[#allocation2 + $0x340] sm:$0xff] %v534
  %567 = vst [vmem:[#allocation2 + $0x348] sm:$0xff] %v535
  %568 = vst [vmem:[#allocation2 + $0x350] sm:$0xff] %v536
  %569 = vst [vmem:[#allocation2 + $0x358] sm:$0xff] %v537
  %570 = vst [vmem:[#allocation2 + $0x360] sm:$0xff] %v538
  %571 = vst [vmem:[#allocation2 + $0x368] sm:$0xff] %v539
  %572 = vst [vmem:[#allocation2 + $0x370] sm:$0xff] %v540
  %573 = vst [vmem:[#allocation2 + $0x378] sm:$0xff] %v541
  %574 = vrot.lane.b32.xlu0 %v26, 121
  %v575 = vpop.permute.xlu0 %574
  %576 = vrot.lane.b32.xlu0 %v27, 121
  %v577 = vpop.permute.xlu0 %576
  %578 = vrot.lane.b32.xlu0 %v28, 121
  %v579 = vpop.permute.xlu0 %578
  %580 = vrot.lane.b32.xlu0 %v29, 121
  %v581 = vpop.permute.xlu0 %580
  %582 = vrot.lane.b32.xlu0 %v30, 121
  %v583 = vpop.permute.xlu0 %582
  %584 = vrot.lane.b32.xlu0 %v31, 121
  %v585 = vpop.permute.xlu0 %584
  %586 = vrot.lane.b32.xlu0 %v32, 121
  %v587 = vpop.permute.xlu0 %586
  %588 = vrot.lane.b32.xlu0 %v33, 121
  %v589 = vpop.permute.xlu0 %588
  %590 = vrot.lane.b32.xlu0 %v34, 121
  %v591 = vpop.permute.xlu0 %590
  %592 = vrot.lane.b32.xlu0 %v35, 121
  %v593 = vpop.permute.xlu0 %592
  %594 = vrot.lane.b32.xlu0 %v36, 121
  %v595 = vpop.permute.xlu0 %594
  %596 = vrot.lane.b32.xlu0 %v37, 121
  %v597 = vpop.permute.xlu0 %596
  %598 = vrot.lane.b32.xlu0 %v38, 121
  %v599 = vpop.permute.xlu0 %598
  %600 = vrot.lane.b32.xlu0 %v39, 121
  %v601 = vpop.permute.xlu0 %600
  %602 = vrot.lane.b32.xlu0 %v40, 121
  %v603 = vpop.permute.xlu0 %602
  %604 = vrot.lane.b32.xlu0 %v41, 121
  %v605 = vpop.permute.xlu0 %604
  %606 = vrot.lane.b32.xlu0 %v42, 121
  %v607 = vpop.permute.xlu0 %606
  %vm608 = vcmask 990208
  %v609 = vsel %vm608, %v575, %v577
  %v610 = vsel %vm608, %v577, %v579
  %v611 = vsel %vm608, %v579, %v581
  %v612 = vsel %vm608, %v581, %v583
  %v613 = vsel %vm608, %v583, %v585
  %v614 = vsel %vm608, %v585, %v587
  %v615 = vsel %vm608, %v587, %v589
  %v616 = vsel %vm608, %v589, %v591
  %v617 = vsel %vm608, %v591, %v593
  %v618 = vsel %vm608, %v593, %v595
  %v619 = vsel %vm608, %v595, %v597
  %v620 = vsel %vm608, %v597, %v599
  %v621 = vsel %vm608, %v599, %v601
  %v622 = vsel %vm608, %v601, %v603
  %v623 = vsel %vm608, %v603, %v605
  %v624 = vsel %vm608, %v605, %v607
  %641 = vst [vmem:[#allocation2 + $0x380] sm:$0xff] %v609
  %642 = vst [vmem:[#allocation2 + $0x388] sm:$0xff] %v610
  %643 = vst [vmem:[#allocation2 + $0x390] sm:$0xff] %v611
  %644 = vst [vmem:[#allocation2 + $0x398] sm:$0xff] %v612
  %645 = vst [vmem:[#allocation2 + $0x3a0] sm:$0xff] %v613
  %646 = vst [vmem:[#allocation2 + $0x3a8] sm:$0xff] %v614
  %647 = vst [vmem:[#allocation2 + $0x3b0] sm:$0xff] %v615
  %648 = vst [vmem:[#allocation2 + $0x3b8] sm:$0xff] %v616
  %649 = vst [vmem:[#allocation2 + $0x3c0] sm:$0xff] %v617
  %650 = vst [vmem:[#allocation2 + $0x3c8] sm:$0xff] %v618
  %651 = vst [vmem:[#allocation2 + $0x3d0] sm:$0xff] %v619
  %652 = vst [vmem:[#allocation2 + $0x3d8] sm:$0xff] %v620
  %653 = vst [vmem:[#allocation2 + $0x3e0] sm:$0xff] %v621
  %654 = vst [vmem:[#allocation2 + $0x3e8] sm:$0xff] %v622
  %655 = vst [vmem:[#allocation2 + $0x3f0] sm:$0xff] %v623
  %656 = vst [vmem:[#allocation2 + $0x3f8] sm:$0xff] %v624
  %657 = vrot.lane.b32.xlu0 %v26, 120
  %v658 = vpop.permute.xlu0 %657
  %659 = vrot.lane.b32.xlu0 %v27, 120
  %v660 = vpop.permute.xlu0 %659
  %661 = vrot.lane.b32.xlu0 %v28, 120
  %v662 = vpop.permute.xlu0 %661
  %663 = vrot.lane.b32.xlu0 %v29, 120
  %v664 = vpop.permute.xlu0 %663
  %665 = vrot.lane.b32.xlu0 %v30, 120
  %v666 = vpop.permute.xlu0 %665
  %667 = vrot.lane.b32.xlu0 %v31, 120
  %v668 = vpop.permute.xlu0 %667
  %669 = vrot.lane.b32.xlu0 %v32, 120
  %v670 = vpop.permute.xlu0 %669
  %671 = vrot.lane.b32.xlu0 %v33, 120
  %v672 = vpop.permute.xlu0 %671
  %673 = vrot.lane.b32.xlu0 %v34, 120
  %v674 = vpop.permute.xlu0 %673
  %675 = vrot.lane.b32.xlu0 %v35, 120
  %v676 = vpop.permute.xlu0 %675
  %677 = vrot.lane.b32.xlu0 %v36, 120
  %v678 = vpop.permute.xlu0 %677
  %679 = vrot.lane.b32.xlu0 %v37, 120
  %v680 = vpop.permute.xlu0 %679
  %681 = vrot.lane.b32.xlu0 %v38, 120
  %v682 = vpop.permute.xlu0 %681
  %683 = vrot.lane.b32.xlu0 %v39, 120
  %v684 = vpop.permute.xlu0 %683
  %685 = vrot.lane.b32.xlu0 %v40, 120
  %v686 = vpop.permute.xlu0 %685
  %687 = vrot.lane.b32.xlu0 %v41, 120
  %v688 = vpop.permute.xlu0 %687
  %689 = vrot.lane.b32.xlu0 %v42, 120
  %v690 = vpop.permute.xlu0 %689
  %vm691 = vcmask 982016
  %v692 = vsel %vm691, %v658, %v660
  %v693 = vsel %vm691, %v660, %v662
  %v694 = vsel %vm691, %v662, %v664
  %v695 = vsel %vm691, %v664, %v666
  %v696 = vsel %vm691, %v666, %v668
  %v697 = vsel %vm691, %v668, %v670
  %v698 = vsel %vm691, %v670, %v672
  %v699 = vsel %vm691, %v672, %v674
  %v700 = vsel %vm691, %v674, %v676
  %v701 = vsel %vm691, %v676, %v678
  %v702 = vsel %vm691, %v678, %v680
  %v703 = vsel %vm691, %v680, %v682
  %v704 = vsel %vm691, %v682, %v684
  %v705 = vsel %vm691, %v684, %v686
  %v706 = vsel %vm691, %v686, %v688
  %v707 = vsel %vm691, %v688, %v690
  %724 = vst [vmem:[#allocation2 + $0x400] sm:$0xff] %v692
  %725 = vst [vmem:[#allocation2 + $0x408] sm:$0xff] %v693
  %726 = vst [vmem:[#allocation2 + $0x410] sm:$0xff] %v694
  %727 = vst [vmem:[#allocation2 + $0x418] sm:$0xff] %v695
  %728 = vst [vmem:[#allocation2 + $0x420] sm:$0xff] %v696
  %729 = vst [vmem:[#allocation2 + $0x428] sm:$0xff] %v697
  %730 = vst [vmem:[#allocation2 + $0x430] sm:$0xff] %v698
  %731 = vst [vmem:[#allocation2 + $0x438] sm:$0xff] %v699
  %732 = vst [vmem:[#allocation2 + $0x440] sm:$0xff] %v700
  %733 = vst [vmem:[#allocation2 + $0x448] sm:$0xff] %v701
  %734 = vst [vmem:[#allocation2 + $0x450] sm:$0xff] %v702
  %735 = vst [vmem:[#allocation2 + $0x458] sm:$0xff] %v703
  %736 = vst [vmem:[#allocation2 + $0x460] sm:$0xff] %v704
  %737 = vst [vmem:[#allocation2 + $0x468] sm:$0xff] %v705
  %738 = vst [vmem:[#allocation2 + $0x470] sm:$0xff] %v706
  %739 = vst [vmem:[#allocation2 + $0x478] sm:$0xff] %v707
  %740 = vrot.lane.b32.xlu0 %v26, 119
  %v741 = vpop.permute.xlu0 %740
  %742 = vrot.lane.b32.xlu0 %v27, 119
  %v743 = vpop.permute.xlu0 %742
  %744 = vrot.lane.b32.xlu0 %v28, 119
  %v745 = vpop.permute.xlu0 %744
  %746 = vrot.lane.b32.xlu0 %v29, 119
  %v747 = vpop.permute.xlu0 %746
  %748 = vrot.lane.b32.xlu0 %v30, 119
  %v749 = vpop.permute.xlu0 %748
  %750 = vrot.lane.b32.xlu0 %v31, 119
  %v751 = vpop.permute.xlu0 %750
  %752 = vrot.lane.b32.xlu0 %v32, 119
  %v753 = vpop.permute.xlu0 %752
  %754 = vrot.lane.b32.xlu0 %v33, 119
  %v755 = vpop.permute.xlu0 %754
  %756 = vrot.lane.b32.xlu0 %v34, 119
  %v757 = vpop.permute.xlu0 %756
  %758 = vrot.lane.b32.xlu0 %v35, 119
  %v759 = vpop.permute.xlu0 %758
  %760 = vrot.lane.b32.xlu0 %v36, 119
  %v761 = vpop.permute.xlu0 %760
  %762 = vrot.lane.b32.xlu0 %v37, 119
  %v763 = vpop.permute.xlu0 %762
  %764 = vrot.lane.b32.xlu0 %v38, 119
  %v765 = vpop.permute.xlu0 %764
  %766 = vrot.lane.b32.xlu0 %v39, 119
  %v767 = vpop.permute.xlu0 %766
  %768 = vrot.lane.b32.xlu0 %v40, 119
  %v769 = vpop.permute.xlu0 %768
  %770 = vrot.lane.b32.xlu0 %v41, 119
  %v771 = vpop.permute.xlu0 %770
  %772 = vrot.lane.b32.xlu0 %v42, 119
  %v773 = vpop.permute.xlu0 %772
  %vm774 = vcmask 973824
  %v775 = vsel %vm774, %v741, %v743
  %v776 = vsel %vm774, %v743, %v745
  %v777 = vsel %vm774, %v745, %v747
  %v778 = vsel %vm774, %v747, %v749
  %v779 = vsel %vm774, %v749, %v751
  %v780 = vsel %vm774, %v751, %v753
  %v781 = vsel %vm774, %v753, %v755
  %v782 = vsel %vm774, %v755, %v757
  %v783 = vsel %vm774, %v757, %v759
  %v784 = vsel %vm774, %v759, %v761
  %v785 = vsel %vm774, %v761, %v763
  %v786 = vsel %vm774, %v763, %v765
  %v787 = vsel %vm774, %v765, %v767
  %v788 = vsel %vm774, %v767, %v769
  %v789 = vsel %vm774, %v769, %v771
  %v790 = vsel %vm774, %v771, %v773
  %807 = vst [vmem:[#allocation2 + $0x480] sm:$0xff] %v775
  %808 = vst [vmem:[#allocation2 + $0x488] sm:$0xff] %v776
  %809 = vst [vmem:[#allocation2 + $0x490] sm:$0xff] %v777
  %810 = vst [vmem:[#allocation2 + $0x498] sm:$0xff] %v778
  %811 = vst [vmem:[#allocation2 + $0x4a0] sm:$0xff] %v779
  %812 = vst [vmem:[#allocation2 + $0x4a8] sm:$0xff] %v780
  %813 = vst [vmem:[#allocation2 + $0x4b0] sm:$0xff] %v781
  %814 = vst [vmem:[#allocation2 + $0x4b8] sm:$0xff] %v782
  %815 = vst [vmem:[#allocation2 + $0x4c0] sm:$0xff] %v783
  %816 = vst [vmem:[#allocation2 + $0x4c8] sm:$0xff] %v784
  %817 = vst [vmem:[#allocation2 + $0x4d0] sm:$0xff] %v785
  %818 = vst [vmem:[#allocation2 + $0x4d8] sm:$0xff] %v786
  %819 = vst [vmem:[#allocation2 + $0x4e0] sm:$0xff] %v787
  %820 = vst [vmem:[#allocation2 + $0x4e8] sm:$0xff] %v788
  %821 = vst [vmem:[#allocation2 + $0x4f0] sm:$0xff] %v789
  %822 = vst [vmem:[#allocation2 + $0x4f8] sm:$0xff] %v790
  %v823 = vld [vmem:[%s1] sm:$0xff]
  %v824 = vld [vmem:[%s1 + $0x8] sm:$0xff]
  %v825 = vld [vmem:[#allocation2] sm:$0xff]
  %v826 = vld [vmem:[#allocation2 + $0x8] sm:$0xff]
  %v827 = vld [vmem:[#allocation2 + $0x10] sm:$0xff]
  %v828 = vld [vmem:[#allocation2 + $0x18] sm:$0xff]
  %v829 = vld [vmem:[#allocation2 + $0x20] sm:$0xff]
  %v830 = vld [vmem:[#allocation2 + $0x28] sm:$0xff]
  %v831 = vld [vmem:[#allocation2 + $0x30] sm:$0xff]
  %v832 = vld [vmem:[#allocation2 + $0x38] sm:$0xff]
  %v833 = vld [vmem:[#allocation2 + $0x40] sm:$0xff]
  %v834 = vld [vmem:[#allocation2 + $0x48] sm:$0xff]
  %v835 = vld [vmem:[#allocation2 + $0x50] sm:$0xff]
  %v836 = vld [vmem:[#allocation2 + $0x58] sm:$0xff]
  %v837 = vld [vmem:[#allocation2 + $0x60] sm:$0xff]
  %v838 = vld [vmem:[#allocation2 + $0x68] sm:$0xff]
  %v839 = vld [vmem:[#allocation2 + $0x70] sm:$0xff]
  %v840 = vld [vmem:[#allocation2 + $0x78] sm:$0xff]
  %v841 = vld [vmem:[#allocation2 + $0x80] sm:$0xff]
  %v842 = vld [vmem:[#allocation2 + $0x88] sm:$0xff]
  %v843 = vld [vmem:[#allocation2 + $0x90] sm:$0xff]
  %v844 = vld [vmem:[#allocation2 + $0x98] sm:$0xff]
  %v845 = vld [vmem:[#allocation2 + $0xa0] sm:$0xff]
  %v846 = vld [vmem:[#allocation2 + $0xa8] sm:$0xff]
  %v847 = vld [vmem:[#allocation2 + $0xb0] sm:$0xff]
  %v848 = vld [vmem:[#allocation2 + $0xb8] sm:$0xff]
  %v849 = vld [vmem:[#allocation2 + $0xc0] sm:$0xff]
  %v850 = vld [vmem:[#allocation2 + $0xc8] sm:$0xff]
  %v851 = vld [vmem:[#allocation2 + $0xd0] sm:$0xff]
  %v852 = vld [vmem:[#allocation2 + $0xd8] sm:$0xff]
  %v853 = vld [vmem:[#allocation2 + $0xe0] sm:$0xff]
  %v854 = vld [vmem:[#allocation2 + $0xe8] sm:$0xff]
  %v855 = vld [vmem:[#allocation2 + $0xf0] sm:$0xff]
  %v856 = vld [vmem:[#allocation2 + $0xf8] sm:$0xff]
  %v857 = vld [vmem:[#allocation2 + $0x100] sm:$0xff]
  %v858 = vld [vmem:[#allocation2 + $0x108] sm:$0xff]
  %v859 = vld [vmem:[#allocation2 + $0x110] sm:$0xff]
  %v860 = vld [vmem:[#allocation2 + $0x118] sm:$0xff]
  %v861 = vld [vmem:[#allocation2 + $0x120] sm:$0xff]
  %v862 = vld [vmem:[#allocation2 + $0x128] sm:$0xff]
  %v863 = vld [vmem:[#allocation2 + $0x130] sm:$0xff]
  %v864 = vld [vmem:[#allocation2 + $0x138] sm:$0xff]
  %v865 = vld [vmem:[#allocation2 + $0x140] sm:$0xff]
  %v866 = vld [vmem:[#allocation2 + $0x148] sm:$0xff]
  %v867 = vld [vmem:[#allocation2 + $0x150] sm:$0xff]
  %v868 = vld [vmem:[#allocation2 + $0x158] sm:$0xff]
  %v869 = vld [vmem:[#allocation2 + $0x160] sm:$0xff]
  %v870 = vld [vmem:[#allocation2 + $0x168] sm:$0xff]
  %v871 = vld [vmem:[#allocation2 + $0x170] sm:$0xff]
  %v872 = vld [vmem:[#allocation2 + $0x178] sm:$0xff]
  %v873 = vld [vmem:[#allocation2 + $0x180] sm:$0xff]
  %v874 = vld [vmem:[#allocation2 + $0x188] sm:$0xff]
  %v875 = vld [vmem:[#allocation2 + $0x190] sm:$0xff]
  %v876 = vld [vmem:[#allocation2 + $0x198] sm:$0xff]
  %v877 = vld [vmem:[#allocation2 + $0x1a0] sm:$0xff]
  %v878 = vld [vmem:[#allocation2 + $0x1a8] sm:$0xff]
  %v879 = vld [vmem:[#allocation2 + $0x1b0] sm:$0xff]
  %v880 = vld [vmem:[#allocation2 + $0x1b8] sm:$0xff]
  %v881 = vld [vmem:[#allocation2 + $0x1c0] sm:$0xff]
  %v882 = vld [vmem:[#allocation2 + $0x1c8] sm:$0xff]
  %v883 = vld [vmem:[#allocation2 + $0x1d0] sm:$0xff]
  %v884 = vld [vmem:[#allocation2 + $0x1d8] sm:$0xff]
  %v885 = vld [vmem:[#allocation2 + $0x1e0] sm:$0xff]
  %v886 = vld [vmem:[#allocation2 + $0x1e8] sm:$0xff]
  %v887 = vld [vmem:[#allocation2 + $0x1f0] sm:$0xff]
  %v888 = vld [vmem:[#allocation2 + $0x1f8] sm:$0xff]
  %v889 = vld [vmem:[#allocation2 + $0x200] sm:$0xff]
  %v890 = vld [vmem:[#allocation2 + $0x208] sm:$0xff]
  %v891 = vld [vmem:[#allocation2 + $0x210] sm:$0xff]
  %v892 = vld [vmem:[#allocation2 + $0x218] sm:$0xff]
  %v893 = vld [vmem:[#allocation2 + $0x220] sm:$0xff]
  %v894 = vld [vmem:[#allocation2 + $0x228] sm:$0xff]
  %v895 = vld [vmem:[#allocation2 + $0x230] sm:$0xff]
  %v896 = vld [vmem:[#allocation2 + $0x238] sm:$0xff]
  %v897 = vld [vmem:[#allocation2 + $0x240] sm:$0xff]
  %v898 = vld [vmem:[#allocation2 + $0x248] sm:$0xff]
  %v899 = vld [vmem:[#allocation2 + $0x250] sm:$0xff]
  %v900 = vld [vmem:[#allocation2 + $0x258] sm:$0xff]
  %v901 = vld [vmem:[#allocation2 + $0x260] sm:$0xff]
  %v902 = vld [vmem:[#allocation2 + $0x268] sm:$0xff]
  %v903 = vld [vmem:[#allocation2 + $0x270] sm:$0xff]
  %v904 = vld [vmem:[#allocation2 + $0x278] sm:$0xff]
  %v905 = vld [vmem:[#allocation2 + $0x280] sm:$0xff]
  %v906 = vld [vmem:[#allocation2 + $0x288] sm:$0xff]
  %v907 = vld [vmem:[#allocation2 + $0x290] sm:$0xff]
  %v908 = vld [vmem:[#allocation2 + $0x298] sm:$0xff]
  %v909 = vld [vmem:[#allocation2 + $0x2a0] sm:$0xff]
  %v910 = vld [vmem:[#allocation2 + $0x2a8] sm:$0xff]
  %v911 = vld [vmem:[#allocation2 + $0x2b0] sm:$0xff]
  %v912 = vld [vmem:[#allocation2 + $0x2b8] sm:$0xff]
  %v913 = vld [vmem:[#allocation2 + $0x2c0] sm:$0xff]
  %v914 = vld [vmem:[#allocation2 + $0x2c8] sm:$0xff]
  %v915 = vld [vmem:[#allocation2 + $0x2d0] sm:$0xff]
  %v916 = vld [vmem:[#allocation2 + $0x2d8] sm:$0xff]
  %v917 = vld [vmem:[#allocation2 + $0x2e0] sm:$0xff]
  %v918 = vld [vmem:[#allocation2 + $0x2e8] sm:$0xff]
  %v919 = vld [vmem:[#allocation2 + $0x2f0] sm:$0xff]
  %v920 = vld [vmem:[#allocation2 + $0x2f8] sm:$0xff]
  %v921 = vld [vmem:[#allocation2 + $0x300] sm:$0xff]
  %v922 = vld [vmem:[#allocation2 + $0x308] sm:$0xff]
  %v923 = vld [vmem:[#allocation2 + $0x310] sm:$0xff]
  %v924 = vld [vmem:[#allocation2 + $0x318] sm:$0xff]
  %v925 = vld [vmem:[#allocation2 + $0x320] sm:$0xff]
  %v926 = vld [vmem:[#allocation2 + $0x328] sm:$0xff]
  %v927 = vld [vmem:[#allocation2 + $0x330] sm:$0xff]
  %v928 = vld [vmem:[#allocation2 + $0x338] sm:$0xff]
  %v929 = vld [vmem:[#allocation2 + $0x340] sm:$0xff]
  %v930 = vld [vmem:[#allocation2 + $0x348] sm:$0xff]
  %v931 = vld [vmem:[#allocation2 + $0x350] sm:$0xff]
  %v932 = vld [vmem:[#allocation2 + $0x358] sm:$0xff]
  %v933 = vld [vmem:[#allocation2 + $0x360] sm:$0xff]
  %v934 = vld [vmem:[#allocation2 + $0x368] sm:$0xff]
  %v935 = vld [vmem:[#allocation2 + $0x370] sm:$0xff]
  %v936 = vld [vmem:[#allocation2 + $0x378] sm:$0xff]
  %v937 = vld [vmem:[#allocation2 + $0x380] sm:$0xff]
  %v938 = vld [vmem:[#allocation2 + $0x388] sm:$0xff]
  %v939 = vld [vmem:[#allocation2 + $0x390] sm:$0xff]
  %v940 = vld [vmem:[#allocation2 + $0x398] sm:$0xff]
  %v941 = vld [vmem:[#allocation2 + $0x3a0] sm:$0xff]
  %v942 = vld [vmem:[#allocation2 + $0x3a8] sm:$0xff]
  %v943 = vld [vmem:[#allocation2 + $0x3b0] sm:$0xff]
  %v944 = vld [vmem:[#allocation2 + $0x3b8] sm:$0xff]
  %v945 = vld [vmem:[#allocation2 + $0x3c0] sm:$0xff]
  %v946 = vld [vmem:[#allocation2 + $0x3c8] sm:$0xff]
  %v947 = vld [vmem:[#allocation2 + $0x3d0] sm:$0xff]
  %v948 = vld [vmem:[#allocation2 + $0x3d8] sm:$0xff]
  %v949 = vld [vmem:[#allocation2 + $0x3e0] sm:$0xff]
  %v950 = vld [vmem:[#allocation2 + $0x3e8] sm:$0xff]
  %v951 = vld [vmem:[#allocation2 + $0x3f0] sm:$0xff]
  %v952 = vld [vmem:[#allocation2 + $0x3f8] sm:$0xff]
  %v953 = vld [vmem:[#allocation2 + $0x400] sm:$0xff]
  %v954 = vld [vmem:[#allocation2 + $0x408] sm:$0xff]
  %v955 = vld [vmem:[#allocation2 + $0x410] sm:$0xff]
  %v956 = vld [vmem:[#allocation2 + $0x418] sm:$0xff]
  %v957 = vld [vmem:[#allocation2 + $0x420] sm:$0xff]
  %v958 = vld [vmem:[#allocation2 + $0x428] sm:$0xff]
  %v959 = vld [vmem:[#allocation2 + $0x430] sm:$0xff]
  %v960 = vld [vmem:[#allocation2 + $0x438] sm:$0xff]
  %v961 = vld [vmem:[#allocation2 + $0x440] sm:$0xff]
  %v962 = vld [vmem:[#allocation2 + $0x448] sm:$0xff]
  %v963 = vld [vmem:[#allocation2 + $0x450] sm:$0xff]
  %v964 = vld [vmem:[#allocation2 + $0x458] sm:$0xff]
  %v965 = vld [vmem:[#allocation2 + $0x460] sm:$0xff]
  %v966 = vld [vmem:[#allocation2 + $0x468] sm:$0xff]
  %v967 = vld [vmem:[#allocation2 + $0x470] sm:$0xff]
  %v968 = vld [vmem:[#allocation2 + $0x478] sm:$0xff]
  %v969 = vld [vmem:[#allocation2 + $0x480] sm:$0xff]
  %v970 = vld [vmem:[#allocation2 + $0x488] sm:$0xff]
  %v971 = vld [vmem:[#allocation2 + $0x490] sm:$0xff]
  %v972 = vld [vmem:[#allocation2 + $0x498] sm:$0xff]
  %v973 = vld [vmem:[#allocation2 + $0x4a0] sm:$0xff]
  %v974 = vld [vmem:[#allocation2 + $0x4a8] sm:$0xff]
  %v975 = vld [vmem:[#allocation2 + $0x4b0] sm:$0xff]
  %v976 = vld [vmem:[#allocation2 + $0x4b8] sm:$0xff]
  %v977 = vld [vmem:[#allocation2 + $0x4c0] sm:$0xff]
  %v978 = vld [vmem:[#allocation2 + $0x4c8] sm:$0xff]
  %v979 = vld [vmem:[#allocation2 + $0x4d0] sm:$0xff]
  %v980 = vld [vmem:[#allocation2 + $0x4d8] sm:$0xff]
  %v981 = vld [vmem:[#allocation2 + $0x4e0] sm:$0xff]
  %v982 = vld [vmem:[#allocation2 + $0x4e8] sm:$0xff]
  %v983 = vld [vmem:[#allocation2 + $0x4f0] sm:$0xff]
  %v984 = vld [vmem:[#allocation2 + $0x4f8] sm:$0xff]
  %v985 = vld [vmem:[%s2] sm:$0xff]
  %v986 = vld [vmem:[%s2 + $0x8] sm:$0xff]
  %v987 = vld [vmem:[%s2 + $0x10] sm:$0xff]
  %v988 = vld [vmem:[%s2 + $0x18] sm:$0xff]
  %v989 = vld [vmem:[%s2 + $0x20] sm:$0xff]
  %v990 = vld [vmem:[%s2 + $0x28] sm:$0xff]
  %v991 = vld [vmem:[%s2 + $0x30] sm:$0xff]
  %v992 = vld [vmem:[%s2 + $0x38] sm:$0xff]
  %v993 = vld [vmem:[%s2 + $0x40] sm:$0xff]
  %v994 = vld [vmem:[%s2 + $0x48] sm:$0xff]
  %v995 = vld [vmem:[%s2 + $0x50] sm:$0xff]
  %v996 = vld [vmem:[%s2 + $0x58] sm:$0xff]
  %v997 = vld [vmem:[%s2 + $0x60] sm:$0xff]
  %v998 = vld [vmem:[%s2 + $0x68] sm:$0xff]
  %v999 = vld [vmem:[%s2 + $0x70] sm:$0xff]
  %v1000 = vld [vmem:[%s2 + $0x78] sm:$0xff]
  %v1001 = vld [vmem:[%s2 + $0x80] sm:$0xff]
  %v1002 = vld [vmem:[%s2 + $0x88] sm:$0xff]
  %v1003 = vld [vmem:[%s2 + $0x90] sm:$0xff]
  %v1004 = vld [vmem:[%s2 + $0x98] sm:$0xff]
  %v1005 = vld [vmem:[%s2 + $0xa0] sm:$0xff]
  %v1006 = vld [vmem:[%s2 + $0xa8] sm:$0xff]
  %v1007 = vld [vmem:[%s2 + $0xb0] sm:$0xff]
  %v1008 = vld [vmem:[%s2 + $0xb8] sm:$0xff]
  %v1009 = vld [vmem:[%s2 + $0xc0] sm:$0xff]
  %v1010 = vld [vmem:[%s2 + $0xc8] sm:$0xff]
  %v1011 = vld [vmem:[%s2 + $0xd0] sm:$0xff]
  %v1012 = vld [vmem:[%s2 + $0xd8] sm:$0xff]
  %v1013 = vld [vmem:[%s2 + $0xe0] sm:$0xff]
  %v1014 = vld [vmem:[%s2 + $0xe8] sm:$0xff]
  %v1015 = vld [vmem:[%s2 + $0xf0] sm:$0xff]
  %v1016 = vld [vmem:[%s2 + $0xf8] sm:$0xff]
  %vm1017 = vcmask 654336
  %v1019 = vsel %vm1017, %v823, 0
  %v1022 = vsel %vm1017, %v824, 0
  %1024 = vmatprep.subr.mxu0 0.0
  %1025 = vmatpush1.msra.mxu0 0.0
  %1026 = vmatprep.subr.mxu0 0.0
  %1027 = vmatpush1.msra.mxu0 0.0
  %1028 = vmatprep.subr.mxu0 0.0
  %1029 = vmatpush1.msra.mxu0 0.0
  %1030 = vmatprep.subr.mxu0 0.0
  %1031 = vmatpush1.msra.mxu0 0.0
  %1032 = vmatprep.subr.mxu0 0.0
  %1033 = vmatpush1.msra.mxu0 0.0
  %1034 = vmatprep.subr.mxu0 0.0
  %1035 = vmatpush1.msra.mxu0 0.0
  %1036 = vmatprep.subr.mxu0 %v970
  %1037 = vmatpush1.msra.mxu0 %v969
  %1038 = vmatprep.subr.mxu0 %v954
  %1039 = vmatpush1.msra.mxu0 %v953
  %1040 = vmatprep.subr.mxu0 %v938
  %1041 = vmatpush1.msra.mxu0 %v937
  %1042 = vmatprep.subr.mxu0 %v922
  %1043 = vmatpush1.msra.mxu0 %v921
  %1044 = vmatprep.subr.mxu0 %v906
  %1045 = vmatpush1.msra.mxu0 %v905
  %1046 = vmatprep.subr.mxu0 %v890
  %1047 = vmatpush1.msra.mxu0 %v889
  %1048 = vmatprep.subr.mxu0 %v874
  %1049 = vmatpush1.msra.mxu0 %v873
  %1050 = vmatprep.subr.mxu0 %v858
  %1051 = vmatpush1.msra.mxu0 %v857
  %1052 = vmatprep.subr.mxu0 %v842
  %1053 = vmatpush1.msra.mxu0 %v841
  %1054 = vmatprep.subr.mxu0 %v826
  %1055 = vmatpush1.msra.mxu0 %v825
  %1056 = vmatprep.subr.mxu0 0.0
  %1057 = vmatpush2.msra.mxu0 0.0
  %1058 = vmatprep.subr.mxu0 0.0
  %1059 = vmatpush2.msra.mxu0 0.0
  %1060 = vmatprep.subr.mxu0 0.0
  %1061 = vmatpush2.msra.mxu0 0.0
  %1062 = vmatprep.subr.mxu0 0.0
  %1063 = vmatpush2.msra.mxu0 0.0
  %1064 = vmatprep.subr.mxu0 0.0
  %1065 = vmatpush2.msra.mxu0 0.0
  %1066 = vmatprep.subr.mxu0 0.0
  %1067 = vmatpush2.msra.mxu0 0.0
  %1068 = vmatprep.subr.mxu0 0.0
  %1069 = vmatpush2.msra.mxu0 0.0
  %1070 = vmatprep.subr.mxu0 0.0
  %1071 = vmatpush2.msra.mxu0 0.0
  %1072 = vmatprep.subr.mxu0 0.0
  %1073 = vmatpush2.msra.mxu0 0.0
  %1074 = vmatprep.subr.mxu0 0.0
  %1075 = vmatpush2.msra.mxu0 0.0
  %1076 = vmatprep.subr.mxu0 0.0
  %1077 = vmatpush2.msra.mxu0 0.0
  %1078 = vmatprep.subr.mxu0 0.0
  %1079 = vmatpush2.msra.mxu0 0.0
  %1080 = vmatprep.subr.mxu0 0.0
  %1081 = vmatpush2.msra.mxu0 0.0
  %1082 = vmatprep.subr.mxu0 0.0
  %1083 = vmatpush2.msra.mxu0 0.0
  %1084 = vmatprep.subr.mxu0 0.0
  %1085 = vmatpush2.msra.mxu0 0.0
  %1086 = vmatprep.subr.mxu0 0.0
  %1087 = vmatpush2.msra.mxu0 0.0
  %1088 = vmatprep.mubr.f32.mxu0 0.0
  %1089 = vmatmul.mubr.f32.gmra.mxu0 %v1019
  %v1090 = vpop.f32.mrf.mxu0
  %v1091 = vadd.f32 %v985, %v1090
  %v1092 = vpop.f32.mrf.mxu0
  %v1093 = vadd.f32 %v986, %v1092
  %1094 = vmatprep.mubr.f32.mxu0 0.0
  %1095 = vmatmul.mubr.f32.gmra.mxu0 %v1022
  %v1096 = vpop.f32.mrf.mxu0
  %v1097 = vadd.f32 %v1001, %v1096
  %v1098 = vpop.f32.mrf.mxu0
  %v1099 = vadd.f32 %v1002, %v1098
  %1100 = vdwg.mxu0
  %1101 = vmatprep.subr.mxu0 0.0
  %1102 = vmatpush1.msra.mxu0 0.0
  %1103 = vmatprep.subr.mxu0 0.0
  %1104 = vmatpush1.msra.mxu0 0.0
  %1105 = vmatprep.subr.mxu0 0.0
  %1106 = vmatpush1.msra.mxu0 0.0
  %1107 = vmatprep.subr.mxu0 0.0
  %1108 = vmatpush1.msra.mxu0 0.0
  %1109 = vmatprep.subr.mxu0 0.0
  %1110 = vmatpush1.msra.mxu0 0.0
  %1111 = vmatprep.subr.mxu0 0.0
  %1112 = vmatpush1.msra.mxu0 0.0
  %1113 = vmatprep.subr.mxu0 %v972
  %1114 = vmatpush1.msra.mxu0 %v971
  %1115 = vmatprep.subr.mxu0 %v956
  %1116 = vmatpush1.msra.mxu0 %v955
  %1117 = vmatprep.subr.mxu0 %v940
  %1118 = vmatpush1.msra.mxu0 %v939
  %1119 = vmatprep.subr.mxu0 %v924
  %1120 = vmatpush1.msra.mxu0 %v923
  %1121 = vmatprep.subr.mxu0 %v908
  %1122 = vmatpush1.msra.mxu0 %v907
  %1123 = vmatprep.subr.mxu0 %v892
  %1124 = vmatpush1.msra.mxu0 %v891
  %1125 = vmatprep.subr.mxu0 %v876
  %1126 = vmatpush1.msra.mxu0 %v875
  %1127 = vmatprep.subr.mxu0 %v860
  %1128 = vmatpush1.msra.mxu0 %v859
  %1129 = vmatprep.subr.mxu0 %v844
  %1130 = vmatpush1.msra.mxu0 %v843
  %1131 = vmatprep.subr.mxu0 %v828
  %1132 = vmatpush1.msra.mxu0 %v827
  %1133 = vmatprep.subr.mxu0 0.0
  %1134 = vmatpush2.msra.mxu0 0.0
  %1135 = vmatprep.subr.mxu0 0.0
  %1136 = vmatpush2.msra.mxu0 0.0
  %1137 = vmatprep.subr.mxu0 0.0
  %1138 = vmatpush2.msra.mxu0 0.0
  %1139 = vmatprep.subr.mxu0 0.0
  %1140 = vmatpush2.msra.mxu0 0.0
  %1141 = vmatprep.subr.mxu0 0.0
  %1142 = vmatpush2.msra.mxu0 0.0
  %1143 = vmatprep.subr.mxu0 0.0
  %1144 = vmatpush2.msra.mxu0 0.0
  %1145 = vmatprep.subr.mxu0 0.0
  %1146 = vmatpush2.msra.mxu0 0.0
  %1147 = vmatprep.subr.mxu0 0.0
  %1148 = vmatpush2.msra.mxu0 0.0
  %1149 = vmatprep.subr.mxu0 0.0
  %1150 = vmatpush2.msra.mxu0 0.0
  %1151 = vmatprep.subr.mxu0 0.0
  %1152 = vmatpush2.msra.mxu0 0.0
  %1153 = vmatprep.subr.mxu0 0.0
  %1154 = vmatpush2.msra.mxu0 0.0
  %1155 = vmatprep.subr.mxu0 0.0
  %1156 = vmatpush2.msra.mxu0 0.0
  %1157 = vmatprep.subr.mxu0 0.0
  %1158 = vmatpush2.msra.mxu0 0.0
  %1159 = vmatprep.subr.mxu0 0.0
  %1160 = vmatpush2.msra.mxu0 0.0
  %1161 = vmatprep.subr.mxu0 0.0
  %1162 = vmatpush2.msra.mxu0 0.0
  %1163 = vmatprep.subr.mxu0 0.0
  %1164 = vmatpush2.msra.mxu0 0.0
  %1165 = vmatprep.mubr.f32.mxu0 0.0
  %1166 = vmatmul.mubr.f32.gmra.mxu0 %v1019
  %v1167 = vpop.f32.mrf.mxu0
  %v1168 = vadd.f32 %v987, %v1167
  %v1169 = vpop.f32.mrf.mxu0
  %v1170 = vadd.f32 %v988, %v1169
  %1171 = vmatprep.mubr.f32.mxu0 0.0
  %1172 = vmatmul.mubr.f32.gmra.mxu0 %v1022
  %v1173 = vpop.f32.mrf.mxu0
  %v1174 = vadd.f32 %v1003, %v1173
  %v1175 = vpop.f32.mrf.mxu0
  %v1176 = vadd.f32 %v1004, %v1175
  %1177 = vdwg.mxu0
  %1178 = vmatprep.subr.mxu0 0.0
  %1179 = vmatpush1.msra.mxu0 0.0
  %1180 = vmatprep.subr.mxu0 0.0
  %1181 = vmatpush1.msra.mxu0 0.0
  %1182 = vmatprep.subr.mxu0 0.0
  %1183 = vmatpush1.msra.mxu0 0.0
  %1184 = vmatprep.subr.mxu0 0.0
  %1185 = vmatpush1.msra.mxu0 0.0
  %1186 = vmatprep.subr.mxu0 0.0
  %1187 = vmatpush1.msra.mxu0 0.0
  %1188 = vmatprep.subr.mxu0 0.0
  %1189 = vmatpush1.msra.mxu0 0.0
  %1190 = vmatprep.subr.mxu0 %v974
  %1191 = vmatpush1.msra.mxu0 %v973
  %1192 = vmatprep.subr.mxu0 %v958
  %1193 = vmatpush1.msra.mxu0 %v957
  %1194 = vmatprep.subr.mxu0 %v942
  %1195 = vmatpush1.msra.mxu0 %v941
  %1196 = vmatprep.subr.mxu0 %v926
  %1197 = vmatpush1.msra.mxu0 %v925
  %1198 = vmatprep.subr.mxu0 %v910
  %1199 = vmatpush1.msra.mxu0 %v909
  %1200 = vmatprep.subr.mxu0 %v894
  %1201 = vmatpush1.msra.mxu0 %v893
  %1202 = vmatprep.subr.mxu0 %v878
  %1203 = vmatpush1.msra.mxu0 %v877
  %1204 = vmatprep.subr.mxu0 %v862
  %1205 = vmatpush1.msra.mxu0 %v861
  %1206 = vmatprep.subr.mxu0 %v846
  %1207 = vmatpush1.msra.mxu0 %v845
  %1208 = vmatprep.subr.mxu0 %v830
  %1209 = vmatpush1.msra.mxu0 %v829
  %1210 = vmatprep.subr.mxu0 0.0
  %1211 = vmatpush2.msra.mxu0 0.0
  %1212 = vmatprep.subr.mxu0 0.0
  %1213 = vmatpush2.msra.mxu0 0.0
  %1214 = vmatprep.subr.mxu0 0.0
  %1215 = vmatpush2.msra.mxu0 0.0
  %1216 = vmatprep.subr.mxu0 0.0
  %1217 = vmatpush2.msra.mxu0 0.0
  %1218 = vmatprep.subr.mxu0 0.0
  %1219 = vmatpush2.msra.mxu0 0.0
  %1220 = vmatprep.subr.mxu0 0.0
  %1221 = vmatpush2.msra.mxu0 0.0
  %1222 = vmatprep.subr.mxu0 0.0
  %1223 = vmatpush2.msra.mxu0 0.0
  %1224 = vmatprep.subr.mxu0 0.0
  %1225 = vmatpush2.msra.mxu0 0.0
  %1226 = vmatprep.subr.mxu0 0.0
  %1227 = vmatpush2.msra.mxu0 0.0
  %1228 = vmatprep.subr.mxu0 0.0
  %1229 = vmatpush2.msra.mxu0 0.0
  %1230 = vmatprep.subr.mxu0 0.0
  %1231 = vmatpush2.msra.mxu0 0.0
  %1232 = vmatprep.subr.mxu0 0.0
  %1233 = vmatpush2.msra.mxu0 0.0
  %1234 = vmatprep.subr.mxu0 0.0
  %1235 = vmatpush2.msra.mxu0 0.0
  %1236 = vmatprep.subr.mxu0 0.0
  %1237 = vmatpush2.msra.mxu0 0.0
  %1238 = vmatprep.subr.mxu0 0.0
  %1239 = vmatpush2.msra.mxu0 0.0
  %1240 = vmatprep.subr.mxu0 0.0
  %1241 = vmatpush2.msra.mxu0 0.0
  %1242 = vmatprep.mubr.f32.mxu0 0.0
  %1243 = vmatmul.mubr.f32.gmra.mxu0 %v1019
  %v1244 = vpop.f32.mrf.mxu0
  %v1245 = vadd.f32 %v989, %v1244
  %v1246 = vpop.f32.mrf.mxu0
  %v1247 = vadd.f32 %v990, %v1246
  %1248 = vmatprep.mubr.f32.mxu0 0.0
  %1249 = vmatmul.mubr.f32.gmra.mxu0 %v1022
  %v1250 = vpop.f32.mrf.mxu0
  %v1251 = vadd.f32 %v1005, %v1250
  %v1252 = vpop.f32.mrf.mxu0
  %v1253 = vadd.f32 %v1006, %v1252
  %1254 = vdwg.mxu0
  %1255 = vmatprep.subr.mxu0 0.0
  %1256 = vmatpush1.msra.mxu0 0.0
  %1257 = vmatprep.subr.mxu0 0.0
  %1258 = vmatpush1.msra.mxu0 0.0
  %1259 = vmatprep.subr.mxu0 0.0
  %1260 = vmatpush1.msra.mxu0 0.0
  %1261 = vmatprep.subr.mxu0 0.0
  %1262 = vmatpush1.msra.mxu0 0.0
  %1263 = vmatprep.subr.mxu0 0.0
  %1264 = vmatpush1.msra.mxu0 0.0
  %1265 = vmatprep.subr.mxu0 0.0
  %1266 = vmatpush1.msra.mxu0 0.0
  %1267 = vmatprep.subr.mxu0 %v976
  %1268 = vmatpush1.msra.mxu0 %v975
  %1269 = vmatprep.subr.mxu0 %v960
  %1270 = vmatpush1.msra.mxu0 %v959
  %1271 = vmatprep.subr.mxu0 %v944
  %1272 = vmatpush1.msra.mxu0 %v943
  %1273 = vmatprep.subr.mxu0 %v928
  %1274 = vmatpush1.msra.mxu0 %v927
  %1275 = vmatprep.subr.mxu0 %v912
  %1276 = vmatpush1.msra.mxu0 %v911
  %1277 = vmatprep.subr.mxu0 %v896
  %1278 = vmatpush1.msra.mxu0 %v895
  %1279 = vmatprep.subr.mxu0 %v880
  %1280 = vmatpush1.msra.mxu0 %v879
  %1281 = vmatprep.subr.mxu0 %v864
  %1282 = vmatpush1.msra.mxu0 %v863
  %1283 = vmatprep.subr.mxu0 %v848
  %1284 = vmatpush1.msra.mxu0 %v847
  %1285 = vmatprep.subr.mxu0 %v832
  %1286 = vmatpush1.msra.mxu0 %v831
  %1287 = vmatprep.subr.mxu0 0.0
  %1288 = vmatpush2.msra.mxu0 0.0
  %1289 = vmatprep.subr.mxu0 0.0
  %1290 = vmatpush2.msra.mxu0 0.0
  %1291 = vmatprep.subr.mxu0 0.0
  %1292 = vmatpush2.msra.mxu0 0.0
  %1293 = vmatprep.subr.mxu0 0.0
  %1294 = vmatpush2.msra.mxu0 0.0
  %1295 = vmatprep.subr.mxu0 0.0
  %1296 = vmatpush2.msra.mxu0 0.0
  %1297 = vmatprep.subr.mxu0 0.0
  %1298 = vmatpush2.msra.mxu0 0.0
  %1299 = vmatprep.subr.mxu0 0.0
  %1300 = vmatpush2.msra.mxu0 0.0
  %1301 = vmatprep.subr.mxu0 0.0
  %1302 = vmatpush2.msra.mxu0 0.0
  %1303 = vmatprep.subr.mxu0 0.0
  %1304 = vmatpush2.msra.mxu0 0.0
  %1305 = vmatprep.subr.mxu0 0.0
  %1306 = vmatpush2.msra.mxu0 0.0
  %1307 = vmatprep.subr.mxu0 0.0
  %1308 = vmatpush2.msra.mxu0 0.0
  %1309 = vmatprep.subr.mxu0 0.0
  %1310 = vmatpush2.msra.mxu0 0.0
  %1311 = vmatprep.subr.mxu0 0.0
  %1312 = vmatpush2.msra.mxu0 0.0
  %1313 = vmatprep.subr.mxu0 0.0
  %1314 = vmatpush2.msra.mxu0 0.0
  %1315 = vmatprep.subr.mxu0 0.0
  %1316 = vmatpush2.msra.mxu0 0.0
  %1317 = vmatprep.subr.mxu0 0.0
  %1318 = vmatpush2.msra.mxu0 0.0
  %1319 = vmatprep.mubr.f32.mxu0 0.0
  %1320 = vmatmul.mubr.f32.gmra.mxu0 %v1019
  %v1321 = vpop.f32.mrf.mxu0
  %v1322 = vadd.f32 %v991, %v1321
  %v1323 = vpop.f32.mrf.mxu0
  %v1324 = vadd.f32 %v992, %v1323
  %1325 = vmatprep.mubr.f32.mxu0 0.0
  %1326 = vmatmul.mubr.f32.gmra.mxu0 %v1022
  %v1327 = vpop.f32.mrf.mxu0
  %v1328 = vadd.f32 %v1007, %v1327
  %v1329 = vpop.f32.mrf.mxu0
  %v1330 = vadd.f32 %v1008, %v1329
  %1331 = vdwg.mxu0
  %1332 = vmatprep.subr.mxu0 0.0
  %1333 = vmatpush1.msra.mxu0 0.0
  %1334 = vmatprep.subr.mxu0 0.0
  %1335 = vmatpush1.msra.mxu0 0.0
  %1336 = vmatprep.subr.mxu0 0.0
  %1337 = vmatpush1.msra.mxu0 0.0
  %1338 = vmatprep.subr.mxu0 0.0
  %1339 = vmatpush1.msra.mxu0 0.0
  %1340 = vmatprep.subr.mxu0 0.0
  %1341 = vmatpush1.msra.mxu0 0.0
  %1342 = vmatprep.subr.mxu0 0.0
  %1343 = vmatpush1.msra.mxu0 0.0
  %1344 = vmatprep.subr.mxu0 %v978
  %1345 = vmatpush1.msra.mxu0 %v977
  %1346 = vmatprep.subr.mxu0 %v962
  %1347 = vmatpush1.msra.mxu0 %v961
  %1348 = vmatprep.subr.mxu0 %v946
  %1349 = vmatpush1.msra.mxu0 %v945
  %1350 = vmatprep.subr.mxu0 %v930
  %1351 = vmatpush1.msra.mxu0 %v929
  %1352 = vmatprep.subr.mxu0 %v914
  %1353 = vmatpush1.msra.mxu0 %v913
  %1354 = vmatprep.subr.mxu0 %v898
  %1355 = vmatpush1.msra.mxu0 %v897
  %1356 = vmatprep.subr.mxu0 %v882
  %1357 = vmatpush1.msra.mxu0 %v881
  %1358 = vmatprep.subr.mxu0 %v866
  %1359 = vmatpush1.msra.mxu0 %v865
  %1360 = vmatprep.subr.mxu0 %v850
  %1361 = vmatpush1.msra.mxu0 %v849
  %1362 = vmatprep.subr.mxu0 %v834
  %1363 = vmatpush1.msra.mxu0 %v833
  %1364 = vmatprep.subr.mxu0 0.0
  %1365 = vmatpush2.msra.mxu0 0.0
  %1366 = vmatprep.subr.mxu0 0.0
  %1367 = vmatpush2.msra.mxu0 0.0
  %1368 = vmatprep.subr.mxu0 0.0
  %1369 = vmatpush2.msra.mxu0 0.0
  %1370 = vmatprep.subr.mxu0 0.0
  %1371 = vmatpush2.msra.mxu0 0.0
  %1372 = vmatprep.subr.mxu0 0.0
  %1373 = vmatpush2.msra.mxu0 0.0
  %1374 = vmatprep.subr.mxu0 0.0
  %1375 = vmatpush2.msra.mxu0 0.0
  %1376 = vmatprep.subr.mxu0 0.0
  %1377 = vmatpush2.msra.mxu0 0.0
  %1378 = vmatprep.subr.mxu0 0.0
  %1379 = vmatpush2.msra.mxu0 0.0
  %1380 = vmatprep.subr.mxu0 0.0
  %1381 = vmatpush2.msra.mxu0 0.0
  %1382 = vmatprep.subr.mxu0 0.0
  %1383 = vmatpush2.msra.mxu0 0.0
  %1384 = vmatprep.subr.mxu0 0.0
  %1385 = vmatpush2.msra.mxu0 0.0
  %1386 = vmatprep.subr.mxu0 0.0
  %1387 = vmatpush2.msra.mxu0 0.0
  %1388 = vmatprep.subr.mxu0 0.0
  %1389 = vmatpush2.msra.mxu0 0.0
  %1390 = vmatprep.subr.mxu0 0.0
  %1391 = vmatpush2.msra.mxu0 0.0
  %1392 = vmatprep.subr.mxu0 0.0
  %1393 = vmatpush2.msra.mxu0 0.0
  %1394 = vmatprep.subr.mxu0 0.0
  %1395 = vmatpush2.msra.mxu0 0.0
  %1396 = vmatprep.mubr.f32.mxu0 0.0
  %1397 = vmatmul.mubr.f32.gmra.mxu0 %v1019
  %v1398 = vpop.f32.mrf.mxu0
  %v1399 = vadd.f32 %v993, %v1398
  %v1400 = vpop.f32.mrf.mxu0
  %v1401 = vadd.f32 %v994, %v1400
  %1402 = vmatprep.mubr.f32.mxu0 0.0
  %1403 = vmatmul.mubr.f32.gmra.mxu0 %v1022
  %v1404 = vpop.f32.mrf.mxu0
  %v1405 = vadd.f32 %v1009, %v1404
  %v1406 = vpop.f32.mrf.mxu0
  %v1407 = vadd.f32 %v1010, %v1406
  %1408 = vdwg.mxu0
  %1409 = vmatprep.subr.mxu0 0.0
  %1410 = vmatpush1.msra.mxu0 0.0
  %1411 = vmatprep.subr.mxu0 0.0
  %1412 = vmatpush1.msra.mxu0 0.0
  %1413 = vmatprep.subr.mxu0 0.0
  %1414 = vmatpush1.msra.mxu0 0.0
  %1415 = vmatprep.subr.mxu0 0.0
  %1416 = vmatpush1.msra.mxu0 0.0
  %1417 = vmatprep.subr.mxu0 0.0
  %1418 = vmatpush1.msra.mxu0 0.0
  %1419 = vmatprep.subr.mxu0 0.0
  %1420 = vmatpush1.msra.mxu0 0.0
  %1421 = vmatprep.subr.mxu0 %v980
  %1422 = vmatpush1.msra.mxu0 %v979
  %1423 = vmatprep.subr.mxu0 %v964
  %1424 = vmatpush1.msra.mxu0 %v963
  %1425 = vmatprep.subr.mxu0 %v948
  %1426 = vmatpush1.msra.mxu0 %v947
  %1427 = vmatprep.subr.mxu0 %v932
  %1428 = vmatpush1.msra.mxu0 %v931
  %1429 = vmatprep.subr.mxu0 %v916
  %1430 = vmatpush1.msra.mxu0 %v915
  %1431 = vmatprep.subr.mxu0 %v900
  %1432 = vmatpush1.msra.mxu0 %v899
  %1433 = vmatprep.subr.mxu0 %v884
  %1434 = vmatpush1.msra.mxu0 %v883
  %1435 = vmatprep.subr.mxu0 %v868
  %1436 = vmatpush1.msra.mxu0 %v867
  %1437 = vmatprep.subr.mxu0 %v852
  %1438 = vmatpush1.msra.mxu0 %v851
  %1439 = vmatprep.subr.mxu0 %v836
  %1440 = vmatpush1.msra.mxu0 %v835
  %1441 = vmatprep.subr.mxu0 0.0
  %1442 = vmatpush2.msra.mxu0 0.0
  %1443 = vmatprep.subr.mxu0 0.0
  %1444 = vmatpush2.msra.mxu0 0.0
  %1445 = vmatprep.subr.mxu0 0.0
  %1446 = vmatpush2.msra.mxu0 0.0
  %1447 = vmatprep.subr.mxu0 0.0
  %1448 = vmatpush2.msra.mxu0 0.0
  %1449 = vmatprep.subr.mxu0 0.0
  %1450 = vmatpush2.msra.mxu0 0.0
  %1451 = vmatprep.subr.mxu0 0.0
  %1452 = vmatpush2.msra.mxu0 0.0
  %1453 = vmatprep.subr.mxu0 0.0
  %1454 = vmatpush2.msra.mxu0 0.0
  %1455 = vmatprep.subr.mxu0 0.0
  %1456 = vmatpush2.msra.mxu0 0.0
  %1457 = vmatprep.subr.mxu0 0.0
  %1458 = vmatpush2.msra.mxu0 0.0
  %1459 = vmatprep.subr.mxu0 0.0
  %1460 = vmatpush2.msra.mxu0 0.0
  %1461 = vmatprep.subr.mxu0 0.0
  %1462 = vmatpush2.msra.mxu0 0.0
  %1463 = vmatprep.subr.mxu0 0.0
  %1464 = vmatpush2.msra.mxu0 0.0
  %1465 = vmatprep.subr.mxu0 0.0
  %1466 = vmatpush2.msra.mxu0 0.0
  %1467 = vmatprep.subr.mxu0 0.0
  %1468 = vmatpush2.msra.mxu0 0.0
  %1469 = vmatprep.subr.mxu0 0.0
  %1470 = vmatpush2.msra.mxu0 0.0
  %1471 = vmatprep.subr.mxu0 0.0
  %1472 = vmatpush2.msra.mxu0 0.0
  %1473 = vmatprep.mubr.f32.mxu0 0.0
  %1474 = vmatmul.mubr.f32.gmra.mxu0 %v1019
  %v1475 = vpop.f32.mrf.mxu0
  %v1476 = vadd.f32 %v995, %v1475
  %v1477 = vpop.f32.mrf.mxu0
  %v1478 = vadd.f32 %v996, %v1477
  %1479 = vmatprep.mubr.f32.mxu0 0.0
  %1480 = vmatmul.mubr.f32.gmra.mxu0 %v1022
  %v1481 = vpop.f32.mrf.mxu0
  %v1482 = vadd.f32 %v1011, %v1481
  %v1483 = vpop.f32.mrf.mxu0
  %v1484 = vadd.f32 %v1012, %v1483
  %1485 = vdwg.mxu0
  %1486 = vmatprep.subr.mxu0 0.0
  %1487 = vmatpush1.msra.mxu0 0.0
  %1488 = vmatprep.subr.mxu0 0.0
  %1489 = vmatpush1.msra.mxu0 0.0
  %1490 = vmatprep.subr.mxu0 0.0
  %1491 = vmatpush1.msra.mxu0 0.0
  %1492 = vmatprep.subr.mxu0 0.0
  %1493 = vmatpush1.msra.mxu0 0.0
  %1494 = vmatprep.subr.mxu0 0.0
  %1495 = vmatpush1.msra.mxu0 0.0
  %1496 = vmatprep.subr.mxu0 0.0
  %1497 = vmatpush1.msra.mxu0 0.0
  %1498 = vmatprep.subr.mxu0 %v982
  %1499 = vmatpush1.msra.mxu0 %v981
  %1500 = vmatprep.subr.mxu0 %v966
  %1501 = vmatpush1.msra.mxu0 %v965
  %1502 = vmatprep.subr.mxu0 %v950
  %1503 = vmatpush1.msra.mxu0 %v949
  %1504 = vmatprep.subr.mxu0 %v934
  %1505 = vmatpush1.msra.mxu0 %v933
  %1506 = vmatprep.subr.mxu0 %v918
  %1507 = vmatpush1.msra.mxu0 %v917
  %1508 = vmatprep.subr.mxu0 %v902
  %1509 = vmatpush1.msra.mxu0 %v901
  %1510 = vmatprep.subr.mxu0 %v886
  %1511 = vmatpush1.msra.mxu0 %v885
  %1512 = vmatprep.subr.mxu0 %v870
  %1513 = vmatpush1.msra.mxu0 %v869
  %1514 = vmatprep.subr.mxu0 %v854
  %1515 = vmatpush1.msra.mxu0 %v853
  %1516 = vmatprep.subr.mxu0 %v838
  %1517 = vmatpush1.msra.mxu0 %v837
  %1518 = vmatprep.subr.mxu0 0.0
  %1519 = vmatpush2.msra.mxu0 0.0
  %1520 = vmatprep.subr.mxu0 0.0
  %1521 = vmatpush2.msra.mxu0 0.0
  %1522 = vmatprep.subr.mxu0 0.0
  %1523 = vmatpush2.msra.mxu0 0.0
  %1524 = vmatprep.subr.mxu0 0.0
  %1525 = vmatpush2.msra.mxu0 0.0
  %1526 = vmatprep.subr.mxu0 0.0
  %1527 = vmatpush2.msra.mxu0 0.0
  %1528 = vmatprep.subr.mxu0 0.0
  %1529 = vmatpush2.msra.mxu0 0.0
  %1530 = vmatprep.subr.mxu0 0.0
  %1531 = vmatpush2.msra.mxu0 0.0
  %1532 = vmatprep.subr.mxu0 0.0
  %1533 = vmatpush2.msra.mxu0 0.0
  %1534 = vmatprep.subr.mxu0 0.0
  %1535 = vmatpush2.msra.mxu0 0.0
  %1536 = vmatprep.subr.mxu0 0.0
  %1537 = vmatpush2.msra.mxu0 0.0
  %1538 = vmatprep.subr.mxu0 0.0
  %1539 = vmatpush2.msra.mxu0 0.0
  %1540 = vmatprep.subr.mxu0 0.0
  %1541 = vmatpush2.msra.mxu0 0.0
  %1542 = vmatprep.subr.mxu0 0.0
  %1543 = vmatpush2.msra.mxu0 0.0
  %1544 = vmatprep.subr.mxu0 0.0
  %1545 = vmatpush2.msra.mxu0 0.0
  %1546 = vmatprep.subr.mxu0 0.0
  %1547 = vmatpush2.msra.mxu0 0.0
  %1548 = vmatprep.subr.mxu0 0.0
  %1549 = vmatpush2.msra.mxu0 0.0
  %1550 = vmatprep.mubr.f32.mxu0 0.0
  %1551 = vmatmul.mubr.f32.gmra.mxu0 %v1019
  %v1552 = vpop.f32.mrf.mxu0
  %v1553 = vadd.f32 %v997, %v1552
  %v1554 = vpop.f32.mrf.mxu0
  %v1555 = vadd.f32 %v998, %v1554
  %1556 = vmatprep.mubr.f32.mxu0 0.0
  %1557 = vmatmul.mubr.f32.gmra.mxu0 %v1022
  %v1558 = vpop.f32.mrf.mxu0
  %v1559 = vadd.f32 %v1013, %v1558
  %v1560 = vpop.f32.mrf.mxu0
  %v1561 = vadd.f32 %v1014, %v1560
  %1562 = vdwg.mxu0
  %1563 = vmatprep.subr.mxu0 0.0
  %1564 = vmatpush1.msra.mxu0 0.0
  %1565 = vmatprep.subr.mxu0 0.0
  %1566 = vmatpush1.msra.mxu0 0.0
  %1567 = vmatprep.subr.mxu0 0.0
  %1568 = vmatpush1.msra.mxu0 0.0
  %1569 = vmatprep.subr.mxu0 0.0
  %1570 = vmatpush1.msra.mxu0 0.0
  %1571 = vmatprep.subr.mxu0 0.0
  %1572 = vmatpush1.msra.mxu0 0.0
  %1573 = vmatprep.subr.mxu0 0.0
  %1574 = vmatpush1.msra.mxu0 0.0
  %1575 = vmatprep.subr.mxu0 %v984
  %1576 = vmatpush1.msra.mxu0 %v983
  %1577 = vmatprep.subr.mxu0 %v968
  %1578 = vmatpush1.msra.mxu0 %v967
  %1579 = vmatprep.subr.mxu0 %v952
  %1580 = vmatpush1.msra.mxu0 %v951
  %1581 = vmatprep.subr.mxu0 %v936
  %1582 = vmatpush1.msra.mxu0 %v935
  %1583 = vmatprep.subr.mxu0 %v920
  %1584 = vmatpush1.msra.mxu0 %v919
  %1585 = vmatprep.subr.mxu0 %v904
  %1586 = vmatpush1.msra.mxu0 %v903
  %1587 = vmatprep.subr.mxu0 %v888
  %1588 = vmatpush1.msra.mxu0 %v887
  %1589 = vmatprep.subr.mxu0 %v872
  %1590 = vmatpush1.msra.mxu0 %v871
  %1591 = vmatprep.subr.mxu0 %v856
  %1592 = vmatpush1.msra.mxu0 %v855
  %1593 = vmatprep.subr.mxu0 %v840
  %1594 = vmatpush1.msra.mxu0 %v839
  %1595 = vmatprep.subr.mxu0 0.0
  %1596 = vmatpush2.msra.mxu0 0.0
  %1597 = vmatprep.subr.mxu0 0.0
  %1598 = vmatpush2.msra.mxu0 0.0
  %1599 = vmatprep.subr.mxu0 0.0
  %1600 = vmatpush2.msra.mxu0 0.0
  %1601 = vmatprep.subr.mxu0 0.0
  %1602 = vmatpush2.msra.mxu0 0.0
  %1603 = vmatprep.subr.mxu0 0.0
  %1604 = vmatpush2.msra.mxu0 0.0
  %1605 = vmatprep.subr.mxu0 0.0
  %1606 = vmatpush2.msra.mxu0 0.0
  %1607 = vmatprep.subr.mxu0 0.0
  %1608 = vmatpush2.msra.mxu0 0.0
  %1609 = vmatprep.subr.mxu0 0.0
  %1610 = vmatpush2.msra.mxu0 0.0
  %1611 = vmatprep.subr.mxu0 0.0
  %1612 = vmatpush2.msra.mxu0 0.0
  %1613 = vmatprep.subr.mxu0 0.0
  %1614 = vmatpush2.msra.mxu0 0.0
  %1615 = vmatprep.subr.mxu0 0.0
  %1616 = vmatpush2.msra.mxu0 0.0
  %1617 = vmatprep.subr.mxu0 0.0
  %1618 = vmatpush2.msra.mxu0 0.0
  %1619 = vmatprep.subr.mxu0 0.0
  %1620 = vmatpush2.msra.mxu0 0.0
  %1621 = vmatprep.subr.mxu0 0.0
  %1622 = vmatpush2.msra.mxu0 0.0
  %1623 = vmatprep.subr.mxu0 0.0
  %1624 = vmatpush2.msra.mxu0 0.0
  %1625 = vmatprep.subr.mxu0 0.0
  %1626 = vmatpush2.msra.mxu0 0.0
  %1627 = vmatprep.mubr.f32.mxu0 0.0
  %1628 = vmatmul.mubr.f32.gmra.mxu0 %v1019
  %v1629 = vpop.f32.mrf.mxu0
  %v1630 = vadd.f32 %v999, %v1629
  %v1631 = vpop.f32.mrf.mxu0
  %v1632 = vadd.f32 %v1000, %v1631
  %1633 = vmatprep.mubr.f32.mxu0 0.0
  %1634 = vmatmul.mubr.f32.gmra.mxu0 %v1022
  %v1635 = vpop.f32.mrf.mxu0
  %v1636 = vadd.f32 %v1015, %v1635
  %v1637 = vpop.f32.mrf.mxu0
  %v1638 = vadd.f32 %v1016, %v1637
  %1639 = vdwg.mxu0
  %v1640 = vmul.f32 %v1091, %v1091
  %v1641 = vmul.f32 %v1093, %v1093
  %v1642 = vmul.f32 %v1168, %v1168
  %v1643 = vmul.f32 %v1170, %v1170
  %v1644 = vmul.f32 %v1245, %v1245
  %v1645 = vmul.f32 %v1247, %v1247
  %v1646 = vmul.f32 %v1322, %v1322
  %v1647 = vmul.f32 %v1324, %v1324
  %v1648 = vmul.f32 %v1399, %v1399
  %v1649 = vmul.f32 %v1401, %v1401
  %v1650 = vmul.f32 %v1476, %v1476
  %v1651 = vmul.f32 %v1478, %v1478
  %v1652 = vmul.f32 %v1553, %v1553
  %v1653 = vmul.f32 %v1555, %v1555
  %v1654 = vmul.f32 %v1630, %v1630
  %v1655 = vmul.f32 %v1632, %v1632
  %v1656 = vmul.f32 %v1097, %v1097
  %v1657 = vmul.f32 %v1099, %v1099
  %v1658 = vmul.f32 %v1174, %v1174
  %v1659 = vmul.f32 %v1176, %v1176
  %v1660 = vmul.f32 %v1251, %v1251
  %v1661 = vmul.f32 %v1253, %v1253
  %v1662 = vmul.f32 %v1328, %v1328
  %v1663 = vmul.f32 %v1330, %v1330
  %v1664 = vmul.f32 %v1405, %v1405
  %v1665 = vmul.f32 %v1407, %v1407
  %v1666 = vmul.f32 %v1482, %v1482
  %v1667 = vmul.f32 %v1484, %v1484
  %v1668 = vmul.f32 %v1559, %v1559
  %v1669 = vmul.f32 %v1561, %v1561
  %v1670 = vmul.f32 %v1636, %v1636
  %v1671 = vmul.f32 %v1638, %v1638
  %v1672 = vld [vmem:[%s3] sm:$0xff]
  %v1673 = vld [vmem:[%s3 + $0x8] sm:$0xff]
  %v1674 = vld [vmem:[%s3 + $0x10] sm:$0xff]
  %v1675 = vld [vmem:[%s3 + $0x18] sm:$0xff]
  %v1676 = vld [vmem:[%s3 + $0x20] sm:$0xff]
  %v1677 = vld [vmem:[%s3 + $0x28] sm:$0xff]
  %v1678 = vld [vmem:[%s3 + $0x30] sm:$0xff]
  %v1679 = vld [vmem:[%s3 + $0x38] sm:$0xff]
  %v1680 = vld [vmem:[%s3 + $0x40] sm:$0xff]
  %v1681 = vld [vmem:[%s3 + $0x48] sm:$0xff]
  %v1682 = vld [vmem:[%s3 + $0x50] sm:$0xff]
  %v1683 = vld [vmem:[%s3 + $0x58] sm:$0xff]
  %v1684 = vld [vmem:[%s3 + $0x60] sm:$0xff]
  %v1685 = vld [vmem:[%s3 + $0x68] sm:$0xff]
  %v1686 = vld [vmem:[%s3 + $0x70] sm:$0xff]
  %v1687 = vld [vmem:[%s3 + $0x78] sm:$0xff]
  %v1688 = vld [vmem:[%s3 + $0x80] sm:$0xff]
  %v1689 = vld [vmem:[%s3 + $0x88] sm:$0xff]
  %v1690 = vld [vmem:[%s3 + $0x90] sm:$0xff]
  %v1691 = vld [vmem:[%s3 + $0x98] sm:$0xff]
  %v1692 = vld [vmem:[%s3 + $0xa0] sm:$0xff]
  %v1693 = vld [vmem:[%s3 + $0xa8] sm:$0xff]
  %v1694 = vld [vmem:[%s3 + $0xb0] sm:$0xff]
  %v1695 = vld [vmem:[%s3 + $0xb8] sm:$0xff]
  %v1696 = vld [vmem:[%s3 + $0xc0] sm:$0xff]
  %v1697 = vld [vmem:[%s3 + $0xc8] sm:$0xff]
  %v1698 = vld [vmem:[%s3 + $0xd0] sm:$0xff]
  %v1699 = vld [vmem:[%s3 + $0xd8] sm:$0xff]
  %v1700 = vld [vmem:[%s3 + $0xe0] sm:$0xff]
  %v1701 = vld [vmem:[%s3 + $0xe8] sm:$0xff]
  %v1702 = vld [vmem:[%s3 + $0xf0] sm:$0xff]
  %v1703 = vld [vmem:[%s3 + $0xf8] sm:$0xff]
  %v1704 = vld [vmem:[%s3 + $0x100] sm:$0xff]
  %v1705 = vld [vmem:[%s3 + $0x108] sm:$0xff]
  %v1706 = vld [vmem:[%s3 + $0x110] sm:$0xff]
  %v1707 = vld [vmem:[%s3 + $0x118] sm:$0xff]
  %v1708 = vld [vmem:[%s3 + $0x120] sm:$0xff]
  %v1709 = vld [vmem:[%s3 + $0x128] sm:$0xff]
  %v1710 = vld [vmem:[%s3 + $0x130] sm:$0xff]
  %v1711 = vld [vmem:[%s3 + $0x138] sm:$0xff]
  %v1712 = vld [vmem:[%s3 + $0x140] sm:$0xff]
  %v1713 = vld [vmem:[%s3 + $0x148] sm:$0xff]
  %v1714 = vld [vmem:[%s3 + $0x150] sm:$0xff]
  %v1715 = vld [vmem:[%s3 + $0x158] sm:$0xff]
  %v1716 = vld [vmem:[%s3 + $0x160] sm:$0xff]
  %v1717 = vld [vmem:[%s3 + $0x168] sm:$0xff]
  %v1718 = vld [vmem:[%s3 + $0x170] sm:$0xff]
  %v1719 = vld [vmem:[%s3 + $0x178] sm:$0xff]
  %v1720 = vld [vmem:[%s3 + $0x180] sm:$0xff]
  %v1721 = vld [vmem:[%s3 + $0x188] sm:$0xff]
  %v1722 = vld [vmem:[%s3 + $0x190] sm:$0xff]
  %v1723 = vld [vmem:[%s3 + $0x198] sm:$0xff]
  %v1724 = vld [vmem:[%s3 + $0x1a0] sm:$0xff]
  %v1725 = vld [vmem:[%s3 + $0x1a8] sm:$0xff]
  %v1726 = vld [vmem:[%s3 + $0x1b0] sm:$0xff]
  %v1727 = vld [vmem:[%s3 + $0x1b8] sm:$0xff]
  %v1728 = vld [vmem:[%s3 + $0x1c0] sm:$0xff]
  %v1729 = vld [vmem:[%s3 + $0x1c8] sm:$0xff]
  %v1730 = vld [vmem:[%s3 + $0x1d0] sm:$0xff]
  %v1731 = vld [vmem:[%s3 + $0x1d8] sm:$0xff]
  %v1732 = vld [vmem:[%s3 + $0x1e0] sm:$0xff]
  %v1733 = vld [vmem:[%s3 + $0x1e8] sm:$0xff]
  %v1734 = vld [vmem:[%s3 + $0x1f0] sm:$0xff]
  %v1735 = vld [vmem:[%s3 + $0x1f8] sm:$0xff]
  %v1736 = vld [vmem:[%s3 + $0x200] sm:$0xff]
  %v1737 = vld [vmem:[%s3 + $0x208] sm:$0xff]
  %v1738 = vld [vmem:[%s3 + $0x210] sm:$0xff]
  %v1739 = vld [vmem:[%s3 + $0x218] sm:$0xff]
  %v1740 = vld [vmem:[%s3 + $0x220] sm:$0xff]
  %v1741 = vld [vmem:[%s3 + $0x228] sm:$0xff]
  %v1742 = vld [vmem:[%s3 + $0x230] sm:$0xff]
  %v1743 = vld [vmem:[%s3 + $0x238] sm:$0xff]
  %v1744 = vld [vmem:[%s3 + $0x240] sm:$0xff]
  %v1745 = vld [vmem:[%s3 + $0x248] sm:$0xff]
  %v1746 = vld [vmem:[%s3 + $0x250] sm:$0xff]
  %v1747 = vld [vmem:[%s3 + $0x258] sm:$0xff]
  %v1748 = vld [vmem:[%s3 + $0x260] sm:$0xff]
  %v1749 = vld [vmem:[%s3 + $0x268] sm:$0xff]
  %v1750 = vld [vmem:[%s3 + $0x270] sm:$0xff]
  %v1751 = vld [vmem:[%s3 + $0x278] sm:$0xff]
  %v1752 = vld [vmem:[%s3 + $0x280] sm:$0xff]
  %v1753 = vld [vmem:[%s3 + $0x288] sm:$0xff]
  %v1754 = vld [vmem:[%s3 + $0x290] sm:$0xff]
  %v1755 = vld [vmem:[%s3 + $0x298] sm:$0xff]
  %v1756 = vld [vmem:[%s3 + $0x2a0] sm:$0xff]
  %v1757 = vld [vmem:[%s3 + $0x2a8] sm:$0xff]
  %v1758 = vld [vmem:[%s3 + $0x2b0] sm:$0xff]
  %v1759 = vld [vmem:[%s3 + $0x2b8] sm:$0xff]
  %v1760 = vld [vmem:[%s3 + $0x2c0] sm:$0xff]
  %v1761 = vld [vmem:[%s3 + $0x2c8] sm:$0xff]
  %v1762 = vld [vmem:[%s3 + $0x2d0] sm:$0xff]
  %v1763 = vld [vmem:[%s3 + $0x2d8] sm:$0xff]
  %v1764 = vld [vmem:[%s3 + $0x2e0] sm:$0xff]
  %v1765 = vld [vmem:[%s3 + $0x2e8] sm:$0xff]
  %v1766 = vld [vmem:[%s3 + $0x2f0] sm:$0xff]
  %v1767 = vld [vmem:[%s3 + $0x2f8] sm:$0xff]
  %v1768 = vld [vmem:[%s3 + $0x300] sm:$0xff]
  %v1769 = vld [vmem:[%s3 + $0x308] sm:$0xff]
  %v1770 = vld [vmem:[%s3 + $0x310] sm:$0xff]
  %v1771 = vld [vmem:[%s3 + $0x318] sm:$0xff]
  %v1772 = vld [vmem:[%s3 + $0x320] sm:$0xff]
  %v1773 = vld [vmem:[%s3 + $0x328] sm:$0xff]
  %v1774 = vld [vmem:[%s3 + $0x330] sm:$0xff]
  %v1775 = vld [vmem:[%s3 + $0x338] sm:$0xff]
  %v1776 = vld [vmem:[%s3 + $0x340] sm:$0xff]
  %v1777 = vld [vmem:[%s3 + $0x348] sm:$0xff]
  %v1778 = vld [vmem:[%s3 + $0x350] sm:$0xff]
  %v1779 = vld [vmem:[%s3 + $0x358] sm:$0xff]
  %v1780 = vld [vmem:[%s3 + $0x360] sm:$0xff]
  %v1781 = vld [vmem:[%s3 + $0x368] sm:$0xff]
  %v1782 = vld [vmem:[%s3 + $0x370] sm:$0xff]
  %v1783 = vld [vmem:[%s3 + $0x378] sm:$0xff]
  %v1784 = vld [vmem:[%s3 + $0x380] sm:$0xff]
  %v1785 = vld [vmem:[%s3 + $0x388] sm:$0xff]
  %v1786 = vld [vmem:[%s3 + $0x390] sm:$0xff]
  %v1787 = vld [vmem:[%s3 + $0x398] sm:$0xff]
  %v1788 = vld [vmem:[%s3 + $0x3a0] sm:$0xff]
  %v1789 = vld [vmem:[%s3 + $0x3a8] sm:$0xff]
  %v1790 = vld [vmem:[%s3 + $0x3b0] sm:$0xff]
  %v1791 = vld [vmem:[%s3 + $0x3b8] sm:$0xff]
  %v1792 = vld [vmem:[%s3 + $0x3c0] sm:$0xff]
  %v1793 = vld [vmem:[%s3 + $0x3c8] sm:$0xff]
  %v1794 = vld [vmem:[%s3 + $0x3d0] sm:$0xff]
  %v1795 = vld [vmem:[%s3 + $0x3d8] sm:$0xff]
  %v1796 = vld [vmem:[%s3 + $0x3e0] sm:$0xff]
  %v1797 = vld [vmem:[%s3 + $0x3e8] sm:$0xff]
  %v1798 = vld [vmem:[%s3 + $0x3f0] sm:$0xff]
  %v1799 = vld [vmem:[%s3 + $0x3f8] sm:$0xff]
  %v1800 = vld [vmem:[%s3 + $0x400] sm:$0xff]
  %v1801 = vld [vmem:[%s3 + $0x408] sm:$0xff]
  %v1802 = vld [vmem:[%s3 + $0x410] sm:$0xff]
  %v1803 = vld [vmem:[%s3 + $0x418] sm:$0xff]
  %v1804 = vld [vmem:[%s3 + $0x420] sm:$0xff]
  %v1805 = vld [vmem:[%s3 + $0x428] sm:$0xff]
  %v1806 = vld [vmem:[%s3 + $0x430] sm:$0xff]
  %v1807 = vld [vmem:[%s3 + $0x438] sm:$0xff]
  %v1808 = vld [vmem:[%s3 + $0x440] sm:$0xff]
  %v1809 = vld [vmem:[%s3 + $0x448] sm:$0xff]
  %v1810 = vld [vmem:[%s3 + $0x450] sm:$0xff]
  %v1811 = vld [vmem:[%s3 + $0x458] sm:$0xff]
  %v1812 = vld [vmem:[%s3 + $0x460] sm:$0xff]
  %v1813 = vld [vmem:[%s3 + $0x468] sm:$0xff]
  %v1814 = vld [vmem:[%s3 + $0x470] sm:$0xff]
  %v1815 = vld [vmem:[%s3 + $0x478] sm:$0xff]
  %v1816 = vld [vmem:[%s3 + $0x480] sm:$0xff]
  %v1817 = vld [vmem:[%s3 + $0x488] sm:$0xff]
  %v1818 = vld [vmem:[%s3 + $0x490] sm:$0xff]
  %v1819 = vld [vmem:[%s3 + $0x498] sm:$0xff]
  %v1820 = vld [vmem:[%s3 + $0x4a0] sm:$0xff]
  %v1821 = vld [vmem:[%s3 + $0x4a8] sm:$0xff]
  %v1822 = vld [vmem:[%s3 + $0x4b0] sm:$0xff]
  %v1823 = vld [vmem:[%s3 + $0x4b8] sm:$0xff]
  %v1824 = vld [vmem:[%s3 + $0x4c0] sm:$0xff]
  %v1825 = vld [vmem:[%s3 + $0x4c8] sm:$0xff]
  %v1826 = vld [vmem:[%s3 + $0x4d0] sm:$0xff]
  %v1827 = vld [vmem:[%s3 + $0x4d8] sm:$0xff]
  %v1828 = vld [vmem:[%s3 + $0x4e0] sm:$0xff]
  %v1829 = vld [vmem:[%s3 + $0x4e8] sm:$0xff]
  %v1830 = vld [vmem:[%s3 + $0x4f0] sm:$0xff]
  %v1831 = vld [vmem:[%s3 + $0x4f8] sm:$0xff]
  %v1832 = vld [vmem:[%s3 + $0x500] sm:$0xff]
  %v1833 = vld [vmem:[%s3 + $0x508] sm:$0xff]
  %v1834 = vld [vmem:[%s3 + $0x510] sm:$0xff]
  %v1835 = vld [vmem:[%s3 + $0x518] sm:$0xff]
  %v1836 = vld [vmem:[%s3 + $0x520] sm:$0xff]
  %v1837 = vld [vmem:[%s3 + $0x528] sm:$0xff]
  %v1838 = vld [vmem:[%s3 + $0x530] sm:$0xff]
  %v1839 = vld [vmem:[%s3 + $0x538] sm:$0xff]
  %v1840 = vld [vmem:[%s3 + $0x540] sm:$0xff]
  %v1841 = vld [vmem:[%s3 + $0x548] sm:$0xff]
  %v1842 = vld [vmem:[%s3 + $0x550] sm:$0xff]
  %v1843 = vld [vmem:[%s3 + $0x558] sm:$0xff]
  %v1844 = vld [vmem:[%s3 + $0x560] sm:$0xff]
  %v1845 = vld [vmem:[%s3 + $0x568] sm:$0xff]
  %v1846 = vld [vmem:[%s3 + $0x570] sm:$0xff]
  %v1847 = vld [vmem:[%s3 + $0x578] sm:$0xff]
  %v1848 = vld [vmem:[%s3 + $0x580] sm:$0xff]
  %v1849 = vld [vmem:[%s3 + $0x588] sm:$0xff]
  %v1850 = vld [vmem:[%s3 + $0x590] sm:$0xff]
  %v1851 = vld [vmem:[%s3 + $0x598] sm:$0xff]
  %v1852 = vld [vmem:[%s3 + $0x5a0] sm:$0xff]
  %v1853 = vld [vmem:[%s3 + $0x5a8] sm:$0xff]
  %v1854 = vld [vmem:[%s3 + $0x5b0] sm:$0xff]
  %v1855 = vld [vmem:[%s3 + $0x5b8] sm:$0xff]
  %v1856 = vld [vmem:[%s3 + $0x5c0] sm:$0xff]
  %v1857 = vld [vmem:[%s3 + $0x5c8] sm:$0xff]
  %v1858 = vld [vmem:[%s3 + $0x5d0] sm:$0xff]
  %v1859 = vld [vmem:[%s3 + $0x5d8] sm:$0xff]
  %v1860 = vld [vmem:[%s3 + $0x5e0] sm:$0xff]
  %v1861 = vld [vmem:[%s3 + $0x5e8] sm:$0xff]
  %v1862 = vld [vmem:[%s3 + $0x5f0] sm:$0xff]
  %v1863 = vld [vmem:[%s3 + $0x5f8] sm:$0xff]
  %v1864 = vld [vmem:[%s3 + $0x600] sm:$0xff]
  %v1865 = vld [vmem:[%s3 + $0x608] sm:$0xff]
  %v1866 = vld [vmem:[%s3 + $0x610] sm:$0xff]
  %v1867 = vld [vmem:[%s3 + $0x618] sm:$0xff]
  %v1868 = vld [vmem:[%s3 + $0x620] sm:$0xff]
  %v1869 = vld [vmem:[%s3 + $0x628] sm:$0xff]
  %v1870 = vld [vmem:[%s3 + $0x630] sm:$0xff]
  %v1871 = vld [vmem:[%s3 + $0x638] sm:$0xff]
  %v1872 = vld [vmem:[%s3 + $0x640] sm:$0xff]
  %v1873 = vld [vmem:[%s3 + $0x648] sm:$0xff]
  %v1874 = vld [vmem:[%s3 + $0x650] sm:$0xff]
  %v1875 = vld [vmem:[%s3 + $0x658] sm:$0xff]
  %v1876 = vld [vmem:[%s3 + $0x660] sm:$0xff]
  %v1877 = vld [vmem:[%s3 + $0x668] sm:$0xff]
  %v1878 = vld [vmem:[%s3 + $0x670] sm:$0xff]
  %v1879 = vld [vmem:[%s3 + $0x678] sm:$0xff]
  %v1880 = vld [vmem:[%s3 + $0x680] sm:$0xff]
  %v1881 = vld [vmem:[%s3 + $0x688] sm:$0xff]
  %v1882 = vld [vmem:[%s3 + $0x690] sm:$0xff]
  %v1883 = vld [vmem:[%s3 + $0x698] sm:$0xff]
  %v1884 = vld [vmem:[%s3 + $0x6a0] sm:$0xff]
  %v1885 = vld [vmem:[%s3 + $0x6a8] sm:$0xff]
  %v1886 = vld [vmem:[%s3 + $0x6b0] sm:$0xff]
  %v1887 = vld [vmem:[%s3 + $0x6b8] sm:$0xff]
  %v1888 = vld [vmem:[%s3 + $0x6c0] sm:$0xff]
  %v1889 = vld [vmem:[%s3 + $0x6c8] sm:$0xff]
  %v1890 = vld [vmem:[%s3 + $0x6d0] sm:$0xff]
  %v1891 = vld [vmem:[%s3 + $0x6d8] sm:$0xff]
  %v1892 = vld [vmem:[%s3 + $0x6e0] sm:$0xff]
  %v1893 = vld [vmem:[%s3 + $0x6e8] sm:$0xff]
  %v1894 = vld [vmem:[%s3 + $0x6f0] sm:$0xff]
  %v1895 = vld [vmem:[%s3 + $0x6f8] sm:$0xff]
  %v1896 = vld [vmem:[%s3 + $0x700] sm:$0xff]
  %v1897 = vld [vmem:[%s3 + $0x708] sm:$0xff]
  %v1898 = vld [vmem:[%s3 + $0x710] sm:$0xff]
  %v1899 = vld [vmem:[%s3 + $0x718] sm:$0xff]
  %v1900 = vld [vmem:[%s3 + $0x720] sm:$0xff]
  %v1901 = vld [vmem:[%s3 + $0x728] sm:$0xff]
  %v1902 = vld [vmem:[%s3 + $0x730] sm:$0xff]
  %v1903 = vld [vmem:[%s3 + $0x738] sm:$0xff]
  %v1904 = vld [vmem:[%s3 + $0x740] sm:$0xff]
  %v1905 = vld [vmem:[%s3 + $0x748] sm:$0xff]
  %v1906 = vld [vmem:[%s3 + $0x750] sm:$0xff]
  %v1907 = vld [vmem:[%s3 + $0x758] sm:$0xff]
  %v1908 = vld [vmem:[%s3 + $0x760] sm:$0xff]
  %v1909 = vld [vmem:[%s3 + $0x768] sm:$0xff]
  %v1910 = vld [vmem:[%s3 + $0x770] sm:$0xff]
  %v1911 = vld [vmem:[%s3 + $0x778] sm:$0xff]
  %v1912 = vld [vmem:[%s3 + $0x780] sm:$0xff]
  %v1913 = vld [vmem:[%s3 + $0x788] sm:$0xff]
  %v1914 = vld [vmem:[%s3 + $0x790] sm:$0xff]
  %v1915 = vld [vmem:[%s3 + $0x798] sm:$0xff]
  %v1916 = vld [vmem:[%s3 + $0x7a0] sm:$0xff]
  %v1917 = vld [vmem:[%s3 + $0x7a8] sm:$0xff]
  %v1918 = vld [vmem:[%s3 + $0x7b0] sm:$0xff]
  %v1919 = vld [vmem:[%s3 + $0x7b8] sm:$0xff]
  %v1920 = vld [vmem:[%s3 + $0x7c0] sm:$0xff]
  %v1921 = vld [vmem:[%s3 + $0x7c8] sm:$0xff]
  %v1922 = vld [vmem:[%s3 + $0x7d0] sm:$0xff]
  %v1923 = vld [vmem:[%s3 + $0x7d8] sm:$0xff]
  %v1924 = vld [vmem:[%s3 + $0x7e0] sm:$0xff]
  %v1925 = vld [vmem:[%s3 + $0x7e8] sm:$0xff]
  %v1926 = vld [vmem:[%s3 + $0x7f0] sm:$0xff]
  %v1927 = vld [vmem:[%s3 + $0x7f8] sm:$0xff]
  %1928 = vmatprep.subr.mxu0 0.0
  %1929 = vmatpush1.msra.mxu0 %v1687
  %1930 = vmatprep.subr.mxu0 0.0
  %1931 = vmatpush1.msra.mxu0 %v1686
  %1932 = vmatprep.subr.mxu0 0.0
  %1933 = vmatpush1.msra.mxu0 %v1685
  %1934 = vmatprep.subr.mxu0 0.0
  %1935 = vmatpush1.msra.mxu0 %v1684
  %1936 = vmatprep.subr.mxu0 0.0
  %1937 = vmatpush1.msra.mxu0 %v1683
  %1938 = vmatprep.subr.mxu0 0.0
  %1939 = vmatpush1.msra.mxu0 %v1682
  %1940 = vmatprep.subr.mxu0 0.0
  %1941 = vmatpush1.msra.mxu0 %v1681
  %1942 = vmatprep.subr.mxu0 0.0
  %1943 = vmatpush1.msra.mxu0 %v1680
  %1944 = vmatprep.subr.mxu0 0.0
  %1945 = vmatpush1.msra.mxu0 %v1679
  %1946 = vmatprep.subr.mxu0 0.0
  %1947 = vmatpush1.msra.mxu0 %v1678
  %1948 = vmatprep.subr.mxu0 0.0
  %1949 = vmatpush1.msra.mxu0 %v1677
  %1950 = vmatprep.subr.mxu0 0.0
  %1951 = vmatpush1.msra.mxu0 %v1676
  %1952 = vmatprep.subr.mxu0 0.0
  %1953 = vmatpush1.msra.mxu0 %v1675
  %1954 = vmatprep.subr.mxu0 0.0
  %1955 = vmatpush1.msra.mxu0 %v1674
  %1956 = vmatprep.subr.mxu0 0.0
  %1957 = vmatpush1.msra.mxu0 %v1673
  %1958 = vmatprep.subr.mxu0 0.0
  %1959 = vmatpush1.msra.mxu0 %v1672
  %1960 = vmatprep.subr.mxu0 0.0
  %1961 = vmatpush2.msra.mxu0 %v1703
  %1962 = vmatprep.subr.mxu0 0.0
  %1963 = vmatpush2.msra.mxu0 %v1702
  %1964 = vmatprep.subr.mxu0 0.0
  %1965 = vmatpush2.msra.mxu0 %v1701
  %1966 = vmatprep.subr.mxu0 0.0
  %1967 = vmatpush2.msra.mxu0 %v1700
  %1968 = vmatprep.subr.mxu0 0.0
  %1969 = vmatpush2.msra.mxu0 %v1699
  %1970 = vmatprep.subr.mxu0 0.0
  %1971 = vmatpush2.msra.mxu0 %v1698
  %1972 = vmatprep.subr.mxu0 0.0
  %1973 = vmatpush2.msra.mxu0 %v1697
  %1974 = vmatprep.subr.mxu0 0.0
  %1975 = vmatpush2.msra.mxu0 %v1696
  %1976 = vmatprep.subr.mxu0 0.0
  %1977 = vmatpush2.msra.mxu0 %v1695
  %1978 = vmatprep.subr.mxu0 0.0
  %1979 = vmatpush2.msra.mxu0 %v1694
  %1980 = vmatprep.subr.mxu0 0.0
  %1981 = vmatpush2.msra.mxu0 %v1693
  %1982 = vmatprep.subr.mxu0 0.0
  %1983 = vmatpush2.msra.mxu0 %v1692
  %1984 = vmatprep.subr.mxu0 0.0
  %1985 = vmatpush2.msra.mxu0 %v1691
  %1986 = vmatprep.subr.mxu0 0.0
  %1987 = vmatpush2.msra.mxu0 %v1690
  %1988 = vmatprep.subr.mxu0 0.0
  %1989 = vmatpush2.msra.mxu0 %v1689
  %1990 = vmatprep.subr.mxu0 0.0
  %1991 = vmatpush2.msra.mxu0 %v1688
  %1992 = vmatprep.mubr.f32.mxu0 %v1641
  %1993 = vmatmul.mubr.f32.gmra.mxu0 %v1640
  %v1994 = vpop.f32.mrf.mxu0
  %v1995 = vadd.f32 5e-05, %v1994
  %v1996 = vpop.f32.mrf.mxu0
  %1997 = vmatprep.mubr.f32.mxu0 %v1657
  %1998 = vmatmul.mubr.f32.gmra.mxu0 %v1656
  %v1999 = vpop.f32.mrf.mxu0
  %v2000 = vadd.f32 5e-05, %v1999
  %v2001 = vpop.f32.mrf.mxu0
  %2002 = vdwg.mxu0
  %2003 = vmatprep.subr.mxu0 0.0
  %2004 = vmatpush1.msra.mxu0 %v1719
  %2005 = vmatprep.subr.mxu0 0.0
  %2006 = vmatpush1.msra.mxu0 %v1718
  %2007 = vmatprep.subr.mxu0 0.0
  %2008 = vmatpush1.msra.mxu0 %v1717
  %2009 = vmatprep.subr.mxu0 0.0
  %2010 = vmatpush1.msra.mxu0 %v1716
  %2011 = vmatprep.subr.mxu0 0.0
  %2012 = vmatpush1.msra.mxu0 %v1715
  %2013 = vmatprep.subr.mxu0 0.0
  %2014 = vmatpush1.msra.mxu0 %v1714
  %2015 = vmatprep.subr.mxu0 0.0
  %2016 = vmatpush1.msra.mxu0 %v1713
  %2017 = vmatprep.subr.mxu0 0.0
  %2018 = vmatpush1.msra.mxu0 %v1712
  %2019 = vmatprep.subr.mxu0 0.0
  %2020 = vmatpush1.msra.mxu0 %v1711
  %2021 = vmatprep.subr.mxu0 0.0
  %2022 = vmatpush1.msra.mxu0 %v1710
  %2023 = vmatprep.subr.mxu0 0.0
  %2024 = vmatpush1.msra.mxu0 %v1709
  %2025 = vmatprep.subr.mxu0 0.0
  %2026 = vmatpush1.msra.mxu0 %v1708
  %2027 = vmatprep.subr.mxu0 0.0
  %2028 = vmatpush1.msra.mxu0 %v1707
  %2029 = vmatprep.subr.mxu0 0.0
  %2030 = vmatpush1.msra.mxu0 %v1706
  %2031 = vmatprep.subr.mxu0 0.0
  %2032 = vmatpush1.msra.mxu0 %v1705
  %2033 = vmatprep.subr.mxu0 0.0
  %2034 = vmatpush1.msra.mxu0 %v1704
  %2035 = vmatprep.subr.mxu0 0.0
  %2036 = vmatpush2.msra.mxu0 %v1735
  %2037 = vmatprep.subr.mxu0 0.0
  %2038 = vmatpush2.msra.mxu0 %v1734
  %2039 = vmatprep.subr.mxu0 0.0
  %2040 = vmatpush2.msra.mxu0 %v1733
  %2041 = vmatprep.subr.mxu0 0.0
  %2042 = vmatpush2.msra.mxu0 %v1732
  %2043 = vmatprep.subr.mxu0 0.0
  %2044 = vmatpush2.msra.mxu0 %v1731
  %2045 = vmatprep.subr.mxu0 0.0
  %2046 = vmatpush2.msra.mxu0 %v1730
  %2047 = vmatprep.subr.mxu0 0.0
  %2048 = vmatpush2.msra.mxu0 %v1729
  %2049 = vmatprep.subr.mxu0 0.0
  %2050 = vmatpush2.msra.mxu0 %v1728
  %2051 = vmatprep.subr.mxu0 0.0
  %2052 = vmatpush2.msra.mxu0 %v1727
  %2053 = vmatprep.subr.mxu0 0.0
  %2054 = vmatpush2.msra.mxu0 %v1726
  %2055 = vmatprep.subr.mxu0 0.0
  %2056 = vmatpush2.msra.mxu0 %v1725
  %2057 = vmatprep.subr.mxu0 0.0
  %2058 = vmatpush2.msra.mxu0 %v1724
  %2059 = vmatprep.subr.mxu0 0.0
  %2060 = vmatpush2.msra.mxu0 %v1723
  %2061 = vmatprep.subr.mxu0 0.0
  %2062 = vmatpush2.msra.mxu0 %v1722
  %2063 = vmatprep.subr.mxu0 0.0
  %2064 = vmatpush2.msra.mxu0 %v1721
  %2065 = vmatprep.subr.mxu0 0.0
  %2066 = vmatpush2.msra.mxu0 %v1720
  %2067 = vmatprep.mubr.f32.mxu0 %v1643
  %2068 = vmatmul.mubr.f32.gmra.mxu0 %v1642
  %v2069 = vpop.f32.mrf.mxu0
  %v2070 = vadd.f32 %v1995, %v2069
  %v2071 = vpop.f32.mrf.mxu0
  %2072 = vmatprep.mubr.f32.mxu0 %v1659
  %2073 = vmatmul.mubr.f32.gmra.mxu0 %v1658
  %v2074 = vpop.f32.mrf.mxu0
  %v2075 = vadd.f32 %v2000, %v2074
  %v2076 = vpop.f32.mrf.mxu0
  %2077 = vdwg.mxu0
  %2078 = vmatprep.subr.mxu0 0.0
  %2079 = vmatpush1.msra.mxu0 %v1751
  %2080 = vmatprep.subr.mxu0 0.0
  %2081 = vmatpush1.msra.mxu0 %v1750
  %2082 = vmatprep.subr.mxu0 0.0
  %2083 = vmatpush1.msra.mxu0 %v1749
  %2084 = vmatprep.subr.mxu0 0.0
  %2085 = vmatpush1.msra.mxu0 %v1748
  %2086 = vmatprep.subr.mxu0 0.0
  %2087 = vmatpush1.msra.mxu0 %v1747
  %2088 = vmatprep.subr.mxu0 0.0
  %2089 = vmatpush1.msra.mxu0 %v1746
  %2090 = vmatprep.subr.mxu0 0.0
  %2091 = vmatpush1.msra.mxu0 %v1745
  %2092 = vmatprep.subr.mxu0 0.0
  %2093 = vmatpush1.msra.mxu0 %v1744
  %2094 = vmatprep.subr.mxu0 0.0
  %2095 = vmatpush1.msra.mxu0 %v1743
  %2096 = vmatprep.subr.mxu0 0.0
  %2097 = vmatpush1.msra.mxu0 %v1742
  %2098 = vmatprep.subr.mxu0 0.0
  %2099 = vmatpush1.msra.mxu0 %v1741
  %2100 = vmatprep.subr.mxu0 0.0
  %2101 = vmatpush1.msra.mxu0 %v1740
  %2102 = vmatprep.subr.mxu0 0.0
  %2103 = vmatpush1.msra.mxu0 %v1739
  %2104 = vmatprep.subr.mxu0 0.0
  %2105 = vmatpush1.msra.mxu0 %v1738
  %2106 = vmatprep.subr.mxu0 0.0
  %2107 = vmatpush1.msra.mxu0 %v1737
  %2108 = vmatprep.subr.mxu0 0.0
  %2109 = vmatpush1.msra.mxu0 %v1736
  %2110 = vmatprep.subr.mxu0 0.0
  %2111 = vmatpush2.msra.mxu0 %v1767
  %2112 = vmatprep.subr.mxu0 0.0
  %2113 = vmatpush2.msra.mxu0 %v1766
  %2114 = vmatprep.subr.mxu0 0.0
  %2115 = vmatpush2.msra.mxu0 %v1765
  %2116 = vmatprep.subr.mxu0 0.0
  %2117 = vmatpush2.msra.mxu0 %v1764
  %2118 = vmatprep.subr.mxu0 0.0
  %2119 = vmatpush2.msra.mxu0 %v1763
  %2120 = vmatprep.subr.mxu0 0.0
  %2121 = vmatpush2.msra.mxu0 %v1762
  %2122 = vmatprep.subr.mxu0 0.0
  %2123 = vmatpush2.msra.mxu0 %v1761
  %2124 = vmatprep.subr.mxu0 0.0
  %2125 = vmatpush2.msra.mxu0 %v1760
  %2126 = vmatprep.subr.mxu0 0.0
  %2127 = vmatpush2.msra.mxu0 %v1759
  %2128 = vmatprep.subr.mxu0 0.0
  %2129 = vmatpush2.msra.mxu0 %v1758
  %2130 = vmatprep.subr.mxu0 0.0
  %2131 = vmatpush2.msra.mxu0 %v1757
  %2132 = vmatprep.subr.mxu0 0.0
  %2133 = vmatpush2.msra.mxu0 %v1756
  %2134 = vmatprep.subr.mxu0 0.0
  %2135 = vmatpush2.msra.mxu0 %v1755
  %2136 = vmatprep.subr.mxu0 0.0
  %2137 = vmatpush2.msra.mxu0 %v1754
  %2138 = vmatprep.subr.mxu0 0.0
  %2139 = vmatpush2.msra.mxu0 %v1753
  %2140 = vmatprep.subr.mxu0 0.0
  %2141 = vmatpush2.msra.mxu0 %v1752
  %2142 = vmatprep.mubr.f32.mxu0 %v1645
  %2143 = vmatmul.mubr.f32.gmra.mxu0 %v1644
  %v2144 = vpop.f32.mrf.mxu0
  %v2145 = vadd.f32 %v2070, %v2144
  %v2146 = vpop.f32.mrf.mxu0
  %2147 = vmatprep.mubr.f32.mxu0 %v1661
  %2148 = vmatmul.mubr.f32.gmra.mxu0 %v1660
  %v2149 = vpop.f32.mrf.mxu0
  %v2150 = vadd.f32 %v2075, %v2149
  %v2151 = vpop.f32.mrf.mxu0
  %2152 = vdwg.mxu0
  %2153 = vmatprep.subr.mxu0 0.0
  %2154 = vmatpush1.msra.mxu0 %v1783
  %2155 = vmatprep.subr.mxu0 0.0
  %2156 = vmatpush1.msra.mxu0 %v1782
  %2157 = vmatprep.subr.mxu0 0.0
  %2158 = vmatpush1.msra.mxu0 %v1781
  %2159 = vmatprep.subr.mxu0 0.0
  %2160 = vmatpush1.msra.mxu0 %v1780
  %2161 = vmatprep.subr.mxu0 0.0
  %2162 = vmatpush1.msra.mxu0 %v1779
  %2163 = vmatprep.subr.mxu0 0.0
  %2164 = vmatpush1.msra.mxu0 %v1778
  %2165 = vmatprep.subr.mxu0 0.0
  %2166 = vmatpush1.msra.mxu0 %v1777
  %2167 = vmatprep.subr.mxu0 0.0
  %2168 = vmatpush1.msra.mxu0 %v1776
  %2169 = vmatprep.subr.mxu0 0.0
  %2170 = vmatpush1.msra.mxu0 %v1775
  %2171 = vmatprep.subr.mxu0 0.0
  %2172 = vmatpush1.msra.mxu0 %v1774
  %2173 = vmatprep.subr.mxu0 0.0
  %2174 = vmatpush1.msra.mxu0 %v1773
  %2175 = vmatprep.subr.mxu0 0.0
  %2176 = vmatpush1.msra.mxu0 %v1772
  %2177 = vmatprep.subr.mxu0 0.0
  %2178 = vmatpush1.msra.mxu0 %v1771
  %2179 = vmatprep.subr.mxu0 0.0
  %2180 = vmatpush1.msra.mxu0 %v1770
  %2181 = vmatprep.subr.mxu0 0.0
  %2182 = vmatpush1.msra.mxu0 %v1769
  %2183 = vmatprep.subr.mxu0 0.0
  %2184 = vmatpush1.msra.mxu0 %v1768
  %2185 = vmatprep.subr.mxu0 0.0
  %2186 = vmatpush2.msra.mxu0 %v1799
  %2187 = vmatprep.subr.mxu0 0.0
  %2188 = vmatpush2.msra.mxu0 %v1798
  %2189 = vmatprep.subr.mxu0 0.0
  %2190 = vmatpush2.msra.mxu0 %v1797
  %2191 = vmatprep.subr.mxu0 0.0
  %2192 = vmatpush2.msra.mxu0 %v1796
  %2193 = vmatprep.subr.mxu0 0.0
  %2194 = vmatpush2.msra.mxu0 %v1795
  %2195 = vmatprep.subr.mxu0 0.0
  %2196 = vmatpush2.msra.mxu0 %v1794
  %2197 = vmatprep.subr.mxu0 0.0
  %2198 = vmatpush2.msra.mxu0 %v1793
  %2199 = vmatprep.subr.mxu0 0.0
  %2200 = vmatpush2.msra.mxu0 %v1792
  %2201 = vmatprep.subr.mxu0 0.0
  %2202 = vmatpush2.msra.mxu0 %v1791
  %2203 = vmatprep.subr.mxu0 0.0
  %2204 = vmatpush2.msra.mxu0 %v1790
  %2205 = vmatprep.subr.mxu0 0.0
  %2206 = vmatpush2.msra.mxu0 %v1789
  %2207 = vmatprep.subr.mxu0 0.0
  %2208 = vmatpush2.msra.mxu0 %v1788
  %2209 = vmatprep.subr.mxu0 0.0
  %2210 = vmatpush2.msra.mxu0 %v1787
  %2211 = vmatprep.subr.mxu0 0.0
  %2212 = vmatpush2.msra.mxu0 %v1786
  %2213 = vmatprep.subr.mxu0 0.0
  %2214 = vmatpush2.msra.mxu0 %v1785
  %2215 = vmatprep.subr.mxu0 0.0
  %2216 = vmatpush2.msra.mxu0 %v1784
  %2217 = vmatprep.mubr.f32.mxu0 %v1647
  %2218 = vmatmul.mubr.f32.gmra.mxu0 %v1646
  %v2219 = vpop.f32.mrf.mxu0
  %v2220 = vadd.f32 %v2145, %v2219
  %v2221 = vpop.f32.mrf.mxu0
  %2222 = vmatprep.mubr.f32.mxu0 %v1663
  %2223 = vmatmul.mubr.f32.gmra.mxu0 %v1662
  %v2224 = vpop.f32.mrf.mxu0
  %v2225 = vadd.f32 %v2150, %v2224
  %v2226 = vpop.f32.mrf.mxu0
  %2227 = vdwg.mxu0
  %2228 = vmatprep.subr.mxu0 0.0
  %2229 = vmatpush1.msra.mxu0 %v1815
  %2230 = vmatprep.subr.mxu0 0.0
  %2231 = vmatpush1.msra.mxu0 %v1814
  %2232 = vmatprep.subr.mxu0 0.0
  %2233 = vmatpush1.msra.mxu0 %v1813
  %2234 = vmatprep.subr.mxu0 0.0
  %2235 = vmatpush1.msra.mxu0 %v1812
  %2236 = vmatprep.subr.mxu0 0.0
  %2237 = vmatpush1.msra.mxu0 %v1811
  %2238 = vmatprep.subr.mxu0 0.0
  %2239 = vmatpush1.msra.mxu0 %v1810
  %2240 = vmatprep.subr.mxu0 0.0
  %2241 = vmatpush1.msra.mxu0 %v1809
  %2242 = vmatprep.subr.mxu0 0.0
  %2243 = vmatpush1.msra.mxu0 %v1808
  %2244 = vmatprep.subr.mxu0 0.0
  %2245 = vmatpush1.msra.mxu0 %v1807
  %2246 = vmatprep.subr.mxu0 0.0
  %2247 = vmatpush1.msra.mxu0 %v1806
  %2248 = vmatprep.subr.mxu0 0.0
  %2249 = vmatpush1.msra.mxu0 %v1805
  %2250 = vmatprep.subr.mxu0 0.0
  %2251 = vmatpush1.msra.mxu0 %v1804
  %2252 = vmatprep.subr.mxu0 0.0
  %2253 = vmatpush1.msra.mxu0 %v1803
  %2254 = vmatprep.subr.mxu0 0.0
  %2255 = vmatpush1.msra.mxu0 %v1802
  %2256 = vmatprep.subr.mxu0 0.0
  %2257 = vmatpush1.msra.mxu0 %v1801
  %2258 = vmatprep.subr.mxu0 0.0
  %2259 = vmatpush1.msra.mxu0 %v1800
  %2260 = vmatprep.subr.mxu0 0.0
  %2261 = vmatpush2.msra.mxu0 %v1831
  %2262 = vmatprep.subr.mxu0 0.0
  %2263 = vmatpush2.msra.mxu0 %v1830
  %2264 = vmatprep.subr.mxu0 0.0
  %2265 = vmatpush2.msra.mxu0 %v1829
  %2266 = vmatprep.subr.mxu0 0.0
  %2267 = vmatpush2.msra.mxu0 %v1828
  %2268 = vmatprep.subr.mxu0 0.0
  %2269 = vmatpush2.msra.mxu0 %v1827
  %2270 = vmatprep.subr.mxu0 0.0
  %2271 = vmatpush2.msra.mxu0 %v1826
  %2272 = vmatprep.subr.mxu0 0.0
  %2273 = vmatpush2.msra.mxu0 %v1825
  %2274 = vmatprep.subr.mxu0 0.0
  %2275 = vmatpush2.msra.mxu0 %v1824
  %2276 = vmatprep.subr.mxu0 0.0
  %2277 = vmatpush2.msra.mxu0 %v1823
  %2278 = vmatprep.subr.mxu0 0.0
  %2279 = vmatpush2.msra.mxu0 %v1822
  %2280 = vmatprep.subr.mxu0 0.0
  %2281 = vmatpush2.msra.mxu0 %v1821
  %2282 = vmatprep.subr.mxu0 0.0
  %2283 = vmatpush2.msra.mxu0 %v1820
  %2284 = vmatprep.subr.mxu0 0.0
  %2285 = vmatpush2.msra.mxu0 %v1819
  %2286 = vmatprep.subr.mxu0 0.0
  %2287 = vmatpush2.msra.mxu0 %v1818
  %2288 = vmatprep.subr.mxu0 0.0
  %2289 = vmatpush2.msra.mxu0 %v1817
  %2290 = vmatprep.subr.mxu0 0.0
  %2291 = vmatpush2.msra.mxu0 %v1816
  %2292 = vmatprep.mubr.f32.mxu0 %v1649
  %2293 = vmatmul.mubr.f32.gmra.mxu0 %v1648
  %v2294 = vpop.f32.mrf.mxu0
  %v2295 = vadd.f32 %v2220, %v2294
  %v2296 = vpop.f32.mrf.mxu0
  %2297 = vmatprep.mubr.f32.mxu0 %v1665
  %2298 = vmatmul.mubr.f32.gmra.mxu0 %v1664
  %v2299 = vpop.f32.mrf.mxu0
  %v2300 = vadd.f32 %v2225, %v2299
  %v2301 = vpop.f32.mrf.mxu0
  %2302 = vdwg.mxu0
  %2303 = vmatprep.subr.mxu0 0.0
  %2304 = vmatpush1.msra.mxu0 %v1847
  %2305 = vmatprep.subr.mxu0 0.0
  %2306 = vmatpush1.msra.mxu0 %v1846
  %2307 = vmatprep.subr.mxu0 0.0
  %2308 = vmatpush1.msra.mxu0 %v1845
  %2309 = vmatprep.subr.mxu0 0.0
  %2310 = vmatpush1.msra.mxu0 %v1844
  %2311 = vmatprep.subr.mxu0 0.0
  %2312 = vmatpush1.msra.mxu0 %v1843
  %2313 = vmatprep.subr.mxu0 0.0
  %2314 = vmatpush1.msra.mxu0 %v1842
  %2315 = vmatprep.subr.mxu0 0.0
  %2316 = vmatpush1.msra.mxu0 %v1841
  %2317 = vmatprep.subr.mxu0 0.0
  %2318 = vmatpush1.msra.mxu0 %v1840
  %2319 = vmatprep.subr.mxu0 0.0
  %2320 = vmatpush1.msra.mxu0 %v1839
  %2321 = vmatprep.subr.mxu0 0.0
  %2322 = vmatpush1.msra.mxu0 %v1838
  %2323 = vmatprep.subr.mxu0 0.0
  %2324 = vmatpush1.msra.mxu0 %v1837
  %2325 = vmatprep.subr.mxu0 0.0
  %2326 = vmatpush1.msra.mxu0 %v1836
  %2327 = vmatprep.subr.mxu0 0.0
  %2328 = vmatpush1.msra.mxu0 %v1835
  %2329 = vmatprep.subr.mxu0 0.0
  %2330 = vmatpush1.msra.mxu0 %v1834
  %2331 = vmatprep.subr.mxu0 0.0
  %2332 = vmatpush1.msra.mxu0 %v1833
  %2333 = vmatprep.subr.mxu0 0.0
  %2334 = vmatpush1.msra.mxu0 %v1832
  %2335 = vmatprep.subr.mxu0 0.0
  %2336 = vmatpush2.msra.mxu0 %v1863
  %2337 = vmatprep.subr.mxu0 0.0
  %2338 = vmatpush2.msra.mxu0 %v1862
  %2339 = vmatprep.subr.mxu0 0.0
  %2340 = vmatpush2.msra.mxu0 %v1861
  %2341 = vmatprep.subr.mxu0 0.0
  %2342 = vmatpush2.msra.mxu0 %v1860
  %2343 = vmatprep.subr.mxu0 0.0
  %2344 = vmatpush2.msra.mxu0 %v1859
  %2345 = vmatprep.subr.mxu0 0.0
  %2346 = vmatpush2.msra.mxu0 %v1858
  %2347 = vmatprep.subr.mxu0 0.0
  %2348 = vmatpush2.msra.mxu0 %v1857
  %2349 = vmatprep.subr.mxu0 0.0
  %2350 = vmatpush2.msra.mxu0 %v1856
  %2351 = vmatprep.subr.mxu0 0.0
  %2352 = vmatpush2.msra.mxu0 %v1855
  %2353 = vmatprep.subr.mxu0 0.0
  %2354 = vmatpush2.msra.mxu0 %v1854
  %2355 = vmatprep.subr.mxu0 0.0
  %2356 = vmatpush2.msra.mxu0 %v1853
  %2357 = vmatprep.subr.mxu0 0.0
  %2358 = vmatpush2.msra.mxu0 %v1852
  %2359 = vmatprep.subr.mxu0 0.0
  %2360 = vmatpush2.msra.mxu0 %v1851
  %2361 = vmatprep.subr.mxu0 0.0
  %2362 = vmatpush2.msra.mxu0 %v1850
  %2363 = vmatprep.subr.mxu0 0.0
  %2364 = vmatpush2.msra.mxu0 %v1849
  %2365 = vmatprep.subr.mxu0 0.0
  %2366 = vmatpush2.msra.mxu0 %v1848
  %2367 = vmatprep.mubr.f32.mxu0 %v1651
  %2368 = vmatmul.mubr.f32.gmra.mxu0 %v1650
  %v2369 = vpop.f32.mrf.mxu0
  %v2370 = vadd.f32 %v2295, %v2369
  %v2371 = vpop.f32.mrf.mxu0
  %2372 = vmatprep.mubr.f32.mxu0 %v1667
  %2373 = vmatmul.mubr.f32.gmra.mxu0 %v1666
  %v2374 = vpop.f32.mrf.mxu0
  %v2375 = vadd.f32 %v2300, %v2374
  %v2376 = vpop.f32.mrf.mxu0
  %2377 = vdwg.mxu0
  %2378 = vmatprep.subr.mxu0 0.0
  %2379 = vmatpush1.msra.mxu0 %v1879
  %2380 = vmatprep.subr.mxu0 0.0
  %2381 = vmatpush1.msra.mxu0 %v1878
  %2382 = vmatprep.subr.mxu0 0.0
  %2383 = vmatpush1.msra.mxu0 %v1877
  %2384 = vmatprep.subr.mxu0 0.0
  %2385 = vmatpush1.msra.mxu0 %v1876
  %2386 = vmatprep.subr.mxu0 0.0
  %2387 = vmatpush1.msra.mxu0 %v1875
  %2388 = vmatprep.subr.mxu0 0.0
  %2389 = vmatpush1.msra.mxu0 %v1874
  %2390 = vmatprep.subr.mxu0 0.0
  %2391 = vmatpush1.msra.mxu0 %v1873
  %2392 = vmatprep.subr.mxu0 0.0
  %2393 = vmatpush1.msra.mxu0 %v1872
  %2394 = vmatprep.subr.mxu0 0.0
  %2395 = vmatpush1.msra.mxu0 %v1871
  %2396 = vmatprep.subr.mxu0 0.0
  %2397 = vmatpush1.msra.mxu0 %v1870
  %2398 = vmatprep.subr.mxu0 0.0
  %2399 = vmatpush1.msra.mxu0 %v1869
  %2400 = vmatprep.subr.mxu0 0.0
  %2401 = vmatpush1.msra.mxu0 %v1868
  %2402 = vmatprep.subr.mxu0 0.0
  %2403 = vmatpush1.msra.mxu0 %v1867
  %2404 = vmatprep.subr.mxu0 0.0
  %2405 = vmatpush1.msra.mxu0 %v1866
  %2406 = vmatprep.subr.mxu0 0.0
  %2407 = vmatpush1.msra.mxu0 %v1865
  %2408 = vmatprep.subr.mxu0 0.0
  %2409 = vmatpush1.msra.mxu0 %v1864
  %2410 = vmatprep.subr.mxu0 0.0
  %2411 = vmatpush2.msra.mxu0 %v1895
  %2412 = vmatprep.subr.mxu0 0.0
  %2413 = vmatpush2.msra.mxu0 %v1894
  %2414 = vmatprep.subr.mxu0 0.0
  %2415 = vmatpush2.msra.mxu0 %v1893
  %2416 = vmatprep.subr.mxu0 0.0
  %2417 = vmatpush2.msra.mxu0 %v1892
  %2418 = vmatprep.subr.mxu0 0.0
  %2419 = vmatpush2.msra.mxu0 %v1891
  %2420 = vmatprep.subr.mxu0 0.0
  %2421 = vmatpush2.msra.mxu0 %v1890
  %2422 = vmatprep.subr.mxu0 0.0
  %2423 = vmatpush2.msra.mxu0 %v1889
  %2424 = vmatprep.subr.mxu0 0.0
  %2425 = vmatpush2.msra.mxu0 %v1888
  %2426 = vmatprep.subr.mxu0 0.0
  %2427 = vmatpush2.msra.mxu0 %v1887
  %2428 = vmatprep.subr.mxu0 0.0
  %2429 = vmatpush2.msra.mxu0 %v1886
  %2430 = vmatprep.subr.mxu0 0.0
  %2431 = vmatpush2.msra.mxu0 %v1885
  %2432 = vmatprep.subr.mxu0 0.0
  %2433 = vmatpush2.msra.mxu0 %v1884
  %2434 = vmatprep.subr.mxu0 0.0
  %2435 = vmatpush2.msra.mxu0 %v1883
  %2436 = vmatprep.subr.mxu0 0.0
  %2437 = vmatpush2.msra.mxu0 %v1882
  %2438 = vmatprep.subr.mxu0 0.0
  %2439 = vmatpush2.msra.mxu0 %v1881
  %2440 = vmatprep.subr.mxu0 0.0
  %2441 = vmatpush2.msra.mxu0 %v1880
  %2442 = vmatprep.mubr.f32.mxu0 %v1653
  %2443 = vmatmul.mubr.f32.gmra.mxu0 %v1652
  %v2444 = vpop.f32.mrf.mxu0
  %v2445 = vadd.f32 %v2370, %v2444
  %v2446 = vpop.f32.mrf.mxu0
  %2447 = vmatprep.mubr.f32.mxu0 %v1669
  %2448 = vmatmul.mubr.f32.gmra.mxu0 %v1668
  %v2449 = vpop.f32.mrf.mxu0
  %v2450 = vadd.f32 %v2375, %v2449
  %v2451 = vpop.f32.mrf.mxu0
  %2452 = vdwg.mxu0
  %2453 = vmatprep.subr.mxu0 0.0
  %2454 = vmatpush1.msra.mxu0 %v1911
  %2455 = vmatprep.subr.mxu0 0.0
  %2456 = vmatpush1.msra.mxu0 %v1910
  %2457 = vmatprep.subr.mxu0 0.0
  %2458 = vmatpush1.msra.mxu0 %v1909
  %2459 = vmatprep.subr.mxu0 0.0
  %2460 = vmatpush1.msra.mxu0 %v1908
  %2461 = vmatprep.subr.mxu0 0.0
  %2462 = vmatpush1.msra.mxu0 %v1907
  %2463 = vmatprep.subr.mxu0 0.0
  %2464 = vmatpush1.msra.mxu0 %v1906
  %2465 = vmatprep.subr.mxu0 0.0
  %2466 = vmatpush1.msra.mxu0 %v1905
  %2467 = vmatprep.subr.mxu0 0.0
  %2468 = vmatpush1.msra.mxu0 %v1904
  %2469 = vmatprep.subr.mxu0 0.0
  %2470 = vmatpush1.msra.mxu0 %v1903
  %2471 = vmatprep.subr.mxu0 0.0
  %2472 = vmatpush1.msra.mxu0 %v1902
  %2473 = vmatprep.subr.mxu0 0.0
  %2474 = vmatpush1.msra.mxu0 %v1901
  %2475 = vmatprep.subr.mxu0 0.0
  %2476 = vmatpush1.msra.mxu0 %v1900
  %2477 = vmatprep.subr.mxu0 0.0
  %2478 = vmatpush1.msra.mxu0 %v1899
  %2479 = vmatprep.subr.mxu0 0.0
  %2480 = vmatpush1.msra.mxu0 %v1898
  %2481 = vmatprep.subr.mxu0 0.0
  %2482 = vmatpush1.msra.mxu0 %v1897
  %2483 = vmatprep.subr.mxu0 0.0
  %2484 = vmatpush1.msra.mxu0 %v1896
  %2485 = vmatprep.subr.mxu0 0.0
  %2486 = vmatpush2.msra.mxu0 %v1927
  %2487 = vmatprep.subr.mxu0 0.0
  %2488 = vmatpush2.msra.mxu0 %v1926
  %2489 = vmatprep.subr.mxu0 0.0
  %2490 = vmatpush2.msra.mxu0 %v1925
  %2491 = vmatprep.subr.mxu0 0.0
  %2492 = vmatpush2.msra.mxu0 %v1924
  %2493 = vmatprep.subr.mxu0 0.0
  %2494 = vmatpush2.msra.mxu0 %v1923
  %2495 = vmatprep.subr.mxu0 0.0
  %2496 = vmatpush2.msra.mxu0 %v1922
  %2497 = vmatprep.subr.mxu0 0.0
  %2498 = vmatpush2.msra.mxu0 %v1921
  %2499 = vmatprep.subr.mxu0 0.0
  %2500 = vmatpush2.msra.mxu0 %v1920
  %2501 = vmatprep.subr.mxu0 0.0
  %2502 = vmatpush2.msra.mxu0 %v1919
  %2503 = vmatprep.subr.mxu0 0.0
  %2504 = vmatpush2.msra.mxu0 %v1918
  %2505 = vmatprep.subr.mxu0 0.0
  %2506 = vmatpush2.msra.mxu0 %v1917
  %2507 = vmatprep.subr.mxu0 0.0
  %2508 = vmatpush2.msra.mxu0 %v1916
  %2509 = vmatprep.subr.mxu0 0.0
  %2510 = vmatpush2.msra.mxu0 %v1915
  %2511 = vmatprep.subr.mxu0 0.0
  %2512 = vmatpush2.msra.mxu0 %v1914
  %2513 = vmatprep.subr.mxu0 0.0
  %2514 = vmatpush2.msra.mxu0 %v1913
  %2515 = vmatprep.subr.mxu0 0.0
  %2516 = vmatpush2.msra.mxu0 %v1912
  %2517 = vmatprep.mubr.f32.mxu0 %v1655
  %2518 = vmatmul.mubr.f32.gmra.mxu0 %v1654
  %v2519 = vpop.f32.mrf.mxu0
  %v2520 = vadd.f32 %v2445, %v2519
  %v2521 = vpop.f32.mrf.mxu0
  %2522 = vmatprep.mubr.f32.mxu0 %v1671
  %2523 = vmatmul.mubr.f32.gmra.mxu0 %v1670
  %v2524 = vpop.f32.mrf.mxu0
  %v2525 = vadd.f32 %v2450, %v2524
  %v2526 = vpop.f32.mrf.mxu0
  %2527 = vdwg.mxu0
  %v2528 = vlog2.pop %v2520
  %v2529 = vmul.f32 %v2528, 0.6931472
  %v2530 = vlog2.pop %v2525
  %v2531 = vmul.f32 %v2530, 0.6931472
  %v2532 = vsub.f32 %v2529, 3.912023
  %v2533 = vsub.f32 %v2531, 3.912023
  %v2534 = vld [vmem:[%s4] sm:$0xff]
  %v2535 = vld [vmem:[%s4 + $0x8] sm:$0xff]
  %v2536 = vld [vmem:[%s4 + $0x10] sm:$0xff]
  %v2537 = vld [vmem:[%s4 + $0x18] sm:$0xff]
  %v2538 = vld [vmem:[%s4 + $0x20] sm:$0xff]
  %v2539 = vld [vmem:[%s4 + $0x28] sm:$0xff]
  %v2540 = vld [vmem:[%s4 + $0x30] sm:$0xff]
  %v2541 = vld [vmem:[%s4 + $0x38] sm:$0xff]
  %v2542 = vmul.f32 %v2532, %v2534
  %v2543 = vmul.f32 %v2533, %v2535
  %v2544 = vadd.f32 %v2542, %v2543
  %v2545 = vrot.slane %v2544, 4
  %v2546 = vadd.f32 %v2544, %v2545
  %v2547 = vrot.slane %v2546, 2
  %v2548 = vadd.f32 %v2546, %v2547
  %v2549 = vrot.slane %v2548, 1
  %v2550 = vadd.f32 %v2548, %v2549
  %v2551 = vmul.f32 %v2532, %v2536
  %v2552 = vmul.f32 %v2533, %v2537
  %v2553 = vadd.f32 %v2551, %v2552
  %v2554 = vrot.slane %v2553, 4
  %v2555 = vadd.f32 %v2553, %v2554
  %v2556 = vrot.slane %v2555, 2
  %v2557 = vadd.f32 %v2555, %v2556
  %v2558 = vrot.slane %v2557, 1
  %v2559 = vadd.f32 %v2557, %v2558
  %v2560 = vmul.f32 %v2532, %v2538
  %v2561 = vmul.f32 %v2533, %v2539
  %v2562 = vadd.f32 %v2560, %v2561
  %v2563 = vrot.slane %v2562, 4
  %v2564 = vadd.f32 %v2562, %v2563
  %v2565 = vrot.slane %v2564, 2
  %v2566 = vadd.f32 %v2564, %v2565
  %v2567 = vrot.slane %v2566, 1
  %v2568 = vadd.f32 %v2566, %v2567
  %v2569 = vmul.f32 %v2532, %v2540
  %v2570 = vmul.f32 %v2533, %v2541
  %v2571 = vadd.f32 %v2569, %v2570
  %v2572 = vrot.slane %v2571, 4
  %v2573 = vadd.f32 %v2571, %v2572
  %v2574 = vrot.slane %v2573, 2
  %v2575 = vadd.f32 %v2573, %v2574
  %v2576 = vrot.slane %v2575, 1
  %v2577 = vadd.f32 %v2575, %v2576
  %vm2578 = vcmask 1040384
  %v2579 = vsel %vm2578, %v2550, %v2559
  %vm2580 = vcmask 1041408
  %v2581 = vsel %vm2580, %v2579, %v2568
  %vm2582 = vcmask 1042432
  %v2583 = vsel %vm2582, %v2581, %v2577
  %v2584 = vld [vmem:[%s5] sm:$0xff]
  %v2585 = vld [vmem:[%s5 + $0x8] sm:$0xff]
  %v2586 = vld [vmem:[%s5 + $0x10] sm:$0xff]
  %v2587 = vld [vmem:[%s5 + $0x18] sm:$0xff]
  %v2588 = vld [vmem:[%s5 + $0x20] sm:$0xff]
  %v2589 = vld [vmem:[%s5 + $0x28] sm:$0xff]
  %v2590 = vld [vmem:[%s5 + $0x30] sm:$0xff]
  %v2591 = vld [vmem:[%s5 + $0x38] sm:$0xff]
  %v2592 = vld [vmem:[%s5 + $0x40] sm:$0xff]
  %v2593 = vld [vmem:[%s5 + $0x48] sm:$0xff]
  %v2594 = vld [vmem:[%s5 + $0x50] sm:$0xff]
  %v2595 = vld [vmem:[%s5 + $0x58] sm:$0xff]
  %v2596 = vld [vmem:[%s5 + $0x60] sm:$0xff]
  %v2597 = vld [vmem:[%s5 + $0x68] sm:$0xff]
  %v2598 = vld [vmem:[%s5 + $0x70] sm:$0xff]
  %v2599 = vld [vmem:[%s5 + $0x78] sm:$0xff]
  %v2600 = vld [vmem:[%s6] sm:$0xf]
  %2602 = vset.pattern.permute.xlu0 0
  %2603 = vperm.xlu0 %2602, %v2600
  %v2604 = vpop.permute.xlu0 %2603
  %2606 = vmatprep.subr.mxu0 0.0
  %2607 = vmatpush1.msra.mxu0 %v2599
  %2608 = vmatprep.subr.mxu0 0.0
  %2609 = vmatpush1.msra.mxu0 %v2598
  %2610 = vmatprep.subr.mxu0 0.0
  %2611 = vmatpush1.msra.mxu0 %v2597
  %2612 = vmatprep.subr.mxu0 0.0
  %2613 = vmatpush1.msra.mxu0 %v2596
  %2614 = vmatprep.subr.mxu0 0.0
  %2615 = vmatpush1.msra.mxu0 %v2595
  %2616 = vmatprep.subr.mxu0 0.0
  %2617 = vmatpush1.msra.mxu0 %v2594
  %2618 = vmatprep.subr.mxu0 0.0
  %2619 = vmatpush1.msra.mxu0 %v2593
  %2620 = vmatprep.subr.mxu0 0.0
  %2621 = vmatpush1.msra.mxu0 %v2592
  %2622 = vmatprep.subr.mxu0 0.0
  %2623 = vmatpush1.msra.mxu0 %v2591
  %2624 = vmatprep.subr.mxu0 0.0
  %2625 = vmatpush1.msra.mxu0 %v2590
  %2626 = vmatprep.subr.mxu0 0.0
  %2627 = vmatpush1.msra.mxu0 %v2589
  %2628 = vmatprep.subr.mxu0 0.0
  %2629 = vmatpush1.msra.mxu0 %v2588
  %2630 = vmatprep.subr.mxu0 0.0
  %2631 = vmatpush1.msra.mxu0 %v2587
  %2632 = vmatprep.subr.mxu0 0.0
  %2633 = vmatpush1.msra.mxu0 %v2586
  %2634 = vmatprep.subr.mxu0 0.0
  %2635 = vmatpush1.msra.mxu0 %v2585
  %2636 = vmatprep.subr.mxu0 0.0
  %2637 = vmatpush1.msra.mxu0 %v2584
  %2638 = vmatprep.subr.mxu0 0.0
  %2639 = vmatpush2.msra.mxu0 0.0
  %2640 = vmatprep.subr.mxu0 0.0
  %2641 = vmatpush2.msra.mxu0 0.0
  %2642 = vmatprep.subr.mxu0 0.0
  %2643 = vmatpush2.msra.mxu0 0.0
  %2644 = vmatprep.subr.mxu0 0.0
  %2645 = vmatpush2.msra.mxu0 0.0
  %2646 = vmatprep.subr.mxu0 0.0
  %2647 = vmatpush2.msra.mxu0 0.0
  %2648 = vmatprep.subr.mxu0 0.0
  %2649 = vmatpush2.msra.mxu0 0.0
  %2650 = vmatprep.subr.mxu0 0.0
  %2651 = vmatpush2.msra.mxu0 0.0
  %2652 = vmatprep.subr.mxu0 0.0
  %2653 = vmatpush2.msra.mxu0 0.0
  %2654 = vmatprep.subr.mxu0 0.0
  %2655 = vmatpush2.msra.mxu0 0.0
  %2656 = vmatprep.subr.mxu0 0.0
  %2657 = vmatpush2.msra.mxu0 0.0
  %2658 = vmatprep.subr.mxu0 0.0
  %2659 = vmatpush2.msra.mxu0 0.0
  %2660 = vmatprep.subr.mxu0 0.0
  %2661 = vmatpush2.msra.mxu0 0.0
  %2662 = vmatprep.subr.mxu0 0.0
  %2663 = vmatpush2.msra.mxu0 0.0
  %2664 = vmatprep.subr.mxu0 0.0
  %2665 = vmatpush2.msra.mxu0 0.0
  %2666 = vmatprep.subr.mxu0 0.0
  %2667 = vmatpush2.msra.mxu0 0.0
  %2668 = vmatprep.subr.mxu0 0.0
  %2669 = vmatpush2.msra.mxu0 0.0
  %2670 = vmatprep.mubr.f32.mxu0 0.0
  %2671 = vmatmul.mubr.f32.gmra.mxu0 %v2583
  %v2672 = vpop.f32.mrf.mxu0
  %v2673 = vadd.f32 %v2604, %v2672
  %v2674 = vpop.f32.mrf.mxu0
  %2675 = vdwg.mxu0
  %vm2676 = vcmask 60416
  %2677 = vst.msk [vmem:[%s7] sm:$0xf] %vm2676, %v2673
  // Predicated region
  $region30: #{sccnet_forward.1} parent=0 // pred_check
    _
  $region31: #{sccnet_forward.1} parent=0 // pred_check_branch
    %2679 = sbr.rel (0) target = $region33
  $region32: #{sccnet_forward.1} parent=0 // pred_region
    _
  $region33: #{sccnet_forward.1} parent=0 // pred_fallthru
    _
  // Predicated region
  $region34: #{sccnet_forward.1} parent=0 // pred_check
    _
  $region35: #{sccnet_forward.1} parent=0 // pred_check_branch
    %2681 = sbr.rel (0) target = $region37
  $region36: #{sccnet_forward.1} parent=0 // pred_region
    _
  $region37: #{sccnet_forward.1} parent=0 // pred_fallthru
    _

</llo_original>
